<compile_context>
chip_gen: v7x
topology: tpu7x:2x2x1
jax: 0.10.0
libtpu: 0.0.40
codegen_flags: <defaults>
</compile_context>

<pallas_src>
import functools

import jax
import jax.numpy as jnp
from jax import lax
from jax.experimental import pallas as pl
from jax.experimental.pallas import tpu as pltpu


# --------------------------------------------------------------------------
# Fused kernel: one grid step == Bt batch elements.
# --------------------------------------------------------------------------
def _afs_fused_kernel(x_ref, wconv_ref, bconv_ref, wfc1_ref, wfc2_ref,
                      w1x1_ref, b1x1_ref, o_ref, stk_ref, *, H, W, Bt, theta):
    """Shapes (per grid step), C = 3*cin, HW = H*W, HWp = HW + 2*W + 2:
      x_ref    : (Bt, C, HWp)   channel-concatenated branches, flat-spatial, padded
      wconv_ref: (C, 9*C)       block-diagonal fused 3x3 taps (+I at centre tap)
      bconv_ref: (C, 1)         conv biases (f32)
      wfc1_ref : (hid, C)       SE fc1 (f32)       wfc2_ref: (C, hid)  SE fc2 (f32)
      w1x1_ref : (Cout, C)      1x1 conv weight    b1x1_ref: (Cout, 1)
      o_ref    : (Cout, Bt*HW)  lane-dense output slab
      stk_ref  : (9*C, Bt*HW)   f32 VMEM scratch for the stacked shifted operand
    """
    f32 = jnp.float32
    HW = H * W
    C = x_ref.shape[1]

    # Horizontal taps (dw = +/-1) wrap across rows in flattened-spatial form;
    # vertical taps read the zero padding, so only the row wrap needs masking.
    col = lax.broadcasted_iota(jnp.int32, (1, HW), 1) % W
    mask_l = col >= 1           # valid output columns for dw == -1
    mask_r = col <= W - 2       # valid output columns for dw == +1

    # --- build the (9*C, Bt*HW) stacked/shifted operand in VMEM scratch -----
    for b in range(Bt):                       # static unroll over the batch tile
        xpb = x_ref[b]                        # (C, HWp)
        for k in range(9):                    # static unroll over the 3x3 taps
            dh, dw = k // 3 - 1, k % 3 - 1
            start = (dh + 1) * W + (dw + 1)   # static offset into the padding
            s = xpb[:, start:start + HW].astype(f32)
            if dw == -1:
                s = jnp.where(mask_l, s, 0.0)
            elif dw == 1:
                s = jnp.where(mask_r, s, 0.0)
            stk_ref[k * C:(k + 1) * C, b * HW:(b + 1) * HW] = s

    # --- all three 3x3 convs (+ folded residual) for all Bt elements as ONE
    # matmul: (C, 9*C) @ (9*C, Bt*HW), f32 accumulation on the MXU.
    ys = jnp.dot(wconv_ref[...], stk_ref[...].astype(wconv_ref.dtype),
                 preferred_element_type=f32) + bconv_ref[...]        # (C, Bt*HW)

    # --- SEAttention: per-element global avg pool -> fc1 -> ReLU -> fc2 ->
    # sigmoid, batched over the Bt elements (N = Bt instead of N = 1).
    lane_b = lax.broadcasted_iota(jnp.int32, (1, Bt), 1)
    pooled = jnp.zeros((C, Bt), f32)
    for b in range(Bt):
        m = jnp.mean(ys[:, b * HW:(b + 1) * HW], axis=1, keepdims=True)
        pooled = pooled + jnp.where(lane_b == b, m, 0.0)             # (C, Bt)
    h = jnp.maximum(jnp.dot(wfc1_ref[...], pooled,
                            preferred_element_type=f32), 0.0)        # (hid, Bt)
    sig = jax.nn.sigmoid(jnp.dot(wfc2_ref[...], h,
                                 preferred_element_type=f32))        # (C, Bt)

    # --- theta blend, then the fused 1x1 conv as a single matmul -------------
    pre_cols = []
    for b in range(Bt):
        yb = ys[:, b * HW:(b + 1) * HW]                              # (C, HW)
        sb = sig[:, b:b + 1]                                         # (C, 1)
        # f*se*theta + f*(1-theta), with se = f*sigmoid (as in the PyTorch module)
        pre_cols.append(yb * (yb * sb * theta + (1.0 - theta)))
    pre = jnp.concatenate(pre_cols, axis=1)                          # (C, Bt*HW)

    out = jnp.dot(w1x1_ref[...], pre,
                  preferred_element_type=f32) + b1x1_ref[...]        # (Cout, Bt*HW)
    o_ref[...] = out.astype(o_ref.dtype)


# --------------------------------------------------------------------------
# Wrapper: lane-dense parameter re-packing + pallas_call.  Inputs are NCHW.
# --------------------------------------------------------------------------
def adaptive_feature_selection(params, x1, x2, x3, *, theta=0.35, block_b=4,
                               compute_dtype=jnp.float32):
    B, cin, H, W = x1.shape
    HW = H * W
    HWp = HW + 2 * W + 2
    C = 3 * cin
    cout = params['b_1x1'].shape[0]
    f32 = jnp.float32

    # ---- fused, lane-dense 2-D weight packing --------------------------------
    eye = jnp.eye(cin, dtype=f32)

    def tapify(w):   # (Cout,Cin,3,3) OIHW -> (9,Cout,Cin); fold residual into centre
        taps = jnp.transpose(w, (2, 3, 0, 1)).reshape(9, cin, cin)
        return taps.at[4].add(eye)

    taps = [tapify(params['w_conv1']), tapify(params['w_conv2']),
            tapify(params['w_conv3'])]
    # Block-diagonal fused conv weight (C, 9*C): column index = tap*C + in_channel.
    wconv = jnp.zeros((C, 9, 3, cin), f32)
    for j in range(3):
        wconv = wconv.at[j * cin:(j + 1) * cin, :, j, :].set(
            jnp.transpose(taps[j], (1, 0, 2)))          # (cin_out, 9, cin_in)
    wconv = wconv.reshape(C, 9 * C).astype(compute_dtype)

    bconv = jnp.concatenate([params['b_conv1'], params['b_conv2'],
                             params['b_conv3']])[:, None].astype(f32)   # (C, 1)
    wfc1 = params['w_fc1'].astype(f32)                                    # (hid, C)
    wfc2 = params['w_fc2'].astype(f32)                                    # (C, hid)
    w1x1 = params['w_1x1'].reshape(cout, C).astype(f32)                   # (Cout, C)
    b1x1 = params['b_1x1'][:, None].astype(f32)                           # (Cout, 1)

    # ---- input: concat branches on channels, flatten spatial, pad by W+1 -----
    x = jnp.concatenate([x1, x2, x3], axis=1).reshape(B, C, HW)
    x = jnp.pad(x, ((0, 0), (0, 0), (W + 1, W + 1))).astype(compute_dtype)

    Bt = max(1, min(block_b, B))
    nsteps = pl.cdiv(B, Bt)
    Bp = nsteps * Bt
    if Bp != B:
        x = jnp.pad(x, ((0, Bp - B), (0, 0), (0, 0)))

    full = lambda a: pl.BlockSpec(a.shape, lambda i: (0,) * a.ndim)
    kernel = functools.partial(_afs_fused_kernel, H=H, W=W, Bt=Bt, theta=theta)

    out = pl.pallas_call(
        kernel,
        grid=(nsteps,),
        in_specs=[pl.BlockSpec((Bt, C, HWp), lambda i: (i, 0, 0)),
                  full(wconv), full(bconv), full(wfc1), full(wfc2),
                  full(w1x1), full(b1x1)],
        out_specs=pl.BlockSpec((cout, Bt * HW), lambda i: (0, i)),
        out_shape=jax.ShapeDtypeStruct((cout, Bp * HW), f32),
        scratch_shapes=[pltpu.VMEM((9 * C, Bt * HW), jnp.float32)],
        compiler_params=pltpu.CompilerParams(
            dimension_semantics=("parallel",),   # >=2 steps -> both v7x TCs busy
            vmem_limit_bytes=32 * 1024 * 1024,
        ),
    )(x, wconv, bconv, wfc1, wfc2, w1x1, b1x1)

    # TODO(synk): for large H*W, tile the spatial axis with a two-pass
    # (partial-sum pool, then SE-scale + 1x1) scheme to stay inside v7x's 64 MiB
    # VMEM; optionally pack 2 batch elements on the sublane axis (block-diagonal
    # tap/1x1 weights) to fill all 8 sublanes of the stores on v5e.
    out = out[:, :B * HW].reshape(cout, B, H, W).transpose(1, 0, 2, 3)
    return out


# --------------------------------------------------------------------------
# Pure-JAX reference (correctness check only)
# --------------------------------------------------------------------------
def reference(params, x1, x2, x3):
    def conv3x3(x, w, b):
        y = lax.conv_general_dilated(x, w, (1, 1), ((1, 1), (1, 1)),
                                     dimension_numbers=('NCHW', 'OIHW', 'NCHW'))
        return y + b[None, :, None, None]

    x1 = x1 + conv3x3(x1, params['w_conv1'], params['b_conv1'])
    x2 = x2 + conv3x3(x2, params['w_conv2'], params['b_conv2'])
    x3 = x3 + conv3x3(x3, params['w_conv3'], params['b_conv3'])
    f = jnp.concatenate([x1, x2, x3], axis=1)
    s = jnp.mean(f, axis=(2, 3))                               # (B, C)
    h = jnp.maximum(s @ params['w_fc1'].T, 0.0)
    y = jax.nn.sigmoid(h @ params['w_fc2'].T)
    se = f * y[:, :, None, None]
    theta = 0.35
    pre = f * se * theta + f * (1.0 - theta)
    out = lax.conv_general_dilated(pre, params['w_1x1'], (1, 1), 'VALID',
                                   dimension_numbers=('NCHW', 'OIHW', 'NCHW'))
    return out + params['b_1x1'][None, :, None, None]


# --------------------------------------------------------------------------
def make_params(key, in_dim, out_dim):
    ks = jax.random.split(key, 10)
    hid = out_dim // 3   # SEAttention(reduction=3)
    return {
        'w_conv1': 0.1 * jax.random.normal(ks[0], (in_dim, in_dim, 3, 3), jnp.float32),
        'b_conv1': 0.1 * jax.random.normal(ks[1], (in_dim,), jnp.float32),
        'w_conv2': 0.1 * jax.random.normal(ks[2], (in_dim, in_dim, 3, 3), jnp.float32),
        'b_conv2': 0.1 * jax.random.normal(ks[3], (in_dim,), jnp.float32),
        'w_conv3': 0.1 * jax.random.normal(ks[4], (in_dim, in_dim, 3, 3), jnp.float32),
        'b_conv3': 0.1 * jax.random.normal(ks[5], (in_dim,), jnp.float32),
        'w_fc1':   0.1 * jax.random.normal(ks[6], (hid, out_dim), jnp.float32),
        'w_fc2':   0.1 * jax.random.normal(ks[7], (out_dim, hid), jnp.float32),
        'w_1x1':   0.1 * jax.random.normal(ks[8], (in_dim, out_dim, 1, 1), jnp.float32),
        'b_1x1':   0.1 * jax.random.normal(ks[9], (in_dim,), jnp.float32),
    }


if __name__ == "__main__":
    B, in_dim, H, W = 8, 4, 16, 16          # B=8, Bt=4 -> 2 grid steps (v7x 2 TCs)
    out_dim = 3 * in_dim                    # concat of 3 branches

    key = jax.random.PRNGKey(0)
    kx1, kx2, kx3, kp = jax.random.split(key, 4)
    x1 = jax.random.normal(kx1, (B, in_dim, H, W), jnp.float32)
    x2 = jax.random.normal(kx2, (B, in_dim, H, W), jnp.float32)
    x3 = jax.random.normal(kx3, (B, in_dim, H, W), jnp.float32)
    params = make_params(kp, in_dim, out_dim)

    ref = reference(params, x1, x2, x3)

    # f32 path: tight correctness check vs the pure-JAX reference.
    afs_f32 = jax.jit(adaptive_feature_selection)
    out = jax.block_until_ready(afs_f32(params, x1, x2, x3))
    assert out.shape == (B, in_dim, H, W)
    max_err = float(jnp.max(jnp.abs(out - ref)))
    assert max_err < 2e-4, f"f32 mismatch vs reference, max abs err = {max_err}"

    # bf16 compute path (v6e/v7x DMA + MXU win); accumulation stays f32.
    afs_bf16 = jax.jit(functools.partial(adaptive_feature_selection,
                                         compute_dtype=jnp.bfloat16))
    out_bf16 = jax.block_until_ready(afs_bf16(params, x1, x2, x3))
    rel = float(jnp.linalg.norm(out_bf16 - ref) / jnp.linalg.norm(ref))
    assert rel < 5e-2, f"bf16 mismatch vs reference, rel fro err = {rel}"

    print("KERNEL_OK")
</pallas_src>

<mosaic_0001>
module attributes {stable_mosaic.version = 11 : i64} {
  func.func @_afs_fused_kernel(%arg0: i32, %arg1: memref<4x12x290xf32, #tpu.memory_space<vmem>>, %arg2: memref<12x108xf32, #tpu.memory_space<vmem>>, %arg3: memref<12x1xf32, #tpu.memory_space<vmem>>, %arg4: memref<4x12xf32, #tpu.memory_space<vmem>>, %arg5: memref<12x4xf32, #tpu.memory_space<vmem>>, %arg6: memref<4x12xf32, #tpu.memory_space<vmem>>, %arg7: memref<4x1xf32, #tpu.memory_space<vmem>>, %arg8: memref<4x1024xf32, #tpu.memory_space<vmem>>, %arg9: memref<108x1024xf32, #tpu.memory_space<vmem>>) attributes {dimension_semantics = [#tpu.dimension_semantics<parallel>], iteration_bounds = array<i64: 2>, scalar_prefetch = 0 : i64, scratch_operands = 1 : i64, tpu.core_type = #tpu.core_type<tc>, window_params = [{transform_indices = @transform_0, window_bounds = array<i64: 4, 12, 290>}, {pipeline_mode = #tpu.pipeline_mode<synchronous>, transform_indices = @transform_1, window_bounds = array<i64: 12, 108>}, {pipeline_mode = #tpu.pipeline_mode<synchronous>, transform_indices = @transform_2, window_bounds = array<i64: 12, 1>}, {pipeline_mode = #tpu.pipeline_mode<synchronous>, transform_indices = @transform_3, window_bounds = array<i64: 4, 12>}, {pipeline_mode = #tpu.pipeline_mode<synchronous>, transform_indices = @transform_4, window_bounds = array<i64: 12, 4>}, {pipeline_mode = #tpu.pipeline_mode<synchronous>, transform_indices = @transform_5, window_bounds = array<i64: 4, 12>}, {pipeline_mode = #tpu.pipeline_mode<synchronous>, transform_indices = @transform_6, window_bounds = array<i64: 4, 1>}, {transform_indices = @transform_7, window_bounds = array<i64: 4, 1024>}]} {
    %0 = tpu.iota {dimensions = array<i32: 1>} : vector<1x256xi32>
    %c16_i32 = arith.constant 16 : i32
    %c0_i32 = arith.constant 0 : i32
    %1 = arith.cmpi eq, %c16_i32, %c0_i32 : i32
    %c1_i32 = arith.constant 1 : i32
    %2 = arith.select %1, %c1_i32, %c16_i32 : i32
    %3 = vector.broadcast %2 : i32 to vector<1x256xi32>
    %4 = arith.remsi %0, %3 : vector<1x256xi32>
    %c0_i32_0 = arith.constant 0 : i32
    %5 = vector.broadcast %c0_i32_0 : i32 to vector<1x256xi32>
    %6 = arith.cmpi ne, %4, %5 : vector<1x256xi32>
    %c0_i32_1 = arith.constant 0 : i32
    %7 = vector.broadcast %c0_i32_1 : i32 to vector<1x256xi32>
    %8 = arith.cmpi slt, %4, %7 : vector<1x256xi32>
    %c0_i32_2 = arith.constant 0 : i32
    %9 = arith.cmpi slt, %2, %c0_i32_2 : i32
    %10 = vector.broadcast %9 : i1 to vector<1x256xi1>
    %11 = vector.broadcast %10 : vector<1x256xi1> to vector<1x256xi1>
    %12 = arith.xori %8, %11 : vector<1x256xi1>
    %13 = arith.andi %12, %6 : vector<1x256xi1>
    %14 = vector.broadcast %2 : i32 to vector<1x256xi32>
    %15 = arith.addi %4, %14 : vector<1x256xi32>
    %16 = arith.select %13, %15, %4 : vector<1x256xi1>, vector<1x256xi32>
    %c1_i32_3 = arith.constant 1 : i32
    %17 = vector.broadcast %c1_i32_3 : i32 to vector<1x256xi32>
    %18 = arith.cmpi sge, %16, %17 : vector<1x256xi32>
    %c14_i32 = arith.constant 14 : i32
    %19 = vector.broadcast %c14_i32 : i32 to vector<1x256xi32>
    %20 = arith.cmpi sle, %16, %19 : vector<1x256xi32>
    %c0 = arith.constant 0 : index
    %c0_4 = arith.constant 0 : index
    %c0_5 = arith.constant 0 : index
    %21 = vector.load %arg1[%c0, %c0_4, %c0_5] : memref<4x12x290xf32, #tpu.memory_space<vmem>>, vector<1x12x290xf32>
    %22 = vector.shape_cast %21 : vector<1x12x290xf32> to vector<12x290xf32>
    %23 = vector.extract_strided_slice %22 {offsets = [0, 0], sizes = [12, 256], strides = [1, 1]} : vector<12x290xf32> to vector<12x256xf32>
    %cst = arith.constant 0.000000e+00 : f32
    %24 = vector.shape_cast %18 : vector<1x256xi1> to vector<1x256xi1>
    %25 = vector.broadcast %24 : vector<1x256xi1> to vector<12x256xi1>
    %26 = vector.broadcast %cst : f32 to vector<12x256xf32>
    %27 = arith.select %25, %23, %26 : vector<12x256xi1>, vector<12x256xf32>
    %c0_6 = arith.constant 0 : index
    %c0_7 = arith.constant 0 : index
    %28 = vector.load %arg9[%c0_6, %c0_7] : memref<108x1024xf32, #tpu.memory_space<vmem>>, vector<12x256xf32>
    tpu.vector_store %arg9[%c0_6, %c0_7], %27 {strides = array<i32>} : memref<108x1024xf32, #tpu.memory_space<vmem>>, vector<12x256xf32>,
    %29 = vector.extract_strided_slice %22 {offsets = [0, 1], sizes = [12, 256], strides = [1, 1]} : vector<12x290xf32> to vector<12x256xf32>
    %c12 = arith.constant 12 : index
    %c0_8 = arith.constant 0 : index
    %30 = vector.load %arg9[%c12, %c0_8] : memref<108x1024xf32, #tpu.memory_space<vmem>>, vector<12x256xf32>
    tpu.vector_store %arg9[%c12, %c0_8], %29 {strides = array<i32>} : memref<108x1024xf32, #tpu.memory_space<vmem>>, vector<12x256xf32>,
    %31 = vector.extract_strided_slice %22 {offsets = [0, 2], sizes = [12, 256], strides = [1, 1]} : vector<12x290xf32> to vector<12x256xf32>
    %cst_9 = arith.constant 0.000000e+00 : f32
    %32 = vector.shape_cast %20 : vector<1x256xi1> to vector<1x256xi1>
    %33 = vector.broadcast %32 : vector<1x256xi1> to vector<12x256xi1>
    %34 = vector.broadcast %cst_9 : f32 to vector<12x256xf32>
    %35 = arith.select %33, %31, %34 : vector<12x256xi1>, vector<12x256xf32>
    %c24 = arith.constant 24 : index
    %c0_10 = arith.constant 0 : index
    %36 = vector.load %arg9[%c24, %c0_10] : memref<108x1024xf32, #tpu.memory_space<vmem>>, vector<12x256xf32>
    tpu.vector_store %arg9[%c24, %c0_10], %35 {strides = array<i32>} : memref<108x1024xf32, #tpu.memory_space<vmem>>, vector<12x256xf32>,
    %37 = vector.extract_strided_slice %22 {offsets = [0, 16], sizes = [12, 256], strides = [1, 1]} : vector<12x290xf32> to vector<12x256xf32>
    %cst_11 = arith.constant 0.000000e+00 : f32
    %38 = vector.shape_cast %18 : vector<1x256xi1> to vector<1x256xi1>
    %39 = vector.broadcast %38 : vector<1x256xi1> to vector<12x256xi1>
    %40 = vector.broadcast %cst_11 : f32 to vector<12x256xf32>
    %41 = arith.select %39, %37, %40 : vector<12x256xi1>, vector<12x256xf32>
    %c36 = arith.constant 36 : index
    %c0_12 = arith.constant 0 : index
    %42 = vector.load %arg9[%c36, %c0_12] : memref<108x1024xf32, #tpu.memory_space<vmem>>, vector<12x256xf32>
    tpu.vector_store %arg9[%c36, %c0_12], %41 {strides = array<i32>} : memref<108x1024xf32, #tpu.memory_space<vmem>>, vector<12x256xf32>,
    %43 = vector.extract_strided_slice %22 {offsets = [0, 17], sizes = [12, 256], strides = [1, 1]} : vector<12x290xf32> to vector<12x256xf32>
    %c48 = arith.constant 48 : index
    %c0_13 = arith.constant 0 : index
    %44 = vector.load %arg9[%c48, %c0_13] : memref<108x1024xf32, #tpu.memory_space<vmem>>, vector<12x256xf32>
    tpu.vector_store %arg9[%c48, %c0_13], %43 {strides = array<i32>} : memref<108x1024xf32, #tpu.memory_space<vmem>>, vector<12x256xf32>,
    %45 = vector.extract_strided_slice %22 {offsets = [0, 18], sizes = [12, 256], strides = [1, 1]} : vector<12x290xf32> to vector<12x256xf32>
    %cst_14 = arith.constant 0.000000e+00 : f32
    %46 = vector.shape_cast %20 : vector<1x256xi1> to vector<1x256xi1>
    %47 = vector.broadcast %46 : vector<1x256xi1> to vector<12x256xi1>
    %48 = vector.broadcast %cst_14 : f32 to vector<12x256xf32>
    %49 = arith.select %47, %45, %48 : vector<12x256xi1>, vector<12x256xf32>
    %c60 = arith.constant 60 : index
    %c0_15 = arith.constant 0 : index
    %50 = vector.load %arg9[%c60, %c0_15] : memref<108x1024xf32, #tpu.memory_space<vmem>>, vector<12x256xf32>
    tpu.vector_store %arg9[%c60, %c0_15], %49 {strides = array<i32>} : memref<108x1024xf32, #tpu.memory_space<vmem>>, vector<12x256xf32>,
    %51 = vector.extract_strided_slice %22 {offsets = [0, 32], sizes = [12, 256], strides = [1, 1]} : vector<12x290xf32> to vector<12x256xf32>
    %cst_16 = arith.constant 0.000000e+00 : f32
    %52 = vector.shape_cast %18 : vector<1x256xi1> to vector<1x256xi1>
    %53 = vector.broadcast %52 : vector<1x256xi1> to vector<12x256xi1>
    %54 = vector.broadcast %cst_16 : f32 to vector<12x256xf32>
    %55 = arith.select %53, %51, %54 : vector<12x256xi1>, vector<12x256xf32>
    %c72 = arith.constant 72 : index
    %c0_17 = arith.constant 0 : index
    %56 = vector.load %arg9[%c72, %c0_17] : memref<108x1024xf32, #tpu.memory_space<vmem>>, vector<12x256xf32>
    tpu.vector_store %arg9[%c72, %c0_17], %55 {strides = array<i32>} : memref<108x1024xf32, #tpu.memory_space<vmem>>, vector<12x256xf32>,
    %57 = vector.extract_strided_slice %22 {offsets = [0, 33], sizes = [12, 256], strides = [1, 1]} : vector<12x290xf32> to vector<12x256xf32>
    %c84 = arith.constant 84 : index
    %c0_18 = arith.constant 0 : index
    %58 = vector.load %arg9[%c84, %c0_18] : memref<108x1024xf32, #tpu.memory_space<vmem>>, vector<12x256xf32>
    tpu.vector_store %arg9[%c84, %c0_18], %57 {strides = array<i32>} : memref<108x1024xf32, #tpu.memory_space<vmem>>, vector<12x256xf32>,
    %59 = vector.extract_strided_slice %22 {offsets = [0, 34], sizes = [12, 256], strides = [1, 1]} : vector<12x290xf32> to vector<12x256xf32>
    %cst_19 = arith.constant 0.000000e+00 : f32
    %60 = vector.shape_cast %20 : vector<1x256xi1> to vector<1x256xi1>
    %61 = vector.broadcast %60 : vector<1x256xi1> to vector<12x256xi1>
    %62 = vector.broadcast %cst_19 : f32 to vector<12x256xf32>
    %63 = arith.select %61, %59, %62 : vector<12x256xi1>, vector<12x256xf32>
    %c96 = arith.constant 96 : index
    %c0_20 = arith.constant 0 : index
    %64 = vector.load %arg9[%c96, %c0_20] : memref<108x1024xf32, #tpu.memory_space<vmem>>, vector<12x256xf32>
    tpu.vector_store %arg9[%c96, %c0_20], %63 {strides = array<i32>} : memref<108x1024xf32, #tpu.memory_space<vmem>>, vector<12x256xf32>,
    %c1 = arith.constant 1 : index
    %c0_21 = arith.constant 0 : index
    %c0_22 = arith.constant 0 : index
    %65 = vector.load %arg1[%c1, %c0_21, %c0_22] : memref<4x12x290xf32, #tpu.memory_space<vmem>>, vector<1x12x290xf32>
    %66 = vector.shape_cast %65 : vector<1x12x290xf32> to vector<12x290xf32>
    %67 = vector.extract_strided_slice %66 {offsets = [0, 0], sizes = [12, 256], strides = [1, 1]} : vector<12x290xf32> to vector<12x256xf32>
    %cst_23 = arith.constant 0.000000e+00 : f32
    %68 = vector.shape_cast %18 : vector<1x256xi1> to vector<1x256xi1>
    %69 = vector.broadcast %68 : vector<1x256xi1> to vector<12x256xi1>
    %70 = vector.broadcast %cst_23 : f32 to vector<12x256xf32>
    %71 = arith.select %69, %67, %70 : vector<12x256xi1>, vector<12x256xf32>
    %c0_24 = arith.constant 0 : index
    %c256 = arith.constant 256 : index
    %72 = vector.load %arg9[%c0_24, %c256] : memref<108x1024xf32, #tpu.memory_space<vmem>>, vector<12x256xf32>
    tpu.vector_store %arg9[%c0_24, %c256], %71 {strides = array<i32>} : memref<108x1024xf32, #tpu.memory_space<vmem>>, vector<12x256xf32>,
    %73 = vector.extract_strided_slice %66 {offsets = [0, 1], sizes = [12, 256], strides = [1, 1]} : vector<12x290xf32> to vector<12x256xf32>
    %c12_25 = arith.constant 12 : index
    %c256_26 = arith.constant 256 : index
    %74 = vector.load %arg9[%c12_25, %c256_26] : memref<108x1024xf32, #tpu.memory_space<vmem>>, vector<12x256xf32>
    tpu.vector_store %arg9[%c12_25, %c256_26], %73 {strides = array<i32>} : memref<108x1024xf32, #tpu.memory_space<vmem>>, vector<12x256xf32>,
    %75 = vector.extract_strided_slice %66 {offsets = [0, 2], sizes = [12, 256], strides = [1, 1]} : vector<12x290xf32> to vector<12x256xf32>
    %cst_27 = arith.constant 0.000000e+00 : f32
    %76 = vector.shape_cast %20 : vector<1x256xi1> to vector<1x256xi1>
    %77 = vector.broadcast %76 : vector<1x256xi1> to vector<12x256xi1>
    %78 = vector.broadcast %cst_27 : f32 to vector<12x256xf32>
    %79 = arith.select %77, %75, %78 : vector<12x256xi1>, vector<12x256xf32>
    %c24_28 = arith.constant 24 : index
    %c256_29 = arith.constant 256 : index
    %80 = vector.load %arg9[%c24_28, %c256_29] : memref<108x1024xf32, #tpu.memory_space<vmem>>, vector<12x256xf32>
    tpu.vector_store %arg9[%c24_28, %c256_29], %79 {strides = array<i32>} : memref<108x1024xf32, #tpu.memory_space<vmem>>, vector<12x256xf32>,
    %81 = vector.extract_strided_slice %66 {offsets = [0, 16], sizes = [12, 256], strides = [1, 1]} : vector<12x290xf32> to vector<12x256xf32>
    %cst_30 = arith.constant 0.000000e+00 : f32
    %82 = vector.shape_cast %18 : vector<1x256xi1> to vector<1x256xi1>
    %83 = vector.broadcast %82 : vector<1x256xi1> to vector<12x256xi1>
    %84 = vector.broadcast %cst_30 : f32 to vector<12x256xf32>
    %85 = arith.select %83, %81, %84 : vector<12x256xi1>, vector<12x256xf32>
    %c36_31 = arith.constant 36 : index
    %c256_32 = arith.constant 256 : index
    %86 = vector.load %arg9[%c36_31, %c256_32] : memref<108x1024xf32, #tpu.memory_space<vmem>>, vector<12x256xf32>
    tpu.vector_store %arg9[%c36_31, %c256_32], %85 {strides = array<i32>} : memref<108x1024xf32, #tpu.memory_space<vmem>>, vector<12x256xf32>,
    %87 = vector.extract_strided_slice %66 {offsets = [0, 17], sizes = [12, 256], strides = [1, 1]} : vector<12x290xf32> to vector<12x256xf32>
    %c48_33 = arith.constant 48 : index
    %c256_34 = arith.constant 256 : index
    %88 = vector.load %arg9[%c48_33, %c256_34] : memref<108x1024xf32, #tpu.memory_space<vmem>>, vector<12x256xf32>
    tpu.vector_store %arg9[%c48_33, %c256_34], %87 {strides = array<i32>} : memref<108x1024xf32, #tpu.memory_space<vmem>>, vector<12x256xf32>,
    %89 = vector.extract_strided_slice %66 {offsets = [0, 18], sizes = [12, 256], strides = [1, 1]} : vector<12x290xf32> to vector<12x256xf32>
    %cst_35 = arith.constant 0.000000e+00 : f32
    %90 = vector.shape_cast %20 : vector<1x256xi1> to vector<1x256xi1>
    %91 = vector.broadcast %90 : vector<1x256xi1> to vector<12x256xi1>
    %92 = vector.broadcast %cst_35 : f32 to vector<12x256xf32>
    %93 = arith.select %91, %89, %92 : vector<12x256xi1>, vector<12x256xf32>
    %c60_36 = arith.constant 60 : index
    %c256_37 = arith.constant 256 : index
    %94 = vector.load %arg9[%c60_36, %c256_37] : memref<108x1024xf32, #tpu.memory_space<vmem>>, vector<12x256xf32>
    tpu.vector_store %arg9[%c60_36, %c256_37], %93 {strides = array<i32>} : memref<108x1024xf32, #tpu.memory_space<vmem>>, vector<12x256xf32>,
    %95 = vector.extract_strided_slice %66 {offsets = [0, 32], sizes = [12, 256], strides = [1, 1]} : vector<12x290xf32> to vector<12x256xf32>
    %cst_38 = arith.constant 0.000000e+00 : f32
    %96 = vector.shape_cast %18 : vector<1x256xi1> to vector<1x256xi1>
    %97 = vector.broadcast %96 : vector<1x256xi1> to vector<12x256xi1>
    %98 = vector.broadcast %cst_38 : f32 to vector<12x256xf32>
    %99 = arith.select %97, %95, %98 : vector<12x256xi1>, vector<12x256xf32>
    %c72_39 = arith.constant 72 : index
    %c256_40 = arith.constant 256 : index
    %100 = vector.load %arg9[%c72_39, %c256_40] : memref<108x1024xf32, #tpu.memory_space<vmem>>, vector<12x256xf32>
    tpu.vector_store %arg9[%c72_39, %c256_40], %99 {strides = array<i32>} : memref<108x1024xf32, #tpu.memory_space<vmem>>, vector<12x256xf32>,
    %101 = vector.extract_strided_slice %66 {offsets = [0, 33], sizes = [12, 256], strides = [1, 1]} : vector<12x290xf32> to vector<12x256xf32>
    %c84_41 = arith.constant 84 : index
    %c256_42 = arith.constant 256 : index
    %102 = vector.load %arg9[%c84_41, %c256_42] : memref<108x1024xf32, #tpu.memory_space<vmem>>, vector<12x256xf32>
    tpu.vector_store %arg9[%c84_41, %c256_42], %101 {strides = array<i32>} : memref<108x1024xf32, #tpu.memory_space<vmem>>, vector<12x256xf32>,
    %103 = vector.extract_strided_slice %66 {offsets = [0, 34], sizes = [12, 256], strides = [1, 1]} : vector<12x290xf32> to vector<12x256xf32>
    %cst_43 = arith.constant 0.000000e+00 : f32
    %104 = vector.shape_cast %20 : vector<1x256xi1> to vector<1x256xi1>
    %105 = vector.broadcast %104 : vector<1x256xi1> to vector<12x256xi1>
    %106 = vector.broadcast %cst_43 : f32 to vector<12x256xf32>
    %107 = arith.select %105, %103, %106 : vector<12x256xi1>, vector<12x256xf32>
    %c96_44 = arith.constant 96 : index
    %c256_45 = arith.constant 256 : index
    %108 = vector.load %arg9[%c96_44, %c256_45] : memref<108x1024xf32, #tpu.memory_space<vmem>>, vector<12x256xf32>
    tpu.vector_store %arg9[%c96_44, %c256_45], %107 {strides = array<i32>} : memref<108x1024xf32, #tpu.memory_space<vmem>>, vector<12x256xf32>,
    %c2 = arith.constant 2 : index
    %c0_46 = arith.constant 0 : index
    %c0_47 = arith.constant 0 : index
    %109 = vector.load %arg1[%c2, %c0_46, %c0_47] : memref<4x12x290xf32, #tpu.memory_space<vmem>>, vector<1x12x290xf32>
    %110 = vector.shape_cast %109 : vector<1x12x290xf32> to vector<12x290xf32>
    %111 = vector.extract_strided_slice %110 {offsets = [0, 0], sizes = [12, 256], strides = [1, 1]} : vector<12x290xf32> to vector<12x256xf32>
    %cst_48 = arith.constant 0.000000e+00 : f32
    %112 = vector.shape_cast %18 : vector<1x256xi1> to vector<1x256xi1>
    %113 = vector.broadcast %112 : vector<1x256xi1> to vector<12x256xi1>
    %114 = vector.broadcast %cst_48 : f32 to vector<12x256xf32>
    %115 = arith.select %113, %111, %114 : vector<12x256xi1>, vector<12x256xf32>
    %c0_49 = arith.constant 0 : index
    %c512 = arith.constant 512 : index
    %116 = vector.load %arg9[%c0_49, %c512] : memref<108x1024xf32, #tpu.memory_space<vmem>>, vector<12x256xf32>
    tpu.vector_store %arg9[%c0_49, %c512], %115 {strides = array<i32>} : memref<108x1024xf32, #tpu.memory_space<vmem>>, vector<12x256xf32>,
    %117 = vector.extract_strided_slice %110 {offsets = [0, 1], sizes = [12, 256], strides = [1, 1]} : vector<12x290xf32> to vector<12x256xf32>
    %c12_50 = arith.constant 12 : index
    %c512_51 = arith.constant 512 : index
    %118 = vector.load %arg9[%c12_50, %c512_51] : memref<108x1024xf32, #tpu.memory_space<vmem>>, vector<12x256xf32>
    tpu.vector_store %arg9[%c12_50, %c512_51], %117 {strides = array<i32>} : memref<108x1024xf32, #tpu.memory_space<vmem>>, vector<12x256xf32>,
    %119 = vector.extract_strided_slice %110 {offsets = [0, 2], sizes = [12, 256], strides = [1, 1]} : vector<12x290xf32> to vector<12x256xf32>
    %cst_52 = arith.constant 0.000000e+00 : f32
    %120 = vector.shape_cast %20 : vector<1x256xi1> to vector<1x256xi1>
    %121 = vector.broadcast %120 : vector<1x256xi1> to vector<12x256xi1>
    %122 = vector.broadcast %cst_52 : f32 to vector<12x256xf32>
    %123 = arith.select %121, %119, %122 : vector<12x256xi1>, vector<12x256xf32>
    %c24_53 = arith.constant 24 : index
    %c512_54 = arith.constant 512 : index
    %124 = vector.load %arg9[%c24_53, %c512_54] : memref<108x1024xf32, #tpu.memory_space<vmem>>, vector<12x256xf32>
    tpu.vector_store %arg9[%c24_53, %c512_54], %123 {strides = array<i32>} : memref<108x1024xf32, #tpu.memory_space<vmem>>, vector<12x256xf32>,
    %125 = vector.extract_strided_slice %110 {offsets = [0, 16], sizes = [12, 256], strides = [1, 1]} : vector<12x290xf32> to vector<12x256xf32>
    %cst_55 = arith.constant 0.000000e+00 : f32
    %126 = vector.shape_cast %18 : vector<1x256xi1> to vector<1x256xi1>
    %127 = vector.broadcast %126 : vector<1x256xi1> to vector<12x256xi1>
    %128 = vector.broadcast %cst_55 : f32 to vector<12x256xf32>
    %129 = arith.select %127, %125, %128 : vector<12x256xi1>, vector<12x256xf32>
    %c36_56 = arith.constant 36 : index
    %c512_57 = arith.constant 512 : index
    %130 = vector.load %arg9[%c36_56, %c512_57] : memref<108x1024xf32, #tpu.memory_space<vmem>>, vector<12x256xf32>
    tpu.vector_store %arg9[%c36_56, %c512_57], %129 {strides = array<i32>} : memref<108x1024xf32, #tpu.memory_space<vmem>>, vector<12x256xf32>,
    %131 = vector.extract_strided_slice %110 {offsets = [0, 17], sizes = [12, 256], strides = [1, 1]} : vector<12x290xf32> to vector<12x256xf32>
    %c48_58 = arith.constant 48 : index
    %c512_59 = arith.constant 512 : index
    %132 = vector.load %arg9[%c48_58, %c512_59] : memref<108x1024xf32, #tpu.memory_space<vmem>>, vector<12x256xf32>
    tpu.vector_store %arg9[%c48_58, %c512_59], %131 {strides = array<i32>} : memref<108x1024xf32, #tpu.memory_space<vmem>>, vector<12x256xf32>,
    %133 = vector.extract_strided_slice %110 {offsets = [0, 18], sizes = [12, 256], strides = [1, 1]} : vector<12x290xf32> to vector<12x256xf32>
    %cst_60 = arith.constant 0.000000e+00 : f32
    %134 = vector.shape_cast %20 : vector<1x256xi1> to vector<1x256xi1>
    %135 = vector.broadcast %134 : vector<1x256xi1> to vector<12x256xi1>
    %136 = vector.broadcast %cst_60 : f32 to vector<12x256xf32>
    %137 = arith.select %135, %133, %136 : vector<12x256xi1>, vector<12x256xf32>
    %c60_61 = arith.constant 60 : index
    %c512_62 = arith.constant 512 : index
    %138 = vector.load %arg9[%c60_61, %c512_62] : memref<108x1024xf32, #tpu.memory_space<vmem>>, vector<12x256xf32>
    tpu.vector_store %arg9[%c60_61, %c512_62], %137 {strides = array<i32>} : memref<108x1024xf32, #tpu.memory_space<vmem>>, vector<12x256xf32>,
    %139 = vector.extract_strided_slice %110 {offsets = [0, 32], sizes = [12, 256], strides = [1, 1]} : vector<12x290xf32> to vector<12x256xf32>
    %cst_63 = arith.constant 0.000000e+00 : f32
    %140 = vector.shape_cast %18 : vector<1x256xi1> to vector<1x256xi1>
    %141 = vector.broadcast %140 : vector<1x256xi1> to vector<12x256xi1>
    %142 = vector.broadcast %cst_63 : f32 to vector<12x256xf32>
    %143 = arith.select %141, %139, %142 : vector<12x256xi1>, vector<12x256xf32>
    %c72_64 = arith.constant 72 : index
    %c512_65 = arith.constant 512 : index
    %144 = vector.load %arg9[%c72_64, %c512_65] : memref<108x1024xf32, #tpu.memory_space<vmem>>, vector<12x256xf32>
    tpu.vector_store %arg9[%c72_64, %c512_65], %143 {strides = array<i32>} : memref<108x1024xf32, #tpu.memory_space<vmem>>, vector<12x256xf32>,
    %145 = vector.extract_strided_slice %110 {offsets = [0, 33], sizes = [12, 256], strides = [1, 1]} : vector<12x290xf32> to vector<12x256xf32>
    %c84_66 = arith.constant 84 : index
    %c512_67 = arith.constant 512 : index
    %146 = vector.load %arg9[%c84_66, %c512_67] : memref<108x1024xf32, #tpu.memory_space<vmem>>, vector<12x256xf32>
    tpu.vector_store %arg9[%c84_66, %c512_67], %145 {strides = array<i32>} : memref<108x1024xf32, #tpu.memory_space<vmem>>, vector<12x256xf32>,
    %147 = vector.extract_strided_slice %110 {offsets = [0, 34], sizes = [12, 256], strides = [1, 1]} : vector<12x290xf32> to vector<12x256xf32>
    %cst_68 = arith.constant 0.000000e+00 : f32
    %148 = vector.shape_cast %20 : vector<1x256xi1> to vector<1x256xi1>
    %149 = vector.broadcast %148 : vector<1x256xi1> to vector<12x256xi1>
    %150 = vector.broadcast %cst_68 : f32 to vector<12x256xf32>
    %151 = arith.select %149, %147, %150 : vector<12x256xi1>, vector<12x256xf32>
    %c96_69 = arith.constant 96 : index
    %c512_70 = arith.constant 512 : index
    %152 = vector.load %arg9[%c96_69, %c512_70] : memref<108x1024xf32, #tpu.memory_space<vmem>>, vector<12x256xf32>
    tpu.vector_store %arg9[%c96_69, %c512_70], %151 {strides = array<i32>} : memref<108x1024xf32, #tpu.memory_space<vmem>>, vector<12x256xf32>,
    %c3 = arith.constant 3 : index
    %c0_71 = arith.constant 0 : index
    %c0_72 = arith.constant 0 : index
    %153 = vector.load %arg1[%c3, %c0_71, %c0_72] : memref<4x12x290xf32, #tpu.memory_space<vmem>>, vector<1x12x290xf32>
    %154 = vector.shape_cast %153 : vector<1x12x290xf32> to vector<12x290xf32>
    %155 = vector.extract_strided_slice %154 {offsets = [0, 0], sizes = [12, 256], strides = [1, 1]} : vector<12x290xf32> to vector<12x256xf32>
    %cst_73 = arith.constant 0.000000e+00 : f32
    %156 = vector.shape_cast %18 : vector<1x256xi1> to vector<1x256xi1>
    %157 = vector.broadcast %156 : vector<1x256xi1> to vector<12x256xi1>
    %158 = vector.broadcast %cst_73 : f32 to vector<12x256xf32>
    %159 = arith.select %157, %155, %158 : vector<12x256xi1>, vector<12x256xf32>
    %c0_74 = arith.constant 0 : index
    %c768 = arith.constant 768 : index
    %160 = vector.load %arg9[%c0_74, %c768] : memref<108x1024xf32, #tpu.memory_space<vmem>>, vector<12x256xf32>
    tpu.vector_store %arg9[%c0_74, %c768], %159 {strides = array<i32>} : memref<108x1024xf32, #tpu.memory_space<vmem>>, vector<12x256xf32>,
    %161 = vector.extract_strided_slice %154 {offsets = [0, 1], sizes = [12, 256], strides = [1, 1]} : vector<12x290xf32> to vector<12x256xf32>
    %c12_75 = arith.constant 12 : index
    %c768_76 = arith.constant 768 : index
    %162 = vector.load %arg9[%c12_75, %c768_76] : memref<108x1024xf32, #tpu.memory_space<vmem>>, vector<12x256xf32>
    tpu.vector_store %arg9[%c12_75, %c768_76], %161 {strides = array<i32>} : memref<108x1024xf32, #tpu.memory_space<vmem>>, vector<12x256xf32>,
    %163 = vector.extract_strided_slice %154 {offsets = [0, 2], sizes = [12, 256], strides = [1, 1]} : vector<12x290xf32> to vector<12x256xf32>
    %cst_77 = arith.constant 0.000000e+00 : f32
    %164 = vector.shape_cast %20 : vector<1x256xi1> to vector<1x256xi1>
    %165 = vector.broadcast %164 : vector<1x256xi1> to vector<12x256xi1>
    %166 = vector.broadcast %cst_77 : f32 to vector<12x256xf32>
    %167 = arith.select %165, %163, %166 : vector<12x256xi1>, vector<12x256xf32>
    %c24_78 = arith.constant 24 : index
    %c768_79 = arith.constant 768 : index
    %168 = vector.load %arg9[%c24_78, %c768_79] : memref<108x1024xf32, #tpu.memory_space<vmem>>, vector<12x256xf32>
    tpu.vector_store %arg9[%c24_78, %c768_79], %167 {strides = array<i32>} : memref<108x1024xf32, #tpu.memory_space<vmem>>, vector<12x256xf32>,
    %169 = vector.extract_strided_slice %154 {offsets = [0, 16], sizes = [12, 256], strides = [1, 1]} : vector<12x290xf32> to vector<12x256xf32>
    %cst_80 = arith.constant 0.000000e+00 : f32
    %170 = vector.shape_cast %18 : vector<1x256xi1> to vector<1x256xi1>
    %171 = vector.broadcast %170 : vector<1x256xi1> to vector<12x256xi1>
    %172 = vector.broadcast %cst_80 : f32 to vector<12x256xf32>
    %173 = arith.select %171, %169, %172 : vector<12x256xi1>, vector<12x256xf32>
    %c36_81 = arith.constant 36 : index
    %c768_82 = arith.constant 768 : index
    %174 = vector.load %arg9[%c36_81, %c768_82] : memref<108x1024xf32, #tpu.memory_space<vmem>>, vector<12x256xf32>
    tpu.vector_store %arg9[%c36_81, %c768_82], %173 {strides = array<i32>} : memref<108x1024xf32, #tpu.memory_space<vmem>>, vector<12x256xf32>,
    %175 = vector.extract_strided_slice %154 {offsets = [0, 17], sizes = [12, 256], strides = [1, 1]} : vector<12x290xf32> to vector<12x256xf32>
    %c48_83 = arith.constant 48 : index
    %c768_84 = arith.constant 768 : index
    %176 = vector.load %arg9[%c48_83, %c768_84] : memref<108x1024xf32, #tpu.memory_space<vmem>>, vector<12x256xf32>
    tpu.vector_store %arg9[%c48_83, %c768_84], %175 {strides = array<i32>} : memref<108x1024xf32, #tpu.memory_space<vmem>>, vector<12x256xf32>,
    %177 = vector.extract_strided_slice %154 {offsets = [0, 18], sizes = [12, 256], strides = [1, 1]} : vector<12x290xf32> to vector<12x256xf32>
    %cst_85 = arith.constant 0.000000e+00 : f32
    %178 = vector.shape_cast %20 : vector<1x256xi1> to vector<1x256xi1>
    %179 = vector.broadcast %178 : vector<1x256xi1> to vector<12x256xi1>
    %180 = vector.broadcast %cst_85 : f32 to vector<12x256xf32>
    %181 = arith.select %179, %177, %180 : vector<12x256xi1>, vector<12x256xf32>
    %c60_86 = arith.constant 60 : index
    %c768_87 = arith.constant 768 : index
    %182 = vector.load %arg9[%c60_86, %c768_87] : memref<108x1024xf32, #tpu.memory_space<vmem>>, vector<12x256xf32>
    tpu.vector_store %arg9[%c60_86, %c768_87], %181 {strides = array<i32>} : memref<108x1024xf32, #tpu.memory_space<vmem>>, vector<12x256xf32>,
    %183 = vector.extract_strided_slice %154 {offsets = [0, 32], sizes = [12, 256], strides = [1, 1]} : vector<12x290xf32> to vector<12x256xf32>
    %cst_88 = arith.constant 0.000000e+00 : f32
    %184 = vector.shape_cast %18 : vector<1x256xi1> to vector<1x256xi1>
    %185 = vector.broadcast %184 : vector<1x256xi1> to vector<12x256xi1>
    %186 = vector.broadcast %cst_88 : f32 to vector<12x256xf32>
    %187 = arith.select %185, %183, %186 : vector<12x256xi1>, vector<12x256xf32>
    %c72_89 = arith.constant 72 : index
    %c768_90 = arith.constant 768 : index
    %188 = vector.load %arg9[%c72_89, %c768_90] : memref<108x1024xf32, #tpu.memory_space<vmem>>, vector<12x256xf32>
    tpu.vector_store %arg9[%c72_89, %c768_90], %187 {strides = array<i32>} : memref<108x1024xf32, #tpu.memory_space<vmem>>, vector<12x256xf32>,
    %189 = vector.extract_strided_slice %154 {offsets = [0, 33], sizes = [12, 256], strides = [1, 1]} : vector<12x290xf32> to vector<12x256xf32>
    %c84_91 = arith.constant 84 : index
    %c768_92 = arith.constant 768 : index
    %190 = vector.load %arg9[%c84_91, %c768_92] : memref<108x1024xf32, #tpu.memory_space<vmem>>, vector<12x256xf32>
    tpu.vector_store %arg9[%c84_91, %c768_92], %189 {strides = array<i32>} : memref<108x1024xf32, #tpu.memory_space<vmem>>, vector<12x256xf32>,
    %191 = vector.extract_strided_slice %154 {offsets = [0, 34], sizes = [12, 256], strides = [1, 1]} : vector<12x290xf32> to vector<12x256xf32>
    %cst_93 = arith.constant 0.000000e+00 : f32
    %192 = vector.shape_cast %20 : vector<1x256xi1> to vector<1x256xi1>
    %193 = vector.broadcast %192 : vector<1x256xi1> to vector<12x256xi1>
    %194 = vector.broadcast %cst_93 : f32 to vector<12x256xf32>
    %195 = arith.select %193, %191, %194 : vector<12x256xi1>, vector<12x256xf32>
    %c96_94 = arith.constant 96 : index
    %c768_95 = arith.constant 768 : index
    %196 = vector.load %arg9[%c96_94, %c768_95] : memref<108x1024xf32, #tpu.memory_space<vmem>>, vector<12x256xf32>
    tpu.vector_store %arg9[%c96_94, %c768_95], %195 {strides = array<i32>} : memref<108x1024xf32, #tpu.memory_space<vmem>>, vector<12x256xf32>,
    %c0_96 = arith.constant 0 : index
    %c0_97 = arith.constant 0 : index
    %197 = vector.load %arg2[%c0_96, %c0_97] : memref<12x108xf32, #tpu.memory_space<vmem>>, vector<12x108xf32>
    %c0_98 = arith.constant 0 : index
    %c0_99 = arith.constant 0 : index
    %198 = vector.load %arg9[%c0_98, %c0_99] : memref<108x1024xf32, #tpu.memory_space<vmem>>, vector<108x1024xf32>
    %cst_100 = arith.constant dense<0.000000e+00> : vector<12x1024xf32>
    %199 = tpu.matmul %197, %198, %cst_100 {dimension_numbers = #tpu.dot_dimension_numbers<[1], [0], [0], [1], [0, 0, 1, 1], [], []>} : vector<12x108xf32>, vector<108x1024xf32>, vector<12x1024xf32> -> vector<12x1024xf32>
    %c0_101 = arith.constant 0 : index
    %c0_102 = arith.constant 0 : index
    %200 = vector.load %arg3[%c0_101, %c0_102] : memref<12x1xf32, #tpu.memory_space<vmem>>, vector<12x1xf32>
    %201 = vector.broadcast %200 : vector<12x1xf32> to vector<12x1024xf32>
    %202 = arith.addf %199, %201 : vector<12x1024xf32>
    %203 = tpu.iota {dimensions = array<i32: 1>} : vector<1x4xi32>
    %cst_103 = arith.constant 0.000000e+00 : f32
    %204 = vector.broadcast %cst_103 : f32 to vector<12x4xf32>
    %205 = vector.extract_strided_slice %202 {offsets = [0, 0], sizes = [12, 256], strides = [1, 1]} : vector<12x1024xf32> to vector<12x256xf32>
    %cst_104 = arith.constant dense<0.000000e+00> : vector<12xf32>
    %206 = vector.multi_reduction <add>, %205, %cst_104 [1] : vector<12x256xf32> to vector<12xf32>
    %207 = vector.shape_cast %206 : vector<12xf32> to vector<12x1xf32>
    %cst_105 = arith.constant 2.560000e+02 : f32
    %208 = vector.broadcast %cst_105 : f32 to vector<12x1xf32>
    %209 = arith.divf %207, %208 : vector<12x1xf32>
    %c0_i32_106 = arith.constant 0 : i32
    %210 = vector.broadcast %c0_i32_106 : i32 to vector<1x4xi32>
    %211 = arith.cmpi eq, %203, %210 : vector<1x4xi32>
    %cst_107 = arith.constant 0.000000e+00 : f32
    %212 = vector.shape_cast %211 : vector<1x4xi1> to vector<1x4xi1>
    %213 = vector.broadcast %212 : vector<1x4xi1> to vector<12x4xi1>
    %214 = vector.shape_cast %209 : vector<12x1xf32> to vector<12x1xf32>
    %215 = vector.broadcast %214 : vector<12x1xf32> to vector<12x4xf32>
    %216 = vector.broadcast %cst_107 : f32 to vector<12x4xf32>
    %217 = arith.select %213, %215, %216 : vector<12x4xi1>, vector<12x4xf32>
    %218 = arith.addf %204, %217 : vector<12x4xf32>
    %219 = vector.extract_strided_slice %202 {offsets = [0, 256], sizes = [12, 256], strides = [1, 1]} : vector<12x1024xf32> to vector<12x256xf32>
    %cst_108 = arith.constant dense<0.000000e+00> : vector<12xf32>
    %220 = vector.multi_reduction <add>, %219, %cst_108 [1] : vector<12x256xf32> to vector<12xf32>
    %221 = vector.shape_cast %220 : vector<12xf32> to vector<12x1xf32>
    %cst_109 = arith.constant 2.560000e+02 : f32
    %222 = vector.broadcast %cst_109 : f32 to vector<12x1xf32>
    %223 = arith.divf %221, %222 : vector<12x1xf32>
    %c1_i32_110 = arith.constant 1 : i32
    %224 = vector.broadcast %c1_i32_110 : i32 to vector<1x4xi32>
    %225 = arith.cmpi eq, %203, %224 : vector<1x4xi32>
    %cst_111 = arith.constant 0.000000e+00 : f32
    %226 = vector.shape_cast %225 : vector<1x4xi1> to vector<1x4xi1>
    %227 = vector.broadcast %226 : vector<1x4xi1> to vector<12x4xi1>
    %228 = vector.shape_cast %223 : vector<12x1xf32> to vector<12x1xf32>
    %229 = vector.broadcast %228 : vector<12x1xf32> to vector<12x4xf32>
    %230 = vector.broadcast %cst_111 : f32 to vector<12x4xf32>
    %231 = arith.select %227, %229, %230 : vector<12x4xi1>, vector<12x4xf32>
    %232 = arith.addf %218, %231 : vector<12x4xf32>
    %233 = vector.extract_strided_slice %202 {offsets = [0, 512], sizes = [12, 256], strides = [1, 1]} : vector<12x1024xf32> to vector<12x256xf32>
    %cst_112 = arith.constant dense<0.000000e+00> : vector<12xf32>
    %234 = vector.multi_reduction <add>, %233, %cst_112 [1] : vector<12x256xf32> to vector<12xf32>
    %235 = vector.shape_cast %234 : vector<12xf32> to vector<12x1xf32>
    %cst_113 = arith.constant 2.560000e+02 : f32
    %236 = vector.broadcast %cst_113 : f32 to vector<12x1xf32>
    %237 = arith.divf %235, %236 : vector<12x1xf32>
    %c2_i32 = arith.constant 2 : i32
    %238 = vector.broadcast %c2_i32 : i32 to vector<1x4xi32>
    %239 = arith.cmpi eq, %203, %238 : vector<1x4xi32>
    %cst_114 = arith.constant 0.000000e+00 : f32
    %240 = vector.shape_cast %239 : vector<1x4xi1> to vector<1x4xi1>
    %241 = vector.broadcast %240 : vector<1x4xi1> to vector<12x4xi1>
    %242 = vector.shape_cast %237 : vector<12x1xf32> to vector<12x1xf32>
    %243 = vector.broadcast %242 : vector<12x1xf32> to vector<12x4xf32>
    %244 = vector.broadcast %cst_114 : f32 to vector<12x4xf32>
    %245 = arith.select %241, %243, %244 : vector<12x4xi1>, vector<12x4xf32>
    %246 = arith.addf %232, %245 : vector<12x4xf32>
    %247 = vector.extract_strided_slice %202 {offsets = [0, 768], sizes = [12, 256], strides = [1, 1]} : vector<12x1024xf32> to vector<12x256xf32>
    %cst_115 = arith.constant dense<0.000000e+00> : vector<12xf32>
    %248 = vector.multi_reduction <add>, %247, %cst_115 [1] : vector<12x256xf32> to vector<12xf32>
    %249 = vector.shape_cast %248 : vector<12xf32> to vector<12x1xf32>
    %cst_116 = arith.constant 2.560000e+02 : f32
    %250 = vector.broadcast %cst_116 : f32 to vector<12x1xf32>
    %251 = arith.divf %249, %250 : vector<12x1xf32>
    %c3_i32 = arith.constant 3 : i32
    %252 = vector.broadcast %c3_i32 : i32 to vector<1x4xi32>
    %253 = arith.cmpi eq, %203, %252 : vector<1x4xi32>
    %cst_117 = arith.constant 0.000000e+00 : f32
    %254 = vector.shape_cast %253 : vector<1x4xi1> to vector<1x4xi1>
    %255 = vector.broadcast %254 : vector<1x4xi1> to vector<12x4xi1>
    %256 = vector.shape_cast %251 : vector<12x1xf32> to vector<12x1xf32>
    %257 = vector.broadcast %256 : vector<12x1xf32> to vector<12x4xf32>
    %258 = vector.broadcast %cst_117 : f32 to vector<12x4xf32>
    %259 = arith.select %255, %257, %258 : vector<12x4xi1>, vector<12x4xf32>
    %260 = arith.addf %246, %259 : vector<12x4xf32>
    %c0_118 = arith.constant 0 : index
    %c0_119 = arith.constant 0 : index
    %261 = vector.load %arg4[%c0_118, %c0_119] : memref<4x12xf32, #tpu.memory_space<vmem>>, vector<4x12xf32>
    %cst_120 = arith.constant dense<0.000000e+00> : vector<4x4xf32>
    %262 = tpu.matmul %261, %260, %cst_120 {dimension_numbers = #tpu.dot_dimension_numbers<[1], [0], [0], [1], [0, 0, 1, 1], [], []>} : vector<4x12xf32>, vector<12x4xf32>, vector<4x4xf32> -> vector<4x4xf32>
    %cst_121 = arith.constant 0.000000e+00 : f32
    %263 = vector.broadcast %cst_121 : f32 to vector<4x4xf32>
    %264 = arith.maximumf %262, %263 : vector<4x4xf32>
    %c0_122 = arith.constant 0 : index
    %c0_123 = arith.constant 0 : index
    %265 = vector.load %arg5[%c0_122, %c0_123] : memref<12x4xf32, #tpu.memory_space<vmem>>, vector<12x4xf32>
    %cst_124 = arith.constant dense<0.000000e+00> : vector<12x4xf32>
    %266 = tpu.matmul %265, %264, %cst_124 {dimension_numbers = #tpu.dot_dimension_numbers<[1], [0], [0], [1], [0, 0, 1, 1], [], []>} : vector<12x4xf32>, vector<4x4xf32>, vector<12x4xf32> -> vector<12x4xf32>
    %267 = arith.negf %266 : vector<12x4xf32>
    %268 = math.exp %267 : vector<12x4xf32>
    %cst_125 = arith.constant 1.000000e+00 : f32
    %269 = vector.broadcast %cst_125 : f32 to vector<12x4xf32>
    %270 = arith.addf %269, %268 : vector<12x4xf32>
    %271 = arith.divf %269, %270 : vector<12x4xf32>
    %272 = vector.extract_strided_slice %202 {offsets = [0, 0], sizes = [12, 256], strides = [1, 1]} : vector<12x1024xf32> to vector<12x256xf32>
    %273 = vector.extract_strided_slice %271 {offsets = [0, 0], sizes = [12, 1], strides = [1, 1]} : vector<12x4xf32> to vector<12x1xf32>
    %274 = vector.broadcast %273 : vector<12x1xf32> to vector<12x256xf32>
    %275 = arith.mulf %272, %274 : vector<12x256xf32>
    %cst_126 = arith.constant 3.500000e-01 : f32
    %276 = vector.broadcast %cst_126 : f32 to vector<12x256xf32>
    %277 = arith.mulf %275, %276 : vector<12x256xf32>
    %cst_127 = arith.constant 6.500000e-01 : f32
    %278 = vector.broadcast %cst_127 : f32 to vector<12x256xf32>
    %279 = arith.addf %277, %278 : vector<12x256xf32>
    %280 = arith.mulf %272, %279 : vector<12x256xf32>
    %281 = vector.extract_strided_slice %202 {offsets = [0, 256], sizes = [12, 256], strides = [1, 1]} : vector<12x1024xf32> to vector<12x256xf32>
    %282 = vector.extract_strided_slice %271 {offsets = [0, 1], sizes = [12, 1], strides = [1, 1]} : vector<12x4xf32> to vector<12x1xf32>
    %283 = vector.broadcast %282 : vector<12x1xf32> to vector<12x256xf32>
    %284 = arith.mulf %281, %283 : vector<12x256xf32>
    %cst_128 = arith.constant 3.500000e-01 : f32
    %285 = vector.broadcast %cst_128 : f32 to vector<12x256xf32>
    %286 = arith.mulf %284, %285 : vector<12x256xf32>
    %cst_129 = arith.constant 6.500000e-01 : f32
    %287 = vector.broadcast %cst_129 : f32 to vector<12x256xf32>
    %288 = arith.addf %286, %287 : vector<12x256xf32>
    %289 = arith.mulf %281, %288 : vector<12x256xf32>
    %290 = vector.extract_strided_slice %202 {offsets = [0, 512], sizes = [12, 256], strides = [1, 1]} : vector<12x1024xf32> to vector<12x256xf32>
    %291 = vector.extract_strided_slice %271 {offsets = [0, 2], sizes = [12, 1], strides = [1, 1]} : vector<12x4xf32> to vector<12x1xf32>
    %292 = vector.broadcast %291 : vector<12x1xf32> to vector<12x256xf32>
    %293 = arith.mulf %290, %292 : vector<12x256xf32>
    %cst_130 = arith.constant 3.500000e-01 : f32
    %294 = vector.broadcast %cst_130 : f32 to vector<12x256xf32>
    %295 = arith.mulf %293, %294 : vector<12x256xf32>
    %cst_131 = arith.constant 6.500000e-01 : f32
    %296 = vector.broadcast %cst_131 : f32 to vector<12x256xf32>
    %297 = arith.addf %295, %296 : vector<12x256xf32>
    %298 = arith.mulf %290, %297 : vector<12x256xf32>
    %299 = vector.extract_strided_slice %202 {offsets = [0, 768], sizes = [12, 256], strides = [1, 1]} : vector<12x1024xf32> to vector<12x256xf32>
    %300 = vector.extract_strided_slice %271 {offsets = [0, 3], sizes = [12, 1], strides = [1, 1]} : vector<12x4xf32> to vector<12x1xf32>
    %301 = vector.broadcast %300 : vector<12x1xf32> to vector<12x256xf32>
    %302 = arith.mulf %299, %301 : vector<12x256xf32>
    %cst_132 = arith.constant 3.500000e-01 : f32
    %303 = vector.broadcast %cst_132 : f32 to vector<12x256xf32>
    %304 = arith.mulf %302, %303 : vector<12x256xf32>
    %cst_133 = arith.constant 6.500000e-01 : f32
    %305 = vector.broadcast %cst_133 : f32 to vector<12x256xf32>
    %306 = arith.addf %304, %305 : vector<12x256xf32>
    %307 = arith.mulf %299, %306 : vector<12x256xf32>
    %308 = tpu.concatenate %280, %289, %298, %307 in 1 : vector<12x256xf32>, vector<12x256xf32>, vector<12x256xf32>, vector<12x256xf32> -> vector<12x1024xf32>
    %c0_134 = arith.constant 0 : index
    %c0_135 = arith.constant 0 : index
    %309 = vector.load %arg6[%c0_134, %c0_135] : memref<4x12xf32, #tpu.memory_space<vmem>>, vector<4x12xf32>
    %cst_136 = arith.constant dense<0.000000e+00> : vector<4x1024xf32>
    %310 = tpu.matmul %309, %308, %cst_136 {dimension_numbers = #tpu.dot_dimension_numbers<[1], [0], [0], [1], [0, 0, 1, 1], [], []>} : vector<4x12xf32>, vector<12x1024xf32>, vector<4x1024xf32> -> vector<4x1024xf32>
    %c0_137 = arith.constant 0 : index
    %c0_138 = arith.constant 0 : index
    %311 = vector.load %arg7[%c0_137, %c0_138] : memref<4x1xf32, #tpu.memory_space<vmem>>, vector<4x1xf32>
    %312 = vector.broadcast %311 : vector<4x1xf32> to vector<4x1024xf32>
    %313 = arith.addf %310, %312 : vector<4x1024xf32>
    %c0_139 = arith.constant 0 : index
    %c0_140 = arith.constant 0 : index
    %314 = vector.load %arg8[%c0_139, %c0_140] : memref<4x1024xf32, #tpu.memory_space<vmem>>, vector<4x1024xf32>
    tpu.vector_store %arg8[%c0_139, %c0_140], %313 {strides = array<i32>} : memref<4x1024xf32, #tpu.memory_space<vmem>>, vector<4x1024xf32>,
    return
  }
  func.func @transform_0(%arg0: i32) -> (i32, i32, i32) {
    %c0_i32 = arith.constant 0 : i32
    %c0_i32_0 = arith.constant 0 : i32
    %c0_i32_1 = arith.constant 0 : i32
    return %arg0, %c0_i32, %c0_i32_0 : i32, i32, i32
  }
  func.func @transform_1(%arg0: i32) -> (i32, i32) {
    %c0_i32 = arith.constant 0 : i32
    %c0_i32_0 = arith.constant 0 : i32
    %c0_i32_1 = arith.constant 0 : i32
    return %c0_i32, %c0_i32_0 : i32, i32
  }
  func.func @transform_2(%arg0: i32) -> (i32, i32) {
    %c0_i32 = arith.constant 0 : i32
    %c0_i32_0 = arith.constant 0 : i32
    %c0_i32_1 = arith.constant 0 : i32
    return %c0_i32, %c0_i32_0 : i32, i32
  }
  func.func @transform_3(%arg0: i32) -> (i32, i32) {
    %c0_i32 = arith.constant 0 : i32
    %c0_i32_0 = arith.constant 0 : i32
    %c0_i32_1 = arith.constant 0 : i32
    return %c0_i32, %c0_i32_0 : i32, i32
  }
  func.func @transform_4(%arg0: i32) -> (i32, i32) {
    %c0_i32 = arith.constant 0 : i32
    %c0_i32_0 = arith.constant 0 : i32
    %c0_i32_1 = arith.constant 0 : i32
    return %c0_i32, %c0_i32_0 : i32, i32
  }
  func.func @transform_5(%arg0: i32) -> (i32, i32) {
    %c0_i32 = arith.constant 0 : i32
    %c0_i32_0 = arith.constant 0 : i32
    %c0_i32_1 = arith.constant 0 : i32
    return %c0_i32, %c0_i32_0 : i32, i32
  }
  func.func @transform_6(%arg0: i32) -> (i32, i32) {
    %c0_i32 = arith.constant 0 : i32
    %c0_i32_0 = arith.constant 0 : i32
    %c0_i32_1 = arith.constant 0 : i32
    return %c0_i32, %c0_i32_0 : i32, i32
  }
  func.func @transform_7(%arg0: i32) -> (i32, i32) {
    %c0_i32 = arith.constant 0 : i32
    %c0_i32_0 = arith.constant 0 : i32
    return %c0_i32, %arg0 : i32, i32
  }
}

</mosaic_0001>

<llo_original>
// kernel: adaptive_feature_selection.1
$region0: #{adaptive_feature_selection.1}
  #allocation0 [shape = 'u32[]', space=smem, size = 0x4, offset = 0x4, fixed_abs, tag = 'smem constant byte address 0x4 - core index']
  #allocation1 [shape = 'u32[144,128]{1,0:T(1,128)}', space=vmem, size = 0x12000, scoped, tag = 'internal scratch']
  #allocation2 [shape = 'f32[108,1024]{1,0:T(8,128)}', space=vmem, size = 0x70000, scoped, tag = 'scratch operand']
  %s0 = inlined_call_operand.vmem [shape: f32[8,12,290], index: 0, kind: input, shape index: {}]
  %s1 = inlined_call_operand.vmem [shape: f32[12,108], index: 1, kind: input, shape index: {}]
  %s2 = inlined_call_operand.vmem [shape: f32[12,1], index: 2, kind: input, shape index: {}]
  %s3 = inlined_call_operand.vmem [shape: f32[4,12], index: 3, kind: input, shape index: {}]
  %s4 = inlined_call_operand.vmem [shape: f32[12,4], index: 4, kind: input, shape index: {}]
  %s5 = inlined_call_operand.vmem [shape: f32[4,12], index: 5, kind: input, shape index: {}]
  %s6 = inlined_call_operand.vmem [shape: f32[4,1], index: 6, kind: input, shape index: {}]
  %s7 = inlined_call_operand.vmem [shape: f32[4,2048], index: 7, kind: output, shape index: {}]
  %s8 = sld [smem:[#allocation0]]
  $region61: #{adaptive_feature_selection.1} parent=0
    _
  %s10 = ssub.s32 1, %s8
  %s11 = scalar_select 0, %s10, %s8
  loop: start=0, step=1, limit=4
  $region2: #{adaptive_feature_selection.1} parent=0 // loop_pre_header
    _
  $region3: #{adaptive_feature_selection.1} parent=0 // loop_header
    %s13 = sphi 0, %s17
    %p14 = scmp.ge.s32.totalorder %s13, 4
    %s23 = sphi 0, %s25
    %s26 = sphi 0, %s23
    %s27 = sphi 0, %s26
    %s43 = sphi 0, %s27
    %s47 = sphi 0, %s47
    %s49 = sphi 0, %s47
    %s50 = sphi 0, %s49
    %s64 = sphi 0, %s50
    %s68 = sphi 0, %s68
    %s70 = sphi 0, %s68
    %s71 = sphi 0, %s70
    %s85 = sphi 0, %s71
    %s89 = sphi 0, %s89
    %s91 = sphi 0, %s89
    %s92 = sphi 0, %s91
    %s106 = sphi 0, %s92
    %s110 = sphi 0, %s110
    %s112 = sphi 0, %s110
    %s113 = sphi 0, %s112
    %s127 = sphi 0, %s113
    %s131 = sphi 0, %s131
    %s133 = sphi 0, %s131
    %s134 = sphi 0, %s133
    %s148 = sphi 0, %s134
    %s152 = sphi 0, %s152
    %s154 = sphi 0, %s152
    %s155 = sphi 0, %s154
    %s169 = sphi 0, %s155
    %s175 = sphi 0, %s177
    %s178 = sphi 0, %s175
    %s179 = sphi 0, %s178
    %s195 = sphi 0, %s179
  $region4: #{adaptive_feature_selection.1} parent=0 // loop_header_branch
    %16 = sbr.rel (%p14) target = $region8
  $region5: #{adaptive_feature_selection.1} parent=0 // loop_body
    %s18 = ssub.s32 %s13, 1
    %s19 = ssub.s32 %s13, 2
    %s20 = sadd.s32 %s13, 1
    %s21 = ssub.s32 %s13, %s20
    %p22 = scmp.eq.s32.totalorder %s21, 0
    %s24 = sadd.s32 %s23, 1
    %s25 = scalar_select %p22, %s23, %s24
    %p28 = pneg %p22
    %p29 = scmp.eq.s32.totalorder %s13, 1
    %p30 = por %p28, %p29
    %p31 = scmp.ne.s32.totalorder %s23, %s26
    %p32 = scmp.eq.s32.totalorder %s13, 0
    %p33 = por %p31, %p32
    %p34 = scmp.ne.s32.totalorder %s23, %s26
    %p35 = scmp.eq.s32.totalorder %s18, 1
    %p36 = por %p34, %p35
    %p37 = scmp.ne.s32.totalorder %s26, %s27
    %p38 = scmp.eq.s32.totalorder %s18, 0
    %p39 = por %p37, %p38
    %p40 = scmp.ne.s32.totalorder %s26, %s27
    %p41 = scmp.eq.s32.totalorder %s19, 1
    %p42 = por %p40, %p41
    %p44 = scmp.ne.s32.totalorder %s27, %s43
    %p45 = scmp.eq.s32.totalorder %s19, 0
    %p46 = por %p44, %p45
    %s48 = sadd.s32 %s47, 1
    %p51 = scmp.eq.s32.totalorder %s13, 1
    %p52 = scmp.ne.s32.totalorder %s47, %s49
    %p53 = scmp.eq.s32.totalorder %s13, 0
    %p54 = por %p52, %p53
    %p55 = scmp.ne.s32.totalorder %s47, %s49
    %p56 = scmp.eq.s32.totalorder %s18, 1
    %p57 = por %p55, %p56
    %p58 = scmp.ne.s32.totalorder %s49, %s50
    %p59 = scmp.eq.s32.totalorder %s18, 0
    %p60 = por %p58, %p59
    %p61 = scmp.ne.s32.totalorder %s49, %s50
    %p62 = scmp.eq.s32.totalorder %s19, 1
    %p63 = por %p61, %p62
    %p65 = scmp.ne.s32.totalorder %s50, %s64
    %p66 = scmp.eq.s32.totalorder %s19, 0
    %p67 = por %p65, %p66
    %s69 = sadd.s32 %s68, 1
    %p72 = scmp.eq.s32.totalorder %s13, 1
    %p73 = scmp.ne.s32.totalorder %s68, %s70
    %p74 = scmp.eq.s32.totalorder %s13, 0
    %p75 = por %p73, %p74
    %p76 = scmp.ne.s32.totalorder %s68, %s70
    %p77 = scmp.eq.s32.totalorder %s18, 1
    %p78 = por %p76, %p77
    %p79 = scmp.ne.s32.totalorder %s70, %s71
    %p80 = scmp.eq.s32.totalorder %s18, 0
    %p81 = por %p79, %p80
    %p82 = scmp.ne.s32.totalorder %s70, %s71
    %p83 = scmp.eq.s32.totalorder %s19, 1
    %p84 = por %p82, %p83
    %p86 = scmp.ne.s32.totalorder %s71, %s85
    %p87 = scmp.eq.s32.totalorder %s19, 0
    %p88 = por %p86, %p87
    %s90 = sadd.s32 %s89, 1
    %p93 = scmp.eq.s32.totalorder %s13, 1
    %p94 = scmp.ne.s32.totalorder %s89, %s91
    %p95 = scmp.eq.s32.totalorder %s13, 0
    %p96 = por %p94, %p95
    %p97 = scmp.ne.s32.totalorder %s89, %s91
    %p98 = scmp.eq.s32.totalorder %s18, 1
    %p99 = por %p97, %p98
    %p100 = scmp.ne.s32.totalorder %s91, %s92
    %p101 = scmp.eq.s32.totalorder %s18, 0
    %p102 = por %p100, %p101
    %p103 = scmp.ne.s32.totalorder %s91, %s92
    %p104 = scmp.eq.s32.totalorder %s19, 1
    %p105 = por %p103, %p104
    %p107 = scmp.ne.s32.totalorder %s92, %s106
    %p108 = scmp.eq.s32.totalorder %s19, 0
    %p109 = por %p107, %p108
    %s111 = sadd.s32 %s110, 1
    %p114 = scmp.eq.s32.totalorder %s13, 1
    %p115 = scmp.ne.s32.totalorder %s110, %s112
    %p116 = scmp.eq.s32.totalorder %s13, 0
    %p117 = por %p115, %p116
    %p118 = scmp.ne.s32.totalorder %s110, %s112
    %p119 = scmp.eq.s32.totalorder %s18, 1
    %p120 = por %p118, %p119
    %p121 = scmp.ne.s32.totalorder %s112, %s113
    %p122 = scmp.eq.s32.totalorder %s18, 0
    %p123 = por %p121, %p122
    %p124 = scmp.ne.s32.totalorder %s112, %s113
    %p125 = scmp.eq.s32.totalorder %s19, 1
    %p126 = por %p124, %p125
    %p128 = scmp.ne.s32.totalorder %s113, %s127
    %p129 = scmp.eq.s32.totalorder %s19, 0
    %p130 = por %p128, %p129
    %s132 = sadd.s32 %s131, 1
    %p135 = scmp.eq.s32.totalorder %s13, 1
    %p136 = scmp.ne.s32.totalorder %s131, %s133
    %p137 = scmp.eq.s32.totalorder %s13, 0
    %p138 = por %p136, %p137
    %p139 = scmp.ne.s32.totalorder %s131, %s133
    %p140 = scmp.eq.s32.totalorder %s18, 1
    %p141 = por %p139, %p140
    %p142 = scmp.ne.s32.totalorder %s133, %s134
    %p143 = scmp.eq.s32.totalorder %s18, 0
    %p144 = por %p142, %p143
    %p145 = scmp.ne.s32.totalorder %s133, %s134
    %p146 = scmp.eq.s32.totalorder %s19, 1
    %p147 = por %p145, %p146
    %p149 = scmp.ne.s32.totalorder %s134, %s148
    %p150 = scmp.eq.s32.totalorder %s19, 0
    %p151 = por %p149, %p150
    %s153 = sadd.s32 %s152, 1
    %p156 = scmp.eq.s32.totalorder %s13, 1
    %p157 = scmp.ne.s32.totalorder %s152, %s154
    %p158 = scmp.eq.s32.totalorder %s13, 0
    %p159 = por %p157, %p158
    %p160 = scmp.ne.s32.totalorder %s152, %s154
    %p161 = scmp.eq.s32.totalorder %s18, 1
    %p162 = por %p160, %p161
    %p163 = scmp.ne.s32.totalorder %s154, %s155
    %p164 = scmp.eq.s32.totalorder %s18, 0
    %p165 = por %p163, %p164
    %p166 = scmp.ne.s32.totalorder %s154, %s155
    %p167 = scmp.eq.s32.totalorder %s19, 1
    %p168 = por %p166, %p167
    %p170 = scmp.ne.s32.totalorder %s155, %s169
    %p171 = scmp.eq.s32.totalorder %s19, 0
    %p172 = por %p170, %p171
    %s173 = ssub.s32 %s13, %s20
    %p174 = scmp.eq.s32.totalorder %s173, 0
    %s176 = sadd.s32 %s175, 1
    %s177 = scalar_select %p174, %s175, %s176
    %p180 = pneg %p174
    %p181 = scmp.eq.s32.totalorder %s13, 1
    %p182 = por %p180, %p181
    %p183 = scmp.ne.s32.totalorder %s175, %s178
    %p184 = scmp.eq.s32.totalorder %s13, 0
    %p185 = por %p183, %p184
    %p186 = scmp.ne.s32.totalorder %s175, %s178
    %p187 = scmp.eq.s32.totalorder %s18, 1
    %p188 = por %p186, %p187
    %p189 = scmp.ne.s32.totalorder %s178, %s179
    %p190 = scmp.eq.s32.totalorder %s18, 0
    %p191 = por %p189, %p190
    %p192 = scmp.ne.s32.totalorder %s178, %s179
    %p193 = scmp.eq.s32.totalorder %s19, 1
    %p194 = por %p192, %p193
    %p196 = scmp.ne.s32.totalorder %s179, %s195
    %p197 = scmp.eq.s32.totalorder %s19, 0
    %p198 = por %p196, %p197
    %p199 = scmp.le.s32.totalorder 1, %s13
    %p200 = scmp.lt.s32.totalorder %s13, 3
    %p201 = pnand %p199, %p200
    %p202 = pneg %p201
    // Predicated region
    $region9: #{adaptive_feature_selection.1} parent=5 // pred_check
      _
    $region10: #{adaptive_feature_selection.1} parent=5 // pred_check_branch
      %204 = sbr.rel (%p201) target = $region12
    $region11: #{adaptive_feature_selection.1} parent=5 // pred_region
      %s205 = ssub.s32 %s13, 1
      // Predicated region
      $region13: #{adaptive_feature_selection.1} parent=11 // pred_check
        %p206 = pneg %p60
      $region14: #{adaptive_feature_selection.1} parent=11 // pred_check_branch
        %208 = sbr.rel (%p206) target = $region16
      $region15: #{adaptive_feature_selection.1} parent=11 // pred_region
        _
      $region16: #{adaptive_feature_selection.1} parent=11 // pred_fallthru
        _
      // Predicated region
      $region17: #{adaptive_feature_selection.1} parent=11 // pred_check
        %p209 = pneg %p81
      $region18: #{adaptive_feature_selection.1} parent=11 // pred_check_branch
        %211 = sbr.rel (%p209) target = $region20
      $region19: #{adaptive_feature_selection.1} parent=11 // pred_region
        _
      $region20: #{adaptive_feature_selection.1} parent=11 // pred_fallthru
        _
      // Predicated region
      $region21: #{adaptive_feature_selection.1} parent=11 // pred_check
        %p212 = pneg %p102
      $region22: #{adaptive_feature_selection.1} parent=11 // pred_check_branch
        %214 = sbr.rel (%p212) target = $region24
      $region23: #{adaptive_feature_selection.1} parent=11 // pred_region
        _
      $region24: #{adaptive_feature_selection.1} parent=11 // pred_fallthru
        _
      // Predicated region
      $region25: #{adaptive_feature_selection.1} parent=11 // pred_check
        %p215 = pneg %p123
      $region26: #{adaptive_feature_selection.1} parent=11 // pred_check_branch
        %217 = sbr.rel (%p215) target = $region28
      $region27: #{adaptive_feature_selection.1} parent=11 // pred_region
        _
      $region28: #{adaptive_feature_selection.1} parent=11 // pred_fallthru
        _
      // Predicated region
      $region29: #{adaptive_feature_selection.1} parent=11 // pred_check
        %p218 = pneg %p144
      $region30: #{adaptive_feature_selection.1} parent=11 // pred_check_branch
        %220 = sbr.rel (%p218) target = $region32
      $region31: #{adaptive_feature_selection.1} parent=11 // pred_region
        _
      $region32: #{adaptive_feature_selection.1} parent=11 // pred_fallthru
        _
      // Predicated region
      $region33: #{adaptive_feature_selection.1} parent=11 // pred_check
        %p221 = pneg %p165
      $region34: #{adaptive_feature_selection.1} parent=11 // pred_check_branch
        %223 = sbr.rel (%p221) target = $region36
      $region35: #{adaptive_feature_selection.1} parent=11 // pred_region
        _
      $region36: #{adaptive_feature_selection.1} parent=11 // pred_fallthru
        _
    $region12: #{adaptive_feature_selection.1} parent=5 // pred_fallthru
      _
    %p224 = scmp.lt.s32.totalorder %s13, 2
    // Predicated region
    $region37: #{adaptive_feature_selection.1} parent=5 // pred_check
      %p225 = pneg %p224
    $region38: #{adaptive_feature_selection.1} parent=5 // pred_check_branch
      %227 = sbr.rel (%p225) target = $region40
    $region39: #{adaptive_feature_selection.1} parent=5 // pred_region
      // Predicated region
      $region41: #{adaptive_feature_selection.1} parent=39 // pred_check
        %p228 = pneg %p33
      $region42: #{adaptive_feature_selection.1} parent=39 // pred_check_branch
        %230 = sbr.rel (%p228) target = $region44
      $region43: #{adaptive_feature_selection.1} parent=39 // pred_region
        %s231 = smul.u32 4, %s13
        %p232 = scmp.lt.s32.totalorder %s231, 7
        %s233 = scalar_select %p232, %s231, 7
        %s234 = smul.addr %s233, 6
        %s235 = smul.addr %s234, 8
        %s236 = scalar_lea.vmem %s0, %s235
        %s237 = smul.u32 4, %s13
      $region44: #{adaptive_feature_selection.1} parent=39 // pred_fallthru
        _
    $region40: #{adaptive_feature_selection.1} parent=5 // pred_fallthru
      _
    %p238 = scmp.le.s32.totalorder 1, %s13
    %p239 = scmp.lt.s32.totalorder %s13, 3
    %p240 = pnand %p238, %p239
    %p241 = pneg %p240
    // Predicated region
    $region45: #{adaptive_feature_selection.1} parent=5 // pred_check
      _
    $region46: #{adaptive_feature_selection.1} parent=5 // pred_check_branch
      %243 = sbr.rel (%p240) target = $region48
    $region47: #{adaptive_feature_selection.1} parent=5 // pred_region
      %s244 = ssub.s32 %s13, 1
      %s245 = smul.u32 4, %s18
      %p246 = scmp.lt.s32.totalorder %s245, 7
      %s247 = scalar_select %p246, %s245, 7
      %s248 = smul.addr %s247, 6
      %s249 = smul.addr %s248, 8
      %s250 = scalar_lea.vmem %s0, %s249
      %p251 = pneg %p39
      %p252 = pneg %p36
      %p253 = pneg %p60
      %p254 = pneg %p57
      %p255 = pneg %p81
      %p256 = pneg %p78
      %p257 = pneg %p102
      %p258 = pneg %p99
      %p259 = pneg %p123
      %p260 = pneg %p120
      %p261 = pneg %p144
      %p262 = pneg %p141
      %p263 = pneg %p165
      %p264 = pneg %p162
      %p265 = pneg %p191
      %p266 = pneg %p188
      %s267 = smul.u32 8, %s18
      %p268 = scmp.lt.s32.totalorder %s267, 15
      %s269 = scalar_select %p268, %s267, 15
      %s270 = smul.addr %s269, 4
      %s271 = scalar_lea.vmem %s7, %s270
      %s272 = smul.u32 4, %s18
      %p273 = scmp.lt.s32.totalorder %s272, 7
      %s274 = scalar_select %p273, %s272, 7
      %s275 = smul.addr %s274, 6
      %s276 = smul.addr %s275, 8
      %s277 = scalar_lea.vmem %s0, %s276
      %s278 = smul.u32 4, %s18
      %s279 = smul.u32 8, %s18
      %p280 = scmp.lt.s32.totalorder %s279, 15
      %s281 = scalar_select %p280, %s279, 15
      %s282 = smul.addr %s281, 4
      %s283 = scalar_lea.vmem %s7, %s282
      %s284 = smul.u32 8, %s18
      %v285 = vlaneseq
      %v286 = vand.u32 %v285, 127
      %v287 = vadd.s32 %v286, 128
      %vm288 = vcmp.lt.s32.totalorder %v286, 0
      %v289 = vsub.s32 0, %v286
      %v290 = vsel %vm288, %v289, %v286
      %v291 = vshrl.u32 %v290, 4
      %v292 = vand.u32 %v290, 15
      %v293 = vsub.s32 0, %v292
      %v294 = vsel %vm288, %v293, %v292
      %vm295 = vcmp.lt.s32.totalorder %v287, 0
      %v296 = vsub.s32 0, %v287
      %v297 = vsel %vm295, %v296, %v287
      %v298 = vshrl.u32 %v297, 4
      %v299 = vand.u32 %v297, 15
      %v300 = vsub.s32 0, %v299
      %v301 = vsel %vm295, %v300, %v299
      %vm302 = vcmp.ne.s32.totalorder %v294, 0
      %vm303 = vcmp.ne.s32.totalorder %v301, 0
      %vm304 = vcmp.lt.s32.totalorder %v294, 0
      %vm305 = vcmp.lt.s32.totalorder %v301, 0
      %vm306 = vmand %vm304, %vm302
      %vm307 = vmand %vm305, %vm303
      %v308 = vadd.s32 %v294, 16
      %v309 = vadd.s32 %v301, 16
      %v310 = vsel %vm306, %v308, %v294
      %v311 = vsel %vm307, %v309, %v301
      %vm312 = vcmp.ge.s32.totalorder %v310, 1
      %vm313 = vcmp.ge.s32.totalorder %v311, 1
      %vm314 = vcmp.le.s32.totalorder %v310, 14
      %vm315 = vcmp.le.s32.totalorder %v311, 14
      %v316 = vld [vmem:[%s277] sm:$0xff]
      %v317 = vld [vmem:[%s277 + $0x8] sm:$0xff]
      %v318 = vld [vmem:[%s277 + $0x10] sm:$0xff]
      %v319 = vld [vmem:[%s277 + $0x18] sm:$0xf]
      %v320 = vld [vmem:[%s277 + $0x20] sm:$0xf]
      %v321 = vld [vmem:[%s277 + $0x28] sm:$0xf]
      %v322 = vsel %vm312, 1, 0
      %v323 = vsel %vm313, 1, 0
      %vm324 = vcmp.eq.s32.totalorder %v322, 1
      %vm325 = vcmp.eq.s32.totalorder %v323, 1
      %v326 = vsel %vm324, %v316, 0.0
      %v327 = vsel %vm325, %v317, 0.0
      %v328 = vsel %vm324, %v319, 0.0
      %v329 = vsel %vm325, %v320, 0.0
      %330 = vst [vmem:[#allocation2] sm:$0xff] %v326
      %331 = vst [vmem:[#allocation2 + $0x8] sm:$0xff] %v327
      %332 = vst [vmem:[#allocation2 + $0x40] sm:$0xf] %v328
      %333 = vst [vmem:[#allocation2 + $0x48] sm:$0xf] %v329
      %vm340 = vcmask 1043456
      %v341 = vrot.slane %v316, 4
      %v342 = vrot.slane %v317, 4
      %v343 = vrot.slane %v318, 4
      %v344 = vrot.slane %v319, 4
      %v345 = vsel %vm340, %v341, %v344
      %v346 = vrot.slane %v320, 4
      %v347 = vsel %vm340, %v342, %v346
      %v348 = vrot.slane %v321, 4
      %v349 = vsel %vm340, %v343, %v348
      %350 = vrot.lane.b32.xlu0 %v341, 127
      %v351 = vpop.permute.xlu0 %350
      %352 = vrot.lane.b32.xlu0 %v342, 127
      %v353 = vpop.permute.xlu0 %352
      %354 = vrot.lane.b32.xlu0 %v343, 127
      %v355 = vpop.permute.xlu0 %354
      %356 = vrot.lane.b32.xlu0 %v345, 127
      %v357 = vpop.permute.xlu0 %356
      %358 = vrot.lane.b32.xlu0 %v347, 127
      %v359 = vpop.permute.xlu0 %358
      %360 = vrot.lane.b32.xlu0 %v349, 127
      %v361 = vpop.permute.xlu0 %360
      %vm362 = vcmask 1039360
      %v363 = vsel %vm362, %v351, %v353
      %v364 = vsel %vm362, %v353, %v355
      %v365 = vsel %vm362, %v357, %v359
      %v366 = vsel %vm362, %v359, %v361
      %371 = vst [vmem:[#allocation2 + $0x40] sm:$0xf0] %v363
      %372 = vst [vmem:[#allocation2 + $0x48] sm:$0xf0] %v364
      %373 = vst [vmem:[#allocation2 + $0x80] sm:$0xff] %v365
      %374 = vst [vmem:[#allocation2 + $0x88] sm:$0xff] %v366
      %v375 = vsel %vm314, 1, 0
      %v376 = vsel %vm315, 1, 0
      %vm377 = vcmp.eq.s32.totalorder %v375, 1
      %vm378 = vcmp.eq.s32.totalorder %v376, 1
      %379 = vrot.lane.b32.xlu0 %v316, 126
      %v380 = vpop.permute.xlu0 %379
      %381 = vrot.lane.b32.xlu0 %v317, 126
      %v382 = vpop.permute.xlu0 %381
      %383 = vrot.lane.b32.xlu0 %v318, 126
      %v384 = vpop.permute.xlu0 %383
      %385 = vrot.lane.b32.xlu0 %v319, 126
      %v386 = vpop.permute.xlu0 %385
      %387 = vrot.lane.b32.xlu0 %v320, 126
      %v388 = vpop.permute.xlu0 %387
      %389 = vrot.lane.b32.xlu0 %v321, 126
      %v390 = vpop.permute.xlu0 %389
      %vm391 = vcmask 1031168
      %v392 = vsel %vm391, %v380, %v382
      %v393 = vsel %vm391, %v382, %v384
      %v394 = vsel %vm391, %v386, %v388
      %v395 = vsel %vm391, %v388, %v390
      %v400 = vsel %vm377, %v392, 0.0
      %v401 = vsel %vm378, %v393, 0.0
      %v402 = vsel %vm377, %v394, 0.0
      %v403 = vsel %vm378, %v395, 0.0
      %404 = vst [vmem:[#allocation2 + $0xc0] sm:$0xff] %v400
      %405 = vst [vmem:[#allocation2 + $0xc8] sm:$0xff] %v401
      %406 = vst [vmem:[#allocation2 + $0x100] sm:$0xf] %v402
      %407 = vst [vmem:[#allocation2 + $0x108] sm:$0xf] %v403
      %408 = vrot.lane.b32.xlu0 %v316, 112
      %v409 = vpop.permute.xlu0 %408
      %410 = vrot.lane.b32.xlu0 %v317, 112
      %v411 = vpop.permute.xlu0 %410
      %412 = vrot.lane.b32.xlu0 %v318, 112
      %v413 = vpop.permute.xlu0 %412
      %414 = vrot.lane.b32.xlu0 %v319, 112
      %v415 = vpop.permute.xlu0 %414
      %416 = vrot.lane.b32.xlu0 %v320, 112
      %v417 = vpop.permute.xlu0 %416
      %418 = vrot.lane.b32.xlu0 %v321, 112
      %v419 = vpop.permute.xlu0 %418
      %vm420 = vcmask 916480
      %v421 = vsel %vm420, %v409, %v411
      %v422 = vsel %vm420, %v411, %v413
      %v423 = vsel %vm420, %v415, %v417
      %v424 = vsel %vm420, %v417, %v419
      %v429 = vsel %vm324, %v421, 0.0
      %v430 = vsel %vm325, %v422, 0.0
      %v431 = vsel %vm324, %v423, 0.0
      %v432 = vsel %vm325, %v424, 0.0
      %v437 = vrot.slane %v429, 4
      %v438 = vrot.slane %v430, 4
      %v439 = vrot.slane %v431, 4
      %v440 = vsel %vm340, %v437, %v439
      %v441 = vrot.slane %v432, 4
      %v442 = vsel %vm340, %v438, %v441
      %447 = vst [vmem:[#allocation2 + $0x100] sm:$0xf0] %v437
      %448 = vst [vmem:[#allocation2 + $0x108] sm:$0xf0] %v438
      %449 = vst [vmem:[#allocation2 + $0x140] sm:$0xff] %v440
      %450 = vst [vmem:[#allocation2 + $0x148] sm:$0xff] %v442
      %451 = vrot.lane.b32.xlu0 %v316, 111
      %v452 = vpop.permute.xlu0 %451
      %453 = vrot.lane.b32.xlu0 %v317, 111
      %v454 = vpop.permute.xlu0 %453
      %455 = vrot.lane.b32.xlu0 %v318, 111
      %v456 = vpop.permute.xlu0 %455
      %457 = vrot.lane.b32.xlu0 %v319, 111
      %v458 = vpop.permute.xlu0 %457
      %459 = vrot.lane.b32.xlu0 %v320, 111
      %v460 = vpop.permute.xlu0 %459
      %461 = vrot.lane.b32.xlu0 %v321, 111
      %v462 = vpop.permute.xlu0 %461
      %vm463 = vcmask 908288
      %v464 = vsel %vm463, %v452, %v454
      %v465 = vsel %vm463, %v454, %v456
      %v466 = vsel %vm463, %v458, %v460
      %v467 = vsel %vm463, %v460, %v462
      %472 = vst [vmem:[#allocation2 + $0x180] sm:$0xff] %v464
      %473 = vst [vmem:[#allocation2 + $0x188] sm:$0xff] %v465
      %474 = vst [vmem:[#allocation2 + $0x1c0] sm:$0xf] %v466
      %475 = vst [vmem:[#allocation2 + $0x1c8] sm:$0xf] %v467
      %476 = vrot.lane.b32.xlu0 %v316, 110
      %v477 = vpop.permute.xlu0 %476
      %478 = vrot.lane.b32.xlu0 %v317, 110
      %v479 = vpop.permute.xlu0 %478
      %480 = vrot.lane.b32.xlu0 %v318, 110
      %v481 = vpop.permute.xlu0 %480
      %482 = vrot.lane.b32.xlu0 %v319, 110
      %v483 = vpop.permute.xlu0 %482
      %484 = vrot.lane.b32.xlu0 %v320, 110
      %v485 = vpop.permute.xlu0 %484
      %486 = vrot.lane.b32.xlu0 %v321, 110
      %v487 = vpop.permute.xlu0 %486
      %vm488 = vcmask 900096
      %v489 = vsel %vm488, %v477, %v479
      %v490 = vsel %vm488, %v479, %v481
      %v491 = vsel %vm488, %v483, %v485
      %v492 = vsel %vm488, %v485, %v487
      %v497 = vsel %vm377, %v489, 0.0
      %v498 = vsel %vm378, %v490, 0.0
      %v499 = vsel %vm377, %v491, 0.0
      %v500 = vsel %vm378, %v492, 0.0
      %v505 = vrot.slane %v497, 4
      %v506 = vrot.slane %v498, 4
      %v507 = vrot.slane %v499, 4
      %v508 = vsel %vm340, %v505, %v507
      %v509 = vrot.slane %v500, 4
      %v510 = vsel %vm340, %v506, %v509
      %515 = vst [vmem:[#allocation2 + $0x1c0] sm:$0xf0] %v505
      %516 = vst [vmem:[#allocation2 + $0x1c8] sm:$0xf0] %v506
      %517 = vst [vmem:[#allocation2 + $0x200] sm:$0xff] %v508
      %518 = vst [vmem:[#allocation2 + $0x208] sm:$0xff] %v510
      %519 = vrot.lane.b32.xlu0 %v316, 96
      %v520 = vpop.permute.xlu0 %519
      %521 = vrot.lane.b32.xlu0 %v317, 96
      %v522 = vpop.permute.xlu0 %521
      %523 = vrot.lane.b32.xlu0 %v318, 96
      %v524 = vpop.permute.xlu0 %523
      %525 = vrot.lane.b32.xlu0 %v319, 96
      %v526 = vpop.permute.xlu0 %525
      %527 = vrot.lane.b32.xlu0 %v320, 96
      %v528 = vpop.permute.xlu0 %527
      %529 = vrot.lane.b32.xlu0 %v321, 96
      %v530 = vpop.permute.xlu0 %529
      %vm531 = vcmask 785408
      %v532 = vsel %vm531, %v520, %v522
      %v533 = vsel %vm531, %v522, %v524
      %v534 = vsel %vm531, %v526, %v528
      %v535 = vsel %vm531, %v528, %v530
      %v540 = vsel %vm324, %v532, 0.0
      %v541 = vsel %vm325, %v533, 0.0
      %v542 = vsel %vm324, %v534, 0.0
      %v543 = vsel %vm325, %v535, 0.0
      %544 = vst [vmem:[#allocation2 + $0x240] sm:$0xff] %v540
      %545 = vst [vmem:[#allocation2 + $0x248] sm:$0xff] %v541
      %546 = vst [vmem:[#allocation2 + $0x280] sm:$0xf] %v542
      %547 = vst [vmem:[#allocation2 + $0x288] sm:$0xf] %v543
      %548 = vrot.lane.b32.xlu0 %v341, 95
      %v549 = vpop.permute.xlu0 %548
      %550 = vrot.lane.b32.xlu0 %v342, 95
      %v551 = vpop.permute.xlu0 %550
      %552 = vrot.lane.b32.xlu0 %v343, 95
      %v553 = vpop.permute.xlu0 %552
      %554 = vrot.lane.b32.xlu0 %v345, 95
      %v555 = vpop.permute.xlu0 %554
      %556 = vrot.lane.b32.xlu0 %v347, 95
      %v557 = vpop.permute.xlu0 %556
      %558 = vrot.lane.b32.xlu0 %v349, 95
      %v559 = vpop.permute.xlu0 %558
      %vm560 = vcmask 777216
      %v561 = vsel %vm560, %v549, %v551
      %v562 = vsel %vm560, %v551, %v553
      %v563 = vsel %vm560, %v555, %v557
      %v564 = vsel %vm560, %v557, %v559
      %569 = vst [vmem:[#allocation2 + $0x280] sm:$0xf0] %v561
      %570 = vst [vmem:[#allocation2 + $0x288] sm:$0xf0] %v562
      %571 = vst [vmem:[#allocation2 + $0x2c0] sm:$0xff] %v563
      %572 = vst [vmem:[#allocation2 + $0x2c8] sm:$0xff] %v564
      %573 = vrot.lane.b32.xlu0 %v316, 94
      %v574 = vpop.permute.xlu0 %573
      %575 = vrot.lane.b32.xlu0 %v317, 94
      %v576 = vpop.permute.xlu0 %575
      %577 = vrot.lane.b32.xlu0 %v318, 94
      %v578 = vpop.permute.xlu0 %577
      %579 = vrot.lane.b32.xlu0 %v319, 94
      %v580 = vpop.permute.xlu0 %579
      %581 = vrot.lane.b32.xlu0 %v320, 94
      %v582 = vpop.permute.xlu0 %581
      %583 = vrot.lane.b32.xlu0 %v321, 94
      %v584 = vpop.permute.xlu0 %583
      %vm585 = vcmask 769024
      %v586 = vsel %vm585, %v574, %v576
      %v587 = vsel %vm585, %v576, %v578
      %v588 = vsel %vm585, %v580, %v582
      %v589 = vsel %vm585, %v582, %v584
      %v594 = vsel %vm377, %v586, 0.0
      %v595 = vsel %vm378, %v587, 0.0
      %v596 = vsel %vm377, %v588, 0.0
      %v597 = vsel %vm378, %v589, 0.0
      %598 = vst [vmem:[#allocation2 + $0x300] sm:$0xff] %v594
      %599 = vst [vmem:[#allocation2 + $0x308] sm:$0xff] %v595
      %600 = vst [vmem:[#allocation2 + $0x340] sm:$0xf] %v596
      %601 = vst [vmem:[#allocation2 + $0x348] sm:$0xf] %v597
      %s602 = scalar_lea.vmem %s277, 48
      %v603 = vld [vmem:[%s602] sm:$0xff]
      %v604 = vld [vmem:[%s602 + $0x8] sm:$0xff]
      %v605 = vld [vmem:[%s602 + $0x10] sm:$0xff]
      %v606 = vld [vmem:[%s602 + $0x18] sm:$0xf]
      %v607 = vld [vmem:[%s602 + $0x20] sm:$0xf]
      %v608 = vld [vmem:[%s602 + $0x28] sm:$0xf]
      %v609 = vsel %vm324, %v603, 0.0
      %v610 = vsel %vm325, %v604, 0.0
      %v611 = vsel %vm324, %v606, 0.0
      %v612 = vsel %vm325, %v607, 0.0
      %613 = vst [vmem:[#allocation2 + $0x10] sm:$0xff] %v609
      %614 = vst [vmem:[#allocation2 + $0x18] sm:$0xff] %v610
      %615 = vst [vmem:[#allocation2 + $0x50] sm:$0xf] %v611
      %616 = vst [vmem:[#allocation2 + $0x58] sm:$0xf] %v612
      %v623 = vrot.slane %v603, 4
      %v624 = vrot.slane %v604, 4
      %v625 = vrot.slane %v605, 4
      %v626 = vrot.slane %v606, 4
      %v627 = vsel %vm340, %v623, %v626
      %v628 = vrot.slane %v607, 4
      %v629 = vsel %vm340, %v624, %v628
      %v630 = vrot.slane %v608, 4
      %v631 = vsel %vm340, %v625, %v630
      %632 = vrot.lane.b32.xlu0 %v623, 127
      %v633 = vpop.permute.xlu0 %632
      %634 = vrot.lane.b32.xlu0 %v624, 127
      %v635 = vpop.permute.xlu0 %634
      %636 = vrot.lane.b32.xlu0 %v625, 127
      %v637 = vpop.permute.xlu0 %636
      %638 = vrot.lane.b32.xlu0 %v627, 127
      %v639 = vpop.permute.xlu0 %638
      %640 = vrot.lane.b32.xlu0 %v629, 127
      %v641 = vpop.permute.xlu0 %640
      %642 = vrot.lane.b32.xlu0 %v631, 127
      %v643 = vpop.permute.xlu0 %642
      %v644 = vsel %vm362, %v633, %v635
      %v645 = vsel %vm362, %v635, %v637
      %v646 = vsel %vm362, %v639, %v641
      %v647 = vsel %vm362, %v641, %v643
      %652 = vst [vmem:[#allocation2 + $0x50] sm:$0xf0] %v644
      %653 = vst [vmem:[#allocation2 + $0x58] sm:$0xf0] %v645
      %654 = vst [vmem:[#allocation2 + $0x90] sm:$0xff] %v646
      %655 = vst [vmem:[#allocation2 + $0x98] sm:$0xff] %v647
      %656 = vrot.lane.b32.xlu0 %v603, 126
      %v657 = vpop.permute.xlu0 %656
      %658 = vrot.lane.b32.xlu0 %v604, 126
      %v659 = vpop.permute.xlu0 %658
      %660 = vrot.lane.b32.xlu0 %v605, 126
      %v661 = vpop.permute.xlu0 %660
      %662 = vrot.lane.b32.xlu0 %v606, 126
      %v663 = vpop.permute.xlu0 %662
      %664 = vrot.lane.b32.xlu0 %v607, 126
      %v665 = vpop.permute.xlu0 %664
      %666 = vrot.lane.b32.xlu0 %v608, 126
      %v667 = vpop.permute.xlu0 %666
      %v668 = vsel %vm391, %v657, %v659
      %v669 = vsel %vm391, %v659, %v661
      %v670 = vsel %vm391, %v663, %v665
      %v671 = vsel %vm391, %v665, %v667
      %v676 = vsel %vm377, %v668, 0.0
      %v677 = vsel %vm378, %v669, 0.0
      %v678 = vsel %vm377, %v670, 0.0
      %v679 = vsel %vm378, %v671, 0.0
      %680 = vst [vmem:[#allocation2 + $0xd0] sm:$0xff] %v676
      %681 = vst [vmem:[#allocation2 + $0xd8] sm:$0xff] %v677
      %682 = vst [vmem:[#allocation2 + $0x110] sm:$0xf] %v678
      %683 = vst [vmem:[#allocation2 + $0x118] sm:$0xf] %v679
      %684 = vrot.lane.b32.xlu0 %v603, 112
      %v685 = vpop.permute.xlu0 %684
      %686 = vrot.lane.b32.xlu0 %v604, 112
      %v687 = vpop.permute.xlu0 %686
      %688 = vrot.lane.b32.xlu0 %v605, 112
      %v689 = vpop.permute.xlu0 %688
      %690 = vrot.lane.b32.xlu0 %v606, 112
      %v691 = vpop.permute.xlu0 %690
      %692 = vrot.lane.b32.xlu0 %v607, 112
      %v693 = vpop.permute.xlu0 %692
      %694 = vrot.lane.b32.xlu0 %v608, 112
      %v695 = vpop.permute.xlu0 %694
      %v696 = vsel %vm420, %v685, %v687
      %v697 = vsel %vm420, %v687, %v689
      %v698 = vsel %vm420, %v691, %v693
      %v699 = vsel %vm420, %v693, %v695
      %v704 = vsel %vm324, %v696, 0.0
      %v705 = vsel %vm325, %v697, 0.0
      %v706 = vsel %vm324, %v698, 0.0
      %v707 = vsel %vm325, %v699, 0.0
      %v712 = vrot.slane %v704, 4
      %v713 = vrot.slane %v705, 4
      %v714 = vrot.slane %v706, 4
      %v715 = vsel %vm340, %v712, %v714
      %v716 = vrot.slane %v707, 4
      %v717 = vsel %vm340, %v713, %v716
      %722 = vst [vmem:[#allocation2 + $0x110] sm:$0xf0] %v712
      %723 = vst [vmem:[#allocation2 + $0x118] sm:$0xf0] %v713
      %724 = vst [vmem:[#allocation2 + $0x150] sm:$0xff] %v715
      %725 = vst [vmem:[#allocation2 + $0x158] sm:$0xff] %v717
      %726 = vrot.lane.b32.xlu0 %v603, 111
      %v727 = vpop.permute.xlu0 %726
      %728 = vrot.lane.b32.xlu0 %v604, 111
      %v729 = vpop.permute.xlu0 %728
      %730 = vrot.lane.b32.xlu0 %v605, 111
      %v731 = vpop.permute.xlu0 %730
      %732 = vrot.lane.b32.xlu0 %v606, 111
      %v733 = vpop.permute.xlu0 %732
      %734 = vrot.lane.b32.xlu0 %v607, 111
      %v735 = vpop.permute.xlu0 %734
      %736 = vrot.lane.b32.xlu0 %v608, 111
      %v737 = vpop.permute.xlu0 %736
      %v738 = vsel %vm463, %v727, %v729
      %v739 = vsel %vm463, %v729, %v731
      %v740 = vsel %vm463, %v733, %v735
      %v741 = vsel %vm463, %v735, %v737
      %746 = vst [vmem:[#allocation2 + $0x190] sm:$0xff] %v738
      %747 = vst [vmem:[#allocation2 + $0x198] sm:$0xff] %v739
      %748 = vst [vmem:[#allocation2 + $0x1d0] sm:$0xf] %v740
      %749 = vst [vmem:[#allocation2 + $0x1d8] sm:$0xf] %v741
      %750 = vrot.lane.b32.xlu0 %v603, 110
      %v751 = vpop.permute.xlu0 %750
      %752 = vrot.lane.b32.xlu0 %v604, 110
      %v753 = vpop.permute.xlu0 %752
      %754 = vrot.lane.b32.xlu0 %v605, 110
      %v755 = vpop.permute.xlu0 %754
      %756 = vrot.lane.b32.xlu0 %v606, 110
      %v757 = vpop.permute.xlu0 %756
      %758 = vrot.lane.b32.xlu0 %v607, 110
      %v759 = vpop.permute.xlu0 %758
      %760 = vrot.lane.b32.xlu0 %v608, 110
      %v761 = vpop.permute.xlu0 %760
      %v762 = vsel %vm488, %v751, %v753
      %v763 = vsel %vm488, %v753, %v755
      %v764 = vsel %vm488, %v757, %v759
      %v765 = vsel %vm488, %v759, %v761
      %v770 = vsel %vm377, %v762, 0.0
      %v771 = vsel %vm378, %v763, 0.0
      %v772 = vsel %vm377, %v764, 0.0
      %v773 = vsel %vm378, %v765, 0.0
      %v778 = vrot.slane %v770, 4
      %v779 = vrot.slane %v771, 4
      %v780 = vrot.slane %v772, 4
      %v781 = vsel %vm340, %v778, %v780
      %v782 = vrot.slane %v773, 4
      %v783 = vsel %vm340, %v779, %v782
      %788 = vst [vmem:[#allocation2 + $0x1d0] sm:$0xf0] %v778
      %789 = vst [vmem:[#allocation2 + $0x1d8] sm:$0xf0] %v779
      %790 = vst [vmem:[#allocation2 + $0x210] sm:$0xff] %v781
      %791 = vst [vmem:[#allocation2 + $0x218] sm:$0xff] %v783
      %792 = vrot.lane.b32.xlu0 %v603, 96
      %v793 = vpop.permute.xlu0 %792
      %794 = vrot.lane.b32.xlu0 %v604, 96
      %v795 = vpop.permute.xlu0 %794
      %796 = vrot.lane.b32.xlu0 %v605, 96
      %v797 = vpop.permute.xlu0 %796
      %798 = vrot.lane.b32.xlu0 %v606, 96
      %v799 = vpop.permute.xlu0 %798
      %800 = vrot.lane.b32.xlu0 %v607, 96
      %v801 = vpop.permute.xlu0 %800
      %802 = vrot.lane.b32.xlu0 %v608, 96
      %v803 = vpop.permute.xlu0 %802
      %v804 = vsel %vm531, %v793, %v795
      %v805 = vsel %vm531, %v795, %v797
      %v806 = vsel %vm531, %v799, %v801
      %v807 = vsel %vm531, %v801, %v803
      %v812 = vsel %vm324, %v804, 0.0
      %v813 = vsel %vm325, %v805, 0.0
      %v814 = vsel %vm324, %v806, 0.0
      %v815 = vsel %vm325, %v807, 0.0
      %816 = vst [vmem:[#allocation2 + $0x250] sm:$0xff] %v812
      %817 = vst [vmem:[#allocation2 + $0x258] sm:$0xff] %v813
      %818 = vst [vmem:[#allocation2 + $0x290] sm:$0xf] %v814
      %819 = vst [vmem:[#allocation2 + $0x298] sm:$0xf] %v815
      %820 = vrot.lane.b32.xlu0 %v623, 95
      %v821 = vpop.permute.xlu0 %820
      %822 = vrot.lane.b32.xlu0 %v624, 95
      %v823 = vpop.permute.xlu0 %822
      %824 = vrot.lane.b32.xlu0 %v625, 95
      %v825 = vpop.permute.xlu0 %824
      %826 = vrot.lane.b32.xlu0 %v627, 95
      %v827 = vpop.permute.xlu0 %826
      %828 = vrot.lane.b32.xlu0 %v629, 95
      %v829 = vpop.permute.xlu0 %828
      %830 = vrot.lane.b32.xlu0 %v631, 95
      %v831 = vpop.permute.xlu0 %830
      %v832 = vsel %vm560, %v821, %v823
      %v833 = vsel %vm560, %v823, %v825
      %v834 = vsel %vm560, %v827, %v829
      %v835 = vsel %vm560, %v829, %v831
      %840 = vst [vmem:[#allocation2 + $0x290] sm:$0xf0] %v832
      %841 = vst [vmem:[#allocation2 + $0x298] sm:$0xf0] %v833
      %842 = vst [vmem:[#allocation2 + $0x2d0] sm:$0xff] %v834
      %843 = vst [vmem:[#allocation2 + $0x2d8] sm:$0xff] %v835
      %844 = vrot.lane.b32.xlu0 %v603, 94
      %v845 = vpop.permute.xlu0 %844
      %846 = vrot.lane.b32.xlu0 %v604, 94
      %v847 = vpop.permute.xlu0 %846
      %848 = vrot.lane.b32.xlu0 %v605, 94
      %v849 = vpop.permute.xlu0 %848
      %850 = vrot.lane.b32.xlu0 %v606, 94
      %v851 = vpop.permute.xlu0 %850
      %852 = vrot.lane.b32.xlu0 %v607, 94
      %v853 = vpop.permute.xlu0 %852
      %854 = vrot.lane.b32.xlu0 %v608, 94
      %v855 = vpop.permute.xlu0 %854
      %v856 = vsel %vm585, %v845, %v847
      %v857 = vsel %vm585, %v847, %v849
      %v858 = vsel %vm585, %v851, %v853
      %v859 = vsel %vm585, %v853, %v855
      %v864 = vsel %vm377, %v856, 0.0
      %v865 = vsel %vm378, %v857, 0.0
      %v866 = vsel %vm377, %v858, 0.0
      %v867 = vsel %vm378, %v859, 0.0
      %868 = vst [vmem:[#allocation2 + $0x310] sm:$0xff] %v864
      %869 = vst [vmem:[#allocation2 + $0x318] sm:$0xff] %v865
      %870 = vst [vmem:[#allocation2 + $0x350] sm:$0xf] %v866
      %871 = vst [vmem:[#allocation2 + $0x358] sm:$0xf] %v867
      %s872 = scalar_lea.vmem %s277, 96
      %v873 = vld [vmem:[%s872] sm:$0xff]
      %v874 = vld [vmem:[%s872 + $0x8] sm:$0xff]
      %v875 = vld [vmem:[%s872 + $0x10] sm:$0xff]
      %v876 = vld [vmem:[%s872 + $0x18] sm:$0xf]
      %v877 = vld [vmem:[%s872 + $0x20] sm:$0xf]
      %v878 = vld [vmem:[%s872 + $0x28] sm:$0xf]
      %v879 = vsel %vm324, %v873, 0.0
      %v880 = vsel %vm325, %v874, 0.0
      %v881 = vsel %vm324, %v876, 0.0
      %v882 = vsel %vm325, %v877, 0.0
      %883 = vst [vmem:[#allocation2 + $0x20] sm:$0xff] %v879
      %884 = vst [vmem:[#allocation2 + $0x28] sm:$0xff] %v880
      %885 = vst [vmem:[#allocation2 + $0x60] sm:$0xf] %v881
      %886 = vst [vmem:[#allocation2 + $0x68] sm:$0xf] %v882
      %v893 = vrot.slane %v873, 4
      %v894 = vrot.slane %v874, 4
      %v895 = vrot.slane %v875, 4
      %v896 = vrot.slane %v876, 4
      %v897 = vsel %vm340, %v893, %v896
      %v898 = vrot.slane %v877, 4
      %v899 = vsel %vm340, %v894, %v898
      %v900 = vrot.slane %v878, 4
      %v901 = vsel %vm340, %v895, %v900
      %902 = vrot.lane.b32.xlu0 %v893, 127
      %v903 = vpop.permute.xlu0 %902
      %904 = vrot.lane.b32.xlu0 %v894, 127
      %v905 = vpop.permute.xlu0 %904
      %906 = vrot.lane.b32.xlu0 %v895, 127
      %v907 = vpop.permute.xlu0 %906
      %908 = vrot.lane.b32.xlu0 %v897, 127
      %v909 = vpop.permute.xlu0 %908
      %910 = vrot.lane.b32.xlu0 %v899, 127
      %v911 = vpop.permute.xlu0 %910
      %912 = vrot.lane.b32.xlu0 %v901, 127
      %v913 = vpop.permute.xlu0 %912
      %v914 = vsel %vm362, %v903, %v905
      %v915 = vsel %vm362, %v905, %v907
      %v916 = vsel %vm362, %v909, %v911
      %v917 = vsel %vm362, %v911, %v913
      %922 = vst [vmem:[#allocation2 + $0x60] sm:$0xf0] %v914
      %923 = vst [vmem:[#allocation2 + $0x68] sm:$0xf0] %v915
      %924 = vst [vmem:[#allocation2 + $0xa0] sm:$0xff] %v916
      %925 = vst [vmem:[#allocation2 + $0xa8] sm:$0xff] %v917
      %926 = vrot.lane.b32.xlu0 %v873, 126
      %v927 = vpop.permute.xlu0 %926
      %928 = vrot.lane.b32.xlu0 %v874, 126
      %v929 = vpop.permute.xlu0 %928
      %930 = vrot.lane.b32.xlu0 %v875, 126
      %v931 = vpop.permute.xlu0 %930
      %932 = vrot.lane.b32.xlu0 %v876, 126
      %v933 = vpop.permute.xlu0 %932
      %934 = vrot.lane.b32.xlu0 %v877, 126
      %v935 = vpop.permute.xlu0 %934
      %936 = vrot.lane.b32.xlu0 %v878, 126
      %v937 = vpop.permute.xlu0 %936
      %v938 = vsel %vm391, %v927, %v929
      %v939 = vsel %vm391, %v929, %v931
      %v940 = vsel %vm391, %v933, %v935
      %v941 = vsel %vm391, %v935, %v937
      %v946 = vsel %vm377, %v938, 0.0
      %v947 = vsel %vm378, %v939, 0.0
      %v948 = vsel %vm377, %v940, 0.0
      %v949 = vsel %vm378, %v941, 0.0
      %950 = vst [vmem:[#allocation2 + $0xe0] sm:$0xff] %v946
      %951 = vst [vmem:[#allocation2 + $0xe8] sm:$0xff] %v947
      %952 = vst [vmem:[#allocation2 + $0x120] sm:$0xf] %v948
      %953 = vst [vmem:[#allocation2 + $0x128] sm:$0xf] %v949
      %954 = vrot.lane.b32.xlu0 %v873, 112
      %v955 = vpop.permute.xlu0 %954
      %956 = vrot.lane.b32.xlu0 %v874, 112
      %v957 = vpop.permute.xlu0 %956
      %958 = vrot.lane.b32.xlu0 %v875, 112
      %v959 = vpop.permute.xlu0 %958
      %960 = vrot.lane.b32.xlu0 %v876, 112
      %v961 = vpop.permute.xlu0 %960
      %962 = vrot.lane.b32.xlu0 %v877, 112
      %v963 = vpop.permute.xlu0 %962
      %964 = vrot.lane.b32.xlu0 %v878, 112
      %v965 = vpop.permute.xlu0 %964
      %v966 = vsel %vm420, %v955, %v957
      %v967 = vsel %vm420, %v957, %v959
      %v968 = vsel %vm420, %v961, %v963
      %v969 = vsel %vm420, %v963, %v965
      %v974 = vsel %vm324, %v966, 0.0
      %v975 = vsel %vm325, %v967, 0.0
      %v976 = vsel %vm324, %v968, 0.0
      %v977 = vsel %vm325, %v969, 0.0
      %v982 = vrot.slane %v974, 4
      %v983 = vrot.slane %v975, 4
      %v984 = vrot.slane %v976, 4
      %v985 = vsel %vm340, %v982, %v984
      %v986 = vrot.slane %v977, 4
      %v987 = vsel %vm340, %v983, %v986
      %992 = vst [vmem:[#allocation2 + $0x120] sm:$0xf0] %v982
      %993 = vst [vmem:[#allocation2 + $0x128] sm:$0xf0] %v983
      %994 = vst [vmem:[#allocation2 + $0x160] sm:$0xff] %v985
      %995 = vst [vmem:[#allocation2 + $0x168] sm:$0xff] %v987
      %996 = vrot.lane.b32.xlu0 %v873, 111
      %v997 = vpop.permute.xlu0 %996
      %998 = vrot.lane.b32.xlu0 %v874, 111
      %v999 = vpop.permute.xlu0 %998
      %1000 = vrot.lane.b32.xlu0 %v875, 111
      %v1001 = vpop.permute.xlu0 %1000
      %1002 = vrot.lane.b32.xlu0 %v876, 111
      %v1003 = vpop.permute.xlu0 %1002
      %1004 = vrot.lane.b32.xlu0 %v877, 111
      %v1005 = vpop.permute.xlu0 %1004
      %1006 = vrot.lane.b32.xlu0 %v878, 111
      %v1007 = vpop.permute.xlu0 %1006
      %v1008 = vsel %vm463, %v997, %v999
      %v1009 = vsel %vm463, %v999, %v1001
      %v1010 = vsel %vm463, %v1003, %v1005
      %v1011 = vsel %vm463, %v1005, %v1007
      %1016 = vst [vmem:[#allocation2 + $0x1a0] sm:$0xff] %v1008
      %1017 = vst [vmem:[#allocation2 + $0x1a8] sm:$0xff] %v1009
      %1018 = vst [vmem:[#allocation2 + $0x1e0] sm:$0xf] %v1010
      %1019 = vst [vmem:[#allocation2 + $0x1e8] sm:$0xf] %v1011
      %1020 = vrot.lane.b32.xlu0 %v873, 110
      %v1021 = vpop.permute.xlu0 %1020
      %1022 = vrot.lane.b32.xlu0 %v874, 110
      %v1023 = vpop.permute.xlu0 %1022
      %1024 = vrot.lane.b32.xlu0 %v875, 110
      %v1025 = vpop.permute.xlu0 %1024
      %1026 = vrot.lane.b32.xlu0 %v876, 110
      %v1027 = vpop.permute.xlu0 %1026
      %1028 = vrot.lane.b32.xlu0 %v877, 110
      %v1029 = vpop.permute.xlu0 %1028
      %1030 = vrot.lane.b32.xlu0 %v878, 110
      %v1031 = vpop.permute.xlu0 %1030
      %v1032 = vsel %vm488, %v1021, %v1023
      %v1033 = vsel %vm488, %v1023, %v1025
      %v1034 = vsel %vm488, %v1027, %v1029
      %v1035 = vsel %vm488, %v1029, %v1031
      %v1040 = vsel %vm377, %v1032, 0.0
      %v1041 = vsel %vm378, %v1033, 0.0
      %v1042 = vsel %vm377, %v1034, 0.0
      %v1043 = vsel %vm378, %v1035, 0.0
      %v1048 = vrot.slane %v1040, 4
      %v1049 = vrot.slane %v1041, 4
      %v1050 = vrot.slane %v1042, 4
      %v1051 = vsel %vm340, %v1048, %v1050
      %v1052 = vrot.slane %v1043, 4
      %v1053 = vsel %vm340, %v1049, %v1052
      %1058 = vst [vmem:[#allocation2 + $0x1e0] sm:$0xf0] %v1048
      %1059 = vst [vmem:[#allocation2 + $0x1e8] sm:$0xf0] %v1049
      %1060 = vst [vmem:[#allocation2 + $0x220] sm:$0xff] %v1051
      %1061 = vst [vmem:[#allocation2 + $0x228] sm:$0xff] %v1053
      %1062 = vrot.lane.b32.xlu0 %v873, 96
      %v1063 = vpop.permute.xlu0 %1062
      %1064 = vrot.lane.b32.xlu0 %v874, 96
      %v1065 = vpop.permute.xlu0 %1064
      %1066 = vrot.lane.b32.xlu0 %v875, 96
      %v1067 = vpop.permute.xlu0 %1066
      %1068 = vrot.lane.b32.xlu0 %v876, 96
      %v1069 = vpop.permute.xlu0 %1068
      %1070 = vrot.lane.b32.xlu0 %v877, 96
      %v1071 = vpop.permute.xlu0 %1070
      %1072 = vrot.lane.b32.xlu0 %v878, 96
      %v1073 = vpop.permute.xlu0 %1072
      %v1074 = vsel %vm531, %v1063, %v1065
      %v1075 = vsel %vm531, %v1065, %v1067
      %v1076 = vsel %vm531, %v1069, %v1071
      %v1077 = vsel %vm531, %v1071, %v1073
      %v1082 = vsel %vm324, %v1074, 0.0
      %v1083 = vsel %vm325, %v1075, 0.0
      %v1084 = vsel %vm324, %v1076, 0.0
      %v1085 = vsel %vm325, %v1077, 0.0
      %1086 = vst [vmem:[#allocation2 + $0x260] sm:$0xff] %v1082
      %1087 = vst [vmem:[#allocation2 + $0x268] sm:$0xff] %v1083
      %1088 = vst [vmem:[#allocation2 + $0x2a0] sm:$0xf] %v1084
      %1089 = vst [vmem:[#allocation2 + $0x2a8] sm:$0xf] %v1085
      %1090 = vrot.lane.b32.xlu0 %v893, 95
      %v1091 = vpop.permute.xlu0 %1090
      %1092 = vrot.lane.b32.xlu0 %v894, 95
      %v1093 = vpop.permute.xlu0 %1092
      %1094 = vrot.lane.b32.xlu0 %v895, 95
      %v1095 = vpop.permute.xlu0 %1094
      %1096 = vrot.lane.b32.xlu0 %v897, 95
      %v1097 = vpop.permute.xlu0 %1096
      %1098 = vrot.lane.b32.xlu0 %v899, 95
      %v1099 = vpop.permute.xlu0 %1098
      %1100 = vrot.lane.b32.xlu0 %v901, 95
      %v1101 = vpop.permute.xlu0 %1100
      %v1102 = vsel %vm560, %v1091, %v1093
      %v1103 = vsel %vm560, %v1093, %v1095
      %v1104 = vsel %vm560, %v1097, %v1099
      %v1105 = vsel %vm560, %v1099, %v1101
      %1110 = vst [vmem:[#allocation2 + $0x2a0] sm:$0xf0] %v1102
      %1111 = vst [vmem:[#allocation2 + $0x2a8] sm:$0xf0] %v1103
      %1112 = vst [vmem:[#allocation2 + $0x2e0] sm:$0xff] %v1104
      %1113 = vst [vmem:[#allocation2 + $0x2e8] sm:$0xff] %v1105
      %1114 = vrot.lane.b32.xlu0 %v873, 94
      %v1115 = vpop.permute.xlu0 %1114
      %1116 = vrot.lane.b32.xlu0 %v874, 94
      %v1117 = vpop.permute.xlu0 %1116
      %1118 = vrot.lane.b32.xlu0 %v875, 94
      %v1119 = vpop.permute.xlu0 %1118
      %1120 = vrot.lane.b32.xlu0 %v876, 94
      %v1121 = vpop.permute.xlu0 %1120
      %1122 = vrot.lane.b32.xlu0 %v877, 94
      %v1123 = vpop.permute.xlu0 %1122
      %1124 = vrot.lane.b32.xlu0 %v878, 94
      %v1125 = vpop.permute.xlu0 %1124
      %v1126 = vsel %vm585, %v1115, %v1117
      %v1127 = vsel %vm585, %v1117, %v1119
      %v1128 = vsel %vm585, %v1121, %v1123
      %v1129 = vsel %vm585, %v1123, %v1125
      %v1134 = vsel %vm377, %v1126, 0.0
      %v1135 = vsel %vm378, %v1127, 0.0
      %v1136 = vsel %vm377, %v1128, 0.0
      %v1137 = vsel %vm378, %v1129, 0.0
      %1138 = vst [vmem:[#allocation2 + $0x320] sm:$0xff] %v1134
      %1139 = vst [vmem:[#allocation2 + $0x328] sm:$0xff] %v1135
      %1140 = vst [vmem:[#allocation2 + $0x360] sm:$0xf] %v1136
      %1141 = vst [vmem:[#allocation2 + $0x368] sm:$0xf] %v1137
      %s1142 = scalar_lea.vmem %s277, 144
      %v1143 = vld [vmem:[%s1142] sm:$0xff]
      %v1144 = vld [vmem:[%s1142 + $0x8] sm:$0xff]
      %v1145 = vld [vmem:[%s1142 + $0x10] sm:$0xff]
      %v1146 = vld [vmem:[%s1142 + $0x18] sm:$0xf]
      %v1147 = vld [vmem:[%s1142 + $0x20] sm:$0xf]
      %v1148 = vld [vmem:[%s1142 + $0x28] sm:$0xf]
      %v1149 = vsel %vm324, %v1143, 0.0
      %v1150 = vsel %vm325, %v1144, 0.0
      %v1151 = vsel %vm324, %v1146, 0.0
      %v1152 = vsel %vm325, %v1147, 0.0
      %1153 = vst [vmem:[#allocation2 + $0x30] sm:$0xff] %v1149
      %1154 = vst [vmem:[#allocation2 + $0x38] sm:$0xff] %v1150
      %1155 = vst [vmem:[#allocation2 + $0x70] sm:$0xf] %v1151
      %1156 = vst [vmem:[#allocation2 + $0x78] sm:$0xf] %v1152
      %v1163 = vrot.slane %v1143, 4
      %v1164 = vrot.slane %v1144, 4
      %v1165 = vrot.slane %v1145, 4
      %v1166 = vrot.slane %v1146, 4
      %v1167 = vsel %vm340, %v1163, %v1166
      %v1168 = vrot.slane %v1147, 4
      %v1169 = vsel %vm340, %v1164, %v1168
      %v1170 = vrot.slane %v1148, 4
      %v1171 = vsel %vm340, %v1165, %v1170
      %1172 = vrot.lane.b32.xlu0 %v1163, 127
      %v1173 = vpop.permute.xlu0 %1172
      %1174 = vrot.lane.b32.xlu0 %v1164, 127
      %v1175 = vpop.permute.xlu0 %1174
      %1176 = vrot.lane.b32.xlu0 %v1165, 127
      %v1177 = vpop.permute.xlu0 %1176
      %1178 = vrot.lane.b32.xlu0 %v1167, 127
      %v1179 = vpop.permute.xlu0 %1178
      %1180 = vrot.lane.b32.xlu0 %v1169, 127
      %v1181 = vpop.permute.xlu0 %1180
      %1182 = vrot.lane.b32.xlu0 %v1171, 127
      %v1183 = vpop.permute.xlu0 %1182
      %v1184 = vsel %vm362, %v1173, %v1175
      %v1185 = vsel %vm362, %v1175, %v1177
      %v1186 = vsel %vm362, %v1179, %v1181
      %v1187 = vsel %vm362, %v1181, %v1183
      %1192 = vst [vmem:[#allocation2 + $0x70] sm:$0xf0] %v1184
      %1193 = vst [vmem:[#allocation2 + $0x78] sm:$0xf0] %v1185
      %1194 = vst [vmem:[#allocation2 + $0xb0] sm:$0xff] %v1186
      %1195 = vst [vmem:[#allocation2 + $0xb8] sm:$0xff] %v1187
      %1196 = vrot.lane.b32.xlu0 %v1143, 126
      %v1197 = vpop.permute.xlu0 %1196
      %1198 = vrot.lane.b32.xlu0 %v1144, 126
      %v1199 = vpop.permute.xlu0 %1198
      %1200 = vrot.lane.b32.xlu0 %v1145, 126
      %v1201 = vpop.permute.xlu0 %1200
      %1202 = vrot.lane.b32.xlu0 %v1146, 126
      %v1203 = vpop.permute.xlu0 %1202
      %1204 = vrot.lane.b32.xlu0 %v1147, 126
      %v1205 = vpop.permute.xlu0 %1204
      %1206 = vrot.lane.b32.xlu0 %v1148, 126
      %v1207 = vpop.permute.xlu0 %1206
      %v1208 = vsel %vm391, %v1197, %v1199
      %v1209 = vsel %vm391, %v1199, %v1201
      %v1210 = vsel %vm391, %v1203, %v1205
      %v1211 = vsel %vm391, %v1205, %v1207
      %v1216 = vsel %vm377, %v1208, 0.0
      %v1217 = vsel %vm378, %v1209, 0.0
      %v1218 = vsel %vm377, %v1210, 0.0
      %v1219 = vsel %vm378, %v1211, 0.0
      %1220 = vst [vmem:[#allocation2 + $0xf0] sm:$0xff] %v1216
      %1221 = vst [vmem:[#allocation2 + $0xf8] sm:$0xff] %v1217
      %1222 = vst [vmem:[#allocation2 + $0x130] sm:$0xf] %v1218
      %1223 = vst [vmem:[#allocation2 + $0x138] sm:$0xf] %v1219
      %1224 = vrot.lane.b32.xlu0 %v1143, 112
      %v1225 = vpop.permute.xlu0 %1224
      %1226 = vrot.lane.b32.xlu0 %v1144, 112
      %v1227 = vpop.permute.xlu0 %1226
      %1228 = vrot.lane.b32.xlu0 %v1145, 112
      %v1229 = vpop.permute.xlu0 %1228
      %1230 = vrot.lane.b32.xlu0 %v1146, 112
      %v1231 = vpop.permute.xlu0 %1230
      %1232 = vrot.lane.b32.xlu0 %v1147, 112
      %v1233 = vpop.permute.xlu0 %1232
      %1234 = vrot.lane.b32.xlu0 %v1148, 112
      %v1235 = vpop.permute.xlu0 %1234
      %v1236 = vsel %vm420, %v1225, %v1227
      %v1237 = vsel %vm420, %v1227, %v1229
      %v1238 = vsel %vm420, %v1231, %v1233
      %v1239 = vsel %vm420, %v1233, %v1235
      %v1244 = vsel %vm324, %v1236, 0.0
      %v1245 = vsel %vm325, %v1237, 0.0
      %v1246 = vsel %vm324, %v1238, 0.0
      %v1247 = vsel %vm325, %v1239, 0.0
      %v1252 = vrot.slane %v1244, 4
      %v1253 = vrot.slane %v1245, 4
      %v1254 = vrot.slane %v1246, 4
      %v1255 = vsel %vm340, %v1252, %v1254
      %v1256 = vrot.slane %v1247, 4
      %v1257 = vsel %vm340, %v1253, %v1256
      %1262 = vst [vmem:[#allocation2 + $0x130] sm:$0xf0] %v1252
      %1263 = vst [vmem:[#allocation2 + $0x138] sm:$0xf0] %v1253
      %1264 = vst [vmem:[#allocation2 + $0x170] sm:$0xff] %v1255
      %1265 = vst [vmem:[#allocation2 + $0x178] sm:$0xff] %v1257
      %1266 = vrot.lane.b32.xlu0 %v1143, 111
      %v1267 = vpop.permute.xlu0 %1266
      %1268 = vrot.lane.b32.xlu0 %v1144, 111
      %v1269 = vpop.permute.xlu0 %1268
      %1270 = vrot.lane.b32.xlu0 %v1145, 111
      %v1271 = vpop.permute.xlu0 %1270
      %1272 = vrot.lane.b32.xlu0 %v1146, 111
      %v1273 = vpop.permute.xlu0 %1272
      %1274 = vrot.lane.b32.xlu0 %v1147, 111
      %v1275 = vpop.permute.xlu0 %1274
      %1276 = vrot.lane.b32.xlu0 %v1148, 111
      %v1277 = vpop.permute.xlu0 %1276
      %v1278 = vsel %vm463, %v1267, %v1269
      %v1279 = vsel %vm463, %v1269, %v1271
      %v1280 = vsel %vm463, %v1273, %v1275
      %v1281 = vsel %vm463, %v1275, %v1277
      %1286 = vst [vmem:[#allocation2 + $0x1b0] sm:$0xff] %v1278
      %1287 = vst [vmem:[#allocation2 + $0x1b8] sm:$0xff] %v1279
      %1288 = vst [vmem:[#allocation2 + $0x1f0] sm:$0xf] %v1280
      %1289 = vst [vmem:[#allocation2 + $0x1f8] sm:$0xf] %v1281
      %1290 = vrot.lane.b32.xlu0 %v1143, 110
      %v1291 = vpop.permute.xlu0 %1290
      %1292 = vrot.lane.b32.xlu0 %v1144, 110
      %v1293 = vpop.permute.xlu0 %1292
      %1294 = vrot.lane.b32.xlu0 %v1145, 110
      %v1295 = vpop.permute.xlu0 %1294
      %1296 = vrot.lane.b32.xlu0 %v1146, 110
      %v1297 = vpop.permute.xlu0 %1296
      %1298 = vrot.lane.b32.xlu0 %v1147, 110
      %v1299 = vpop.permute.xlu0 %1298
      %1300 = vrot.lane.b32.xlu0 %v1148, 110
      %v1301 = vpop.permute.xlu0 %1300
      %v1302 = vsel %vm488, %v1291, %v1293
      %v1303 = vsel %vm488, %v1293, %v1295
      %v1304 = vsel %vm488, %v1297, %v1299
      %v1305 = vsel %vm488, %v1299, %v1301
      %v1310 = vsel %vm377, %v1302, 0.0
      %v1311 = vsel %vm378, %v1303, 0.0
      %v1312 = vsel %vm377, %v1304, 0.0
      %v1313 = vsel %vm378, %v1305, 0.0
      %v1318 = vrot.slane %v1310, 4
      %v1319 = vrot.slane %v1311, 4
      %v1320 = vrot.slane %v1312, 4
      %v1321 = vsel %vm340, %v1318, %v1320
      %v1322 = vrot.slane %v1313, 4
      %v1323 = vsel %vm340, %v1319, %v1322
      %1328 = vst [vmem:[#allocation2 + $0x1f0] sm:$0xf0] %v1318
      %1329 = vst [vmem:[#allocation2 + $0x1f8] sm:$0xf0] %v1319
      %1330 = vst [vmem:[#allocation2 + $0x230] sm:$0xff] %v1321
      %1331 = vst [vmem:[#allocation2 + $0x238] sm:$0xff] %v1323
      %1332 = vrot.lane.b32.xlu0 %v1143, 96
      %v1333 = vpop.permute.xlu0 %1332
      %1334 = vrot.lane.b32.xlu0 %v1144, 96
      %v1335 = vpop.permute.xlu0 %1334
      %1336 = vrot.lane.b32.xlu0 %v1145, 96
      %v1337 = vpop.permute.xlu0 %1336
      %1338 = vrot.lane.b32.xlu0 %v1146, 96
      %v1339 = vpop.permute.xlu0 %1338
      %1340 = vrot.lane.b32.xlu0 %v1147, 96
      %v1341 = vpop.permute.xlu0 %1340
      %1342 = vrot.lane.b32.xlu0 %v1148, 96
      %v1343 = vpop.permute.xlu0 %1342
      %v1344 = vsel %vm531, %v1333, %v1335
      %v1345 = vsel %vm531, %v1335, %v1337
      %v1346 = vsel %vm531, %v1339, %v1341
      %v1347 = vsel %vm531, %v1341, %v1343
      %v1352 = vsel %vm324, %v1344, 0.0
      %v1353 = vsel %vm325, %v1345, 0.0
      %v1354 = vsel %vm324, %v1346, 0.0
      %v1355 = vsel %vm325, %v1347, 0.0
      %1356 = vst [vmem:[#allocation2 + $0x270] sm:$0xff] %v1352
      %1357 = vst [vmem:[#allocation2 + $0x278] sm:$0xff] %v1353
      %1358 = vst [vmem:[#allocation2 + $0x2b0] sm:$0xf] %v1354
      %1359 = vst [vmem:[#allocation2 + $0x2b8] sm:$0xf] %v1355
      %1360 = vrot.lane.b32.xlu0 %v1163, 95
      %v1361 = vpop.permute.xlu0 %1360
      %1362 = vrot.lane.b32.xlu0 %v1164, 95
      %v1363 = vpop.permute.xlu0 %1362
      %1364 = vrot.lane.b32.xlu0 %v1165, 95
      %v1365 = vpop.permute.xlu0 %1364
      %1366 = vrot.lane.b32.xlu0 %v1167, 95
      %v1367 = vpop.permute.xlu0 %1366
      %1368 = vrot.lane.b32.xlu0 %v1169, 95
      %v1369 = vpop.permute.xlu0 %1368
      %1370 = vrot.lane.b32.xlu0 %v1171, 95
      %v1371 = vpop.permute.xlu0 %1370
      %v1372 = vsel %vm560, %v1361, %v1363
      %v1373 = vsel %vm560, %v1363, %v1365
      %v1374 = vsel %vm560, %v1367, %v1369
      %v1375 = vsel %vm560, %v1369, %v1371
      %1380 = vst [vmem:[#allocation2 + $0x2b0] sm:$0xf0] %v1372
      %1381 = vst [vmem:[#allocation2 + $0x2b8] sm:$0xf0] %v1373
      %1382 = vst [vmem:[#allocation2 + $0x2f0] sm:$0xff] %v1374
      %1383 = vst [vmem:[#allocation2 + $0x2f8] sm:$0xff] %v1375
      %1384 = vrot.lane.b32.xlu0 %v1143, 94
      %v1385 = vpop.permute.xlu0 %1384
      %1386 = vrot.lane.b32.xlu0 %v1144, 94
      %v1387 = vpop.permute.xlu0 %1386
      %1388 = vrot.lane.b32.xlu0 %v1145, 94
      %v1389 = vpop.permute.xlu0 %1388
      %1390 = vrot.lane.b32.xlu0 %v1146, 94
      %v1391 = vpop.permute.xlu0 %1390
      %1392 = vrot.lane.b32.xlu0 %v1147, 94
      %v1393 = vpop.permute.xlu0 %1392
      %1394 = vrot.lane.b32.xlu0 %v1148, 94
      %v1395 = vpop.permute.xlu0 %1394
      %v1396 = vsel %vm585, %v1385, %v1387
      %v1397 = vsel %vm585, %v1387, %v1389
      %v1398 = vsel %vm585, %v1391, %v1393
      %v1399 = vsel %vm585, %v1393, %v1395
      %v1404 = vsel %vm377, %v1396, 0.0
      %v1405 = vsel %vm378, %v1397, 0.0
      %v1406 = vsel %vm377, %v1398, 0.0
      %v1407 = vsel %vm378, %v1399, 0.0
      %1408 = vst [vmem:[#allocation2 + $0x330] sm:$0xff] %v1404
      %1409 = vst [vmem:[#allocation2 + $0x338] sm:$0xff] %v1405
      %1410 = vst [vmem:[#allocation2 + $0x370] sm:$0xf] %v1406
      %1411 = vst [vmem:[#allocation2 + $0x378] sm:$0xf] %v1407
      %v1412 = vld [vmem:[%s1] sm:$0xff]
      %v1413 = vld [vmem:[%s1 + $0x8] sm:$0xf]
      %v1414 = vld [vmem:[#allocation2] sm:$0xff]
      %v1415 = vld [vmem:[#allocation2 + $0x8] sm:$0xff]
      %v1416 = vld [vmem:[#allocation2 + $0x10] sm:$0xff]
      %v1417 = vld [vmem:[#allocation2 + $0x18] sm:$0xff]
      %v1418 = vld [vmem:[#allocation2 + $0x20] sm:$0xff]
      %v1419 = vld [vmem:[#allocation2 + $0x28] sm:$0xff]
      %v1420 = vld [vmem:[#allocation2 + $0x30] sm:$0xff]
      %v1421 = vld [vmem:[#allocation2 + $0x38] sm:$0xff]
      %v1422 = vld [vmem:[#allocation2 + $0x40] sm:$0xff]
      %v1423 = vld [vmem:[#allocation2 + $0x48] sm:$0xff]
      %v1424 = vld [vmem:[#allocation2 + $0x50] sm:$0xff]
      %v1425 = vld [vmem:[#allocation2 + $0x58] sm:$0xff]
      %v1426 = vld [vmem:[#allocation2 + $0x60] sm:$0xff]
      %v1427 = vld [vmem:[#allocation2 + $0x68] sm:$0xff]
      %v1428 = vld [vmem:[#allocation2 + $0x70] sm:$0xff]
      %v1429 = vld [vmem:[#allocation2 + $0x78] sm:$0xff]
      %v1430 = vld [vmem:[#allocation2 + $0x80] sm:$0xff]
      %v1431 = vld [vmem:[#allocation2 + $0x88] sm:$0xff]
      %v1432 = vld [vmem:[#allocation2 + $0x90] sm:$0xff]
      %v1433 = vld [vmem:[#allocation2 + $0x98] sm:$0xff]
      %v1434 = vld [vmem:[#allocation2 + $0xa0] sm:$0xff]
      %v1435 = vld [vmem:[#allocation2 + $0xa8] sm:$0xff]
      %v1436 = vld [vmem:[#allocation2 + $0xb0] sm:$0xff]
      %v1437 = vld [vmem:[#allocation2 + $0xb8] sm:$0xff]
      %v1438 = vld [vmem:[#allocation2 + $0xc0] sm:$0xff]
      %v1439 = vld [vmem:[#allocation2 + $0xc8] sm:$0xff]
      %v1440 = vld [vmem:[#allocation2 + $0xd0] sm:$0xff]
      %v1441 = vld [vmem:[#allocation2 + $0xd8] sm:$0xff]
      %v1442 = vld [vmem:[#allocation2 + $0xe0] sm:$0xff]
      %v1443 = vld [vmem:[#allocation2 + $0xe8] sm:$0xff]
      %v1444 = vld [vmem:[#allocation2 + $0xf0] sm:$0xff]
      %v1445 = vld [vmem:[#allocation2 + $0xf8] sm:$0xff]
      %v1446 = vld [vmem:[#allocation2 + $0x100] sm:$0xff]
      %v1447 = vld [vmem:[#allocation2 + $0x108] sm:$0xff]
      %v1448 = vld [vmem:[#allocation2 + $0x110] sm:$0xff]
      %v1449 = vld [vmem:[#allocation2 + $0x118] sm:$0xff]
      %v1450 = vld [vmem:[#allocation2 + $0x120] sm:$0xff]
      %v1451 = vld [vmem:[#allocation2 + $0x128] sm:$0xff]
      %v1452 = vld [vmem:[#allocation2 + $0x130] sm:$0xff]
      %v1453 = vld [vmem:[#allocation2 + $0x138] sm:$0xff]
      %v1454 = vld [vmem:[#allocation2 + $0x140] sm:$0xff]
      %v1455 = vld [vmem:[#allocation2 + $0x148] sm:$0xff]
      %v1456 = vld [vmem:[#allocation2 + $0x150] sm:$0xff]
      %v1457 = vld [vmem:[#allocation2 + $0x158] sm:$0xff]
      %v1458 = vld [vmem:[#allocation2 + $0x160] sm:$0xff]
      %v1459 = vld [vmem:[#allocation2 + $0x168] sm:$0xff]
      %v1460 = vld [vmem:[#allocation2 + $0x170] sm:$0xff]
      %v1461 = vld [vmem:[#allocation2 + $0x178] sm:$0xff]
      %v1462 = vld [vmem:[#allocation2 + $0x180] sm:$0xff]
      %v1463 = vld [vmem:[#allocation2 + $0x188] sm:$0xff]
      %v1464 = vld [vmem:[#allocation2 + $0x190] sm:$0xff]
      %v1465 = vld [vmem:[#allocation2 + $0x198] sm:$0xff]
      %v1466 = vld [vmem:[#allocation2 + $0x1a0] sm:$0xff]
      %v1467 = vld [vmem:[#allocation2 + $0x1a8] sm:$0xff]
      %v1468 = vld [vmem:[#allocation2 + $0x1b0] sm:$0xff]
      %v1469 = vld [vmem:[#allocation2 + $0x1b8] sm:$0xff]
      %v1470 = vld [vmem:[#allocation2 + $0x1c0] sm:$0xff]
      %v1471 = vld [vmem:[#allocation2 + $0x1c8] sm:$0xff]
      %v1472 = vld [vmem:[#allocation2 + $0x1d0] sm:$0xff]
      %v1473 = vld [vmem:[#allocation2 + $0x1d8] sm:$0xff]
      %v1474 = vld [vmem:[#allocation2 + $0x1e0] sm:$0xff]
      %v1475 = vld [vmem:[#allocation2 + $0x1e8] sm:$0xff]
      %v1476 = vld [vmem:[#allocation2 + $0x1f0] sm:$0xff]
      %v1477 = vld [vmem:[#allocation2 + $0x1f8] sm:$0xff]
      %v1478 = vld [vmem:[#allocation2 + $0x200] sm:$0xff]
      %v1479 = vld [vmem:[#allocation2 + $0x208] sm:$0xff]
      %v1480 = vld [vmem:[#allocation2 + $0x210] sm:$0xff]
      %v1481 = vld [vmem:[#allocation2 + $0x218] sm:$0xff]
      %v1482 = vld [vmem:[#allocation2 + $0x220] sm:$0xff]
      %v1483 = vld [vmem:[#allocation2 + $0x228] sm:$0xff]
      %v1484 = vld [vmem:[#allocation2 + $0x230] sm:$0xff]
      %v1485 = vld [vmem:[#allocation2 + $0x238] sm:$0xff]
      %v1486 = vld [vmem:[#allocation2 + $0x240] sm:$0xff]
      %v1487 = vld [vmem:[#allocation2 + $0x248] sm:$0xff]
      %v1488 = vld [vmem:[#allocation2 + $0x250] sm:$0xff]
      %v1489 = vld [vmem:[#allocation2 + $0x258] sm:$0xff]
      %v1490 = vld [vmem:[#allocation2 + $0x260] sm:$0xff]
      %v1491 = vld [vmem:[#allocation2 + $0x268] sm:$0xff]
      %v1492 = vld [vmem:[#allocation2 + $0x270] sm:$0xff]
      %v1493 = vld [vmem:[#allocation2 + $0x278] sm:$0xff]
      %v1494 = vld [vmem:[#allocation2 + $0x280] sm:$0xff]
      %v1495 = vld [vmem:[#allocation2 + $0x288] sm:$0xff]
      %v1496 = vld [vmem:[#allocation2 + $0x290] sm:$0xff]
      %v1497 = vld [vmem:[#allocation2 + $0x298] sm:$0xff]
      %v1498 = vld [vmem:[#allocation2 + $0x2a0] sm:$0xff]
      %v1499 = vld [vmem:[#allocation2 + $0x2a8] sm:$0xff]
      %v1500 = vld [vmem:[#allocation2 + $0x2b0] sm:$0xff]
      %v1501 = vld [vmem:[#allocation2 + $0x2b8] sm:$0xff]
      %v1502 = vld [vmem:[#allocation2 + $0x2c0] sm:$0xff]
      %v1503 = vld [vmem:[#allocation2 + $0x2c8] sm:$0xff]
      %v1504 = vld [vmem:[#allocation2 + $0x2d0] sm:$0xff]
      %v1505 = vld [vmem:[#allocation2 + $0x2d8] sm:$0xff]
      %v1506 = vld [vmem:[#allocation2 + $0x2e0] sm:$0xff]
      %v1507 = vld [vmem:[#allocation2 + $0x2e8] sm:$0xff]
      %v1508 = vld [vmem:[#allocation2 + $0x2f0] sm:$0xff]
      %v1509 = vld [vmem:[#allocation2 + $0x2f8] sm:$0xff]
      %v1510 = vld [vmem:[#allocation2 + $0x300] sm:$0xff]
      %v1511 = vld [vmem:[#allocation2 + $0x308] sm:$0xff]
      %v1512 = vld [vmem:[#allocation2 + $0x310] sm:$0xff]
      %v1513 = vld [vmem:[#allocation2 + $0x318] sm:$0xff]
      %v1514 = vld [vmem:[#allocation2 + $0x320] sm:$0xff]
      %v1515 = vld [vmem:[#allocation2 + $0x328] sm:$0xff]
      %v1516 = vld [vmem:[#allocation2 + $0x330] sm:$0xff]
      %v1517 = vld [vmem:[#allocation2 + $0x338] sm:$0xff]
      %v1518 = vld [vmem:[#allocation2 + $0x340] sm:$0xf]
      %v1519 = vld [vmem:[#allocation2 + $0x348] sm:$0xf]
      %v1520 = vld [vmem:[#allocation2 + $0x350] sm:$0xf]
      %v1521 = vld [vmem:[#allocation2 + $0x358] sm:$0xf]
      %v1522 = vld [vmem:[#allocation2 + $0x360] sm:$0xf]
      %v1523 = vld [vmem:[#allocation2 + $0x368] sm:$0xf]
      %v1524 = vld [vmem:[#allocation2 + $0x370] sm:$0xf]
      %v1525 = vld [vmem:[#allocation2 + $0x378] sm:$0xf]
      %v1526 = vld [vmem:[%s2] sm:$0xff]
      %v1527 = vld [vmem:[%s2 + $0x8] sm:$0xf]
      %1529 = vset.pattern.permute.xlu0 0
      %1530 = vperm.xlu0 %1529, %v1526
      %v1531 = vpop.permute.xlu0 %1530
      %1534 = vset.pattern.permute.xlu0 0
      %1535 = vperm.xlu0 %1534, %v1527
      %v1536 = vpop.permute.xlu0 %1535
      %vm1538 = vcmask 883712
      %v1540 = vsel %vm1538, %v1412, 0
      %v1543 = vsel %vm1538, %v1413, 0
      %v1546 = vsel %vm340, %v1518, 0
      %v1549 = vsel %vm340, %v1519, 0
      %v1552 = vsel %vm340, %v1520, 0
      %v1555 = vsel %vm340, %v1521, 0
      %v1558 = vsel %vm340, %v1522, 0
      %v1561 = vsel %vm340, %v1523, 0
      %v1564 = vsel %vm340, %v1524, 0
      %v1567 = vsel %vm340, %v1525, 0
      %1569 = vmatprep.subr.mxu0 %v1415
      %1570 = vmatpush1.msra.mxu0 %v1414
      %1571 = vmatprep.subr.mxu0 %v1423
      %1572 = vmatpush1.msra.mxu0 %v1422
      %1573 = vmatprep.subr.mxu0 %v1431
      %1574 = vmatpush1.msra.mxu0 %v1430
      %1575 = vmatprep.subr.mxu0 %v1439
      %1576 = vmatpush1.msra.mxu0 %v1438
      %1577 = vmatprep.subr.mxu0 %v1447
      %1578 = vmatpush1.msra.mxu0 %v1446
      %1579 = vmatprep.subr.mxu0 %v1455
      %1580 = vmatpush1.msra.mxu0 %v1454
      %1581 = vmatprep.subr.mxu0 %v1463
      %1582 = vmatpush1.msra.mxu0 %v1462
      %1583 = vmatprep.subr.mxu0 %v1471
      %1584 = vmatpush1.msra.mxu0 %v1470
      %1585 = vmatprep.subr.mxu0 %v1479
      %1586 = vmatpush1.msra.mxu0 %v1478
      %1587 = vmatprep.subr.mxu0 %v1487
      %1588 = vmatpush1.msra.mxu0 %v1486
      %1589 = vmatprep.subr.mxu0 %v1495
      %1590 = vmatpush1.msra.mxu0 %v1494
      %1591 = vmatprep.subr.mxu0 %v1503
      %1592 = vmatpush1.msra.mxu0 %v1502
      %1593 = vmatprep.subr.mxu0 %v1511
      %1594 = vmatpush1.msra.mxu0 %v1510
      %1595 = vmatprep.subr.mxu0 %v1549
      %1596 = vmatpush1.msra.mxu0 %v1546
      %1597 = vmatprep.subr.mxu0 0.0
      %1598 = vmatpush1.msra.mxu0 0.0
      %1599 = vmatprep.subr.mxu0 0.0
      %1600 = vmatpush1.msra.mxu0 0.0
      %1601 = vmatprep.subr.mxu0 0.0
      %1602 = vmatpush1.msra.mxu0 0.0
      %1603 = vmatprep.subr.mxu0 0.0
      %1604 = vmatpush1.msra.mxu0 0.0
      %1605 = vmatprep.subr.mxu0 0.0
      %1606 = vmatpush1.msra.mxu0 0.0
      %1607 = vmatprep.subr.mxu0 0.0
      %1608 = vmatpush1.msra.mxu0 0.0
      %1609 = vmatprep.subr.mxu0 0.0
      %1610 = vmatpush1.msra.mxu0 0.0
      %1611 = vmatprep.subr.mxu0 0.0
      %1612 = vmatpush1.msra.mxu0 0.0
      %1613 = vmatprep.subr.mxu0 0.0
      %1614 = vmatpush1.msra.mxu0 0.0
      %1615 = vmatprep.subr.mxu0 0.0
      %1616 = vmatpush1.msra.mxu0 0.0
      %1617 = vmatprep.subr.mxu0 0.0
      %1618 = vmatpush1.msra.mxu0 0.0
      %1619 = vmatprep.subr.mxu0 0.0
      %1620 = vmatpush1.msra.mxu0 0.0
      %1621 = vmatprep.subr.mxu0 0.0
      %1622 = vmatpush1.msra.mxu0 0.0
      %1623 = vmatprep.subr.mxu0 0.0
      %1624 = vmatpush1.msra.mxu0 0.0
      %1625 = vmatprep.subr.mxu0 0.0
      %1626 = vmatpush1.msra.mxu0 0.0
      %1627 = vmatprep.subr.mxu0 0.0
      %1628 = vmatpush1.msra.mxu0 0.0
      %1629 = vmatprep.subr.mxu0 0.0
      %1630 = vmatpush1.msra.mxu0 0.0
      %1631 = vmatprep.subr.mxu0 0.0
      %1632 = vmatpush1.msra.mxu0 0.0
      %1633 = vmatprep.mubr.f32.mxu0 0.0
      %1634 = vmatmul.mubr.f32.gmra.mrb[0].mxu0 %v1540
      %v1635 = vpop.f32.mrb[0].mxu0
      %v1636 = vadd.f32 %v1531, %v1635
      %v1637 = vpop.f32.mrb[0].mxu0
      %v1638 = vadd.f32 %v1531, %v1637
      %1639 = vmatprep.mubr.f32.mxu0 0.0
      %1640 = vmatmul.mubr.f32.gmra.mrb[0].mxu0 %v1543
      %v1641 = vpop.f32.mrb[0].mxu0
      %v1642 = vadd.f32 %v1536, %v1641
      %v1643 = vpop.f32.mrb[0].mxu0
      %v1644 = vadd.f32 %v1536, %v1643
      %1645 = vdwg.mxu0
      %1646 = vmatprep.subr.mxu0 %v1417
      %1647 = vmatpush1.msra.mxu0 %v1416
      %1648 = vmatprep.subr.mxu0 %v1425
      %1649 = vmatpush1.msra.mxu0 %v1424
      %1650 = vmatprep.subr.mxu0 %v1433
      %1651 = vmatpush1.msra.mxu0 %v1432
      %1652 = vmatprep.subr.mxu0 %v1441
      %1653 = vmatpush1.msra.mxu0 %v1440
      %1654 = vmatprep.subr.mxu0 %v1449
      %1655 = vmatpush1.msra.mxu0 %v1448
      %1656 = vmatprep.subr.mxu0 %v1457
      %1657 = vmatpush1.msra.mxu0 %v1456
      %1658 = vmatprep.subr.mxu0 %v1465
      %1659 = vmatpush1.msra.mxu0 %v1464
      %1660 = vmatprep.subr.mxu0 %v1473
      %1661 = vmatpush1.msra.mxu0 %v1472
      %1662 = vmatprep.subr.mxu0 %v1481
      %1663 = vmatpush1.msra.mxu0 %v1480
      %1664 = vmatprep.subr.mxu0 %v1489
      %1665 = vmatpush1.msra.mxu0 %v1488
      %1666 = vmatprep.subr.mxu0 %v1497
      %1667 = vmatpush1.msra.mxu0 %v1496
      %1668 = vmatprep.subr.mxu0 %v1505
      %1669 = vmatpush1.msra.mxu0 %v1504
      %1670 = vmatprep.subr.mxu0 %v1513
      %1671 = vmatpush1.msra.mxu0 %v1512
      %1672 = vmatprep.subr.mxu0 %v1555
      %1673 = vmatpush1.msra.mxu0 %v1552
      %1674 = vmatprep.subr.mxu0 0.0
      %1675 = vmatpush1.msra.mxu0 0.0
      %1676 = vmatprep.subr.mxu0 0.0
      %1677 = vmatpush1.msra.mxu0 0.0
      %1678 = vmatprep.subr.mxu0 0.0
      %1679 = vmatpush1.msra.mxu0 0.0
      %1680 = vmatprep.subr.mxu0 0.0
      %1681 = vmatpush1.msra.mxu0 0.0
      %1682 = vmatprep.subr.mxu0 0.0
      %1683 = vmatpush1.msra.mxu0 0.0
      %1684 = vmatprep.subr.mxu0 0.0
      %1685 = vmatpush1.msra.mxu0 0.0
      %1686 = vmatprep.subr.mxu0 0.0
      %1687 = vmatpush1.msra.mxu0 0.0
      %1688 = vmatprep.subr.mxu0 0.0
      %1689 = vmatpush1.msra.mxu0 0.0
      %1690 = vmatprep.subr.mxu0 0.0
      %1691 = vmatpush1.msra.mxu0 0.0
      %1692 = vmatprep.subr.mxu0 0.0
      %1693 = vmatpush1.msra.mxu0 0.0
      %1694 = vmatprep.subr.mxu0 0.0
      %1695 = vmatpush1.msra.mxu0 0.0
      %1696 = vmatprep.subr.mxu0 0.0
      %1697 = vmatpush1.msra.mxu0 0.0
      %1698 = vmatprep.subr.mxu0 0.0
      %1699 = vmatpush1.msra.mxu0 0.0
      %1700 = vmatprep.subr.mxu0 0.0
      %1701 = vmatpush1.msra.mxu0 0.0
      %1702 = vmatprep.subr.mxu0 0.0
      %1703 = vmatpush1.msra.mxu0 0.0
      %1704 = vmatprep.subr.mxu0 0.0
      %1705 = vmatpush1.msra.mxu0 0.0
      %1706 = vmatprep.subr.mxu0 0.0
      %1707 = vmatpush1.msra.mxu0 0.0
      %1708 = vmatprep.subr.mxu0 0.0
      %1709 = vmatpush1.msra.mxu0 0.0
      %1710 = vmatprep.mubr.f32.mxu0 0.0
      %1711 = vmatmul.mubr.f32.gmra.mrb[0].mxu0 %v1540
      %v1712 = vpop.f32.mrb[0].mxu0
      %v1713 = vadd.f32 %v1531, %v1712
      %v1714 = vpop.f32.mrb[0].mxu0
      %v1715 = vadd.f32 %v1531, %v1714
      %1716 = vmatprep.mubr.f32.mxu0 0.0
      %1717 = vmatmul.mubr.f32.gmra.mrb[0].mxu0 %v1543
      %v1718 = vpop.f32.mrb[0].mxu0
      %v1719 = vadd.f32 %v1536, %v1718
      %v1720 = vpop.f32.mrb[0].mxu0
      %v1721 = vadd.f32 %v1536, %v1720
      %1722 = vdwg.mxu0
      %1723 = vmatprep.subr.mxu0 %v1419
      %1724 = vmatpush1.msra.mxu0 %v1418
      %1725 = vmatprep.subr.mxu0 %v1427
      %1726 = vmatpush1.msra.mxu0 %v1426
      %1727 = vmatprep.subr.mxu0 %v1435
      %1728 = vmatpush1.msra.mxu0 %v1434
      %1729 = vmatprep.subr.mxu0 %v1443
      %1730 = vmatpush1.msra.mxu0 %v1442
      %1731 = vmatprep.subr.mxu0 %v1451
      %1732 = vmatpush1.msra.mxu0 %v1450
      %1733 = vmatprep.subr.mxu0 %v1459
      %1734 = vmatpush1.msra.mxu0 %v1458
      %1735 = vmatprep.subr.mxu0 %v1467
      %1736 = vmatpush1.msra.mxu0 %v1466
      %1737 = vmatprep.subr.mxu0 %v1475
      %1738 = vmatpush1.msra.mxu0 %v1474
      %1739 = vmatprep.subr.mxu0 %v1483
      %1740 = vmatpush1.msra.mxu0 %v1482
      %1741 = vmatprep.subr.mxu0 %v1491
      %1742 = vmatpush1.msra.mxu0 %v1490
      %1743 = vmatprep.subr.mxu0 %v1499
      %1744 = vmatpush1.msra.mxu0 %v1498
      %1745 = vmatprep.subr.mxu0 %v1507
      %1746 = vmatpush1.msra.mxu0 %v1506
      %1747 = vmatprep.subr.mxu0 %v1515
      %1748 = vmatpush1.msra.mxu0 %v1514
      %1749 = vmatprep.subr.mxu0 %v1561
      %1750 = vmatpush1.msra.mxu0 %v1558
      %1751 = vmatprep.subr.mxu0 0.0
      %1752 = vmatpush1.msra.mxu0 0.0
      %1753 = vmatprep.subr.mxu0 0.0
      %1754 = vmatpush1.msra.mxu0 0.0
      %1755 = vmatprep.subr.mxu0 0.0
      %1756 = vmatpush1.msra.mxu0 0.0
      %1757 = vmatprep.subr.mxu0 0.0
      %1758 = vmatpush1.msra.mxu0 0.0
      %1759 = vmatprep.subr.mxu0 0.0
      %1760 = vmatpush1.msra.mxu0 0.0
      %1761 = vmatprep.subr.mxu0 0.0
      %1762 = vmatpush1.msra.mxu0 0.0
      %1763 = vmatprep.subr.mxu0 0.0
      %1764 = vmatpush1.msra.mxu0 0.0
      %1765 = vmatprep.subr.mxu0 0.0
      %1766 = vmatpush1.msra.mxu0 0.0
      %1767 = vmatprep.subr.mxu0 0.0
      %1768 = vmatpush1.msra.mxu0 0.0
      %1769 = vmatprep.subr.mxu0 0.0
      %1770 = vmatpush1.msra.mxu0 0.0
      %1771 = vmatprep.subr.mxu0 0.0
      %1772 = vmatpush1.msra.mxu0 0.0
      %1773 = vmatprep.subr.mxu0 0.0
      %1774 = vmatpush1.msra.mxu0 0.0
      %1775 = vmatprep.subr.mxu0 0.0
      %1776 = vmatpush1.msra.mxu0 0.0
      %1777 = vmatprep.subr.mxu0 0.0
      %1778 = vmatpush1.msra.mxu0 0.0
      %1779 = vmatprep.subr.mxu0 0.0
      %1780 = vmatpush1.msra.mxu0 0.0
      %1781 = vmatprep.subr.mxu0 0.0
      %1782 = vmatpush1.msra.mxu0 0.0
      %1783 = vmatprep.subr.mxu0 0.0
      %1784 = vmatpush1.msra.mxu0 0.0
      %1785 = vmatprep.subr.mxu0 0.0
      %1786 = vmatpush1.msra.mxu0 0.0
      %1787 = vmatprep.mubr.f32.mxu0 0.0
      %1788 = vmatmul.mubr.f32.gmra.mrb[0].mxu0 %v1540
      %v1789 = vpop.f32.mrb[0].mxu0
      %v1790 = vadd.f32 %v1531, %v1789
      %v1791 = vpop.f32.mrb[0].mxu0
      %v1792 = vadd.f32 %v1531, %v1791
      %1793 = vmatprep.mubr.f32.mxu0 0.0
      %1794 = vmatmul.mubr.f32.gmra.mrb[0].mxu0 %v1543
      %v1795 = vpop.f32.mrb[0].mxu0
      %v1796 = vadd.f32 %v1536, %v1795
      %v1797 = vpop.f32.mrb[0].mxu0
      %v1798 = vadd.f32 %v1536, %v1797
      %1799 = vdwg.mxu0
      %1800 = vmatprep.subr.mxu0 %v1421
      %1801 = vmatpush1.msra.mxu0 %v1420
      %1802 = vmatprep.subr.mxu0 %v1429
      %1803 = vmatpush1.msra.mxu0 %v1428
      %1804 = vmatprep.subr.mxu0 %v1437
      %1805 = vmatpush1.msra.mxu0 %v1436
      %1806 = vmatprep.subr.mxu0 %v1445
      %1807 = vmatpush1.msra.mxu0 %v1444
      %1808 = vmatprep.subr.mxu0 %v1453
      %1809 = vmatpush1.msra.mxu0 %v1452
      %1810 = vmatprep.subr.mxu0 %v1461
      %1811 = vmatpush1.msra.mxu0 %v1460
      %1812 = vmatprep.subr.mxu0 %v1469
      %1813 = vmatpush1.msra.mxu0 %v1468
      %1814 = vmatprep.subr.mxu0 %v1477
      %1815 = vmatpush1.msra.mxu0 %v1476
      %1816 = vmatprep.subr.mxu0 %v1485
      %1817 = vmatpush1.msra.mxu0 %v1484
      %1818 = vmatprep.subr.mxu0 %v1493
      %1819 = vmatpush1.msra.mxu0 %v1492
      %1820 = vmatprep.subr.mxu0 %v1501
      %1821 = vmatpush1.msra.mxu0 %v1500
      %1822 = vmatprep.subr.mxu0 %v1509
      %1823 = vmatpush1.msra.mxu0 %v1508
      %1824 = vmatprep.subr.mxu0 %v1517
      %1825 = vmatpush1.msra.mxu0 %v1516
      %1826 = vmatprep.subr.mxu0 %v1567
      %1827 = vmatpush1.msra.mxu0 %v1564
      %1828 = vmatprep.subr.mxu0 0.0
      %1829 = vmatpush1.msra.mxu0 0.0
      %1830 = vmatprep.subr.mxu0 0.0
      %1831 = vmatpush1.msra.mxu0 0.0
      %1832 = vmatprep.subr.mxu0 0.0
      %1833 = vmatpush1.msra.mxu0 0.0
      %1834 = vmatprep.subr.mxu0 0.0
      %1835 = vmatpush1.msra.mxu0 0.0
      %1836 = vmatprep.subr.mxu0 0.0
      %1837 = vmatpush1.msra.mxu0 0.0
      %1838 = vmatprep.subr.mxu0 0.0
      %1839 = vmatpush1.msra.mxu0 0.0
      %1840 = vmatprep.subr.mxu0 0.0
      %1841 = vmatpush1.msra.mxu0 0.0
      %1842 = vmatprep.subr.mxu0 0.0
      %1843 = vmatpush1.msra.mxu0 0.0
      %1844 = vmatprep.subr.mxu0 0.0
      %1845 = vmatpush1.msra.mxu0 0.0
      %1846 = vmatprep.subr.mxu0 0.0
      %1847 = vmatpush1.msra.mxu0 0.0
      %1848 = vmatprep.subr.mxu0 0.0
      %1849 = vmatpush1.msra.mxu0 0.0
      %1850 = vmatprep.subr.mxu0 0.0
      %1851 = vmatpush1.msra.mxu0 0.0
      %1852 = vmatprep.subr.mxu0 0.0
      %1853 = vmatpush1.msra.mxu0 0.0
      %1854 = vmatprep.subr.mxu0 0.0
      %1855 = vmatpush1.msra.mxu0 0.0
      %1856 = vmatprep.subr.mxu0 0.0
      %1857 = vmatpush1.msra.mxu0 0.0
      %1858 = vmatprep.subr.mxu0 0.0
      %1859 = vmatpush1.msra.mxu0 0.0
      %1860 = vmatprep.subr.mxu0 0.0
      %1861 = vmatpush1.msra.mxu0 0.0
      %1862 = vmatprep.subr.mxu0 0.0
      %1863 = vmatpush1.msra.mxu0 0.0
      %1864 = vmatprep.mubr.f32.mxu0 0.0
      %1865 = vmatmul.mubr.f32.gmra.mrb[0].mxu0 %v1540
      %v1866 = vpop.f32.mrb[0].mxu0
      %v1867 = vadd.f32 %v1531, %v1866
      %v1868 = vpop.f32.mrb[0].mxu0
      %v1869 = vadd.f32 %v1531, %v1868
      %1870 = vmatprep.mubr.f32.mxu0 0.0
      %1871 = vmatmul.mubr.f32.gmra.mrb[0].mxu0 %v1543
      %v1872 = vpop.f32.mrb[0].mxu0
      %v1873 = vadd.f32 %v1536, %v1872
      %v1874 = vpop.f32.mrb[0].mxu0
      %v1875 = vadd.f32 %v1536, %v1874
      %1876 = vdwg.mxu0
      %v1877 = vadd.f32 %v1636, %v1638
      %1878 = vadd.xlane.f32.xlu0 %v1877
      %v1879 = vpop.xlane.xlu0 %1878
      %v1880 = vsel %vm340, %v1642, 0.0
      %v1881 = vsel %vm340, %v1644, 0.0
      %v1882 = vadd.f32 %v1880, %v1881
      %1883 = vadd.xlane.f32.xlu0 %v1882
      %v1884 = vpop.xlane.xlu0 %1883
      %v1885 = vrcp.pop 256.0
      %v1886 = vmul.f32 %v1879, %v1885
      %v1887 = vmul.f32 %v1884, %v1885
      %vm1888 = vcmp.eq.s32.totalorder %v286, 0
      %v1889 = vsel %vm1888, 1, 0
      %vm1890 = vcmp.eq.s32.totalorder %v1889, 1
      %v1891 = vsel %vm1890, %v1886, 0.0
      %v1892 = vsel %vm1890, %v1887, 0.0
      %v1893 = vadd.f32 %v1891, 0.0
      %v1894 = vadd.f32 %v1892, 0.0
      %v1895 = vadd.f32 %v1713, %v1715
      %1896 = vadd.xlane.f32.xlu0 %v1895
      %v1897 = vpop.xlane.xlu0 %1896
      %v1898 = vsel %vm340, %v1719, 0.0
      %v1899 = vsel %vm340, %v1721, 0.0
      %v1900 = vadd.f32 %v1898, %v1899
      %1901 = vadd.xlane.f32.xlu0 %v1900
      %v1902 = vpop.xlane.xlu0 %1901
      %v1903 = vmul.f32 %v1897, %v1885
      %v1904 = vmul.f32 %v1902, %v1885
      %vm1905 = vcmp.eq.s32.totalorder %v286, 1
      %v1906 = vsel %vm1905, 1, 0
      %vm1907 = vcmp.eq.s32.totalorder %v1906, 1
      %v1908 = vsel %vm1907, %v1903, 0.0
      %v1909 = vsel %vm1907, %v1904, 0.0
      %v1910 = vadd.f32 %v1893, %v1908
      %v1911 = vadd.f32 %v1894, %v1909
      %v1912 = vadd.f32 %v1790, %v1792
      %1913 = vadd.xlane.f32.xlu0 %v1912
      %v1914 = vpop.xlane.xlu0 %1913
      %v1915 = vsel %vm340, %v1796, 0.0
      %v1916 = vsel %vm340, %v1798, 0.0
      %v1917 = vadd.f32 %v1915, %v1916
      %1918 = vadd.xlane.f32.xlu0 %v1917
      %v1919 = vpop.xlane.xlu0 %1918
      %v1920 = vmul.f32 %v1914, %v1885
      %v1921 = vmul.f32 %v1919, %v1885
      %vm1922 = vcmp.eq.s32.totalorder %v286, 2
      %v1923 = vsel %vm1922, 1, 0
      %vm1924 = vcmp.eq.s32.totalorder %v1923, 1
      %v1925 = vsel %vm1924, %v1920, 0.0
      %v1926 = vsel %vm1924, %v1921, 0.0
      %v1927 = vadd.f32 %v1910, %v1925
      %v1928 = vadd.f32 %v1911, %v1926
      %v1929 = vadd.f32 %v1867, %v1869
      %1930 = vadd.xlane.f32.xlu0 %v1929
      %v1931 = vpop.xlane.xlu0 %1930
      %v1932 = vsel %vm340, %v1873, 0.0
      %v1933 = vsel %vm340, %v1875, 0.0
      %v1934 = vadd.f32 %v1932, %v1933
      %1935 = vadd.xlane.f32.xlu0 %v1934
      %v1936 = vpop.xlane.xlu0 %1935
      %v1937 = vmul.f32 %v1931, %v1885
      %v1938 = vmul.f32 %v1936, %v1885
      %vm1939 = vcmp.eq.s32.totalorder %v286, 3
      %v1940 = vsel %vm1939, 1, 0
      %vm1941 = vcmp.eq.s32.totalorder %v1940, 1
      %v1942 = vsel %vm1941, %v1937, 0.0
      %v1943 = vsel %vm1941, %v1938, 0.0
      %v1944 = vadd.f32 %v1927, %v1942
      %v1945 = vadd.f32 %v1928, %v1943
      %v1946 = vld [vmem:[%s3] sm:$0xf]
      %vm1947 = vcmask 97280
      %v1949 = vsel %vm1947, %v1946, 0
      %v1952 = vsel %vm340, %v1945, 0
      %1954 = vmatprep.subr.mxu0 0.0
      %1955 = vmatpush1.msra.mxu0 %v1944
      %1956 = vmatprep.subr.mxu0 0.0
      %1957 = vmatpush1.msra.mxu0 %v1952
      %1958 = vmatprep.subr.mxu0 0.0
      %1959 = vmatpush1.msra.mxu0 0.0
      %1960 = vmatprep.subr.mxu0 0.0
      %1961 = vmatpush1.msra.mxu0 0.0
      %1962 = vmatprep.subr.mxu0 0.0
      %1963 = vmatpush1.msra.mxu0 0.0
      %1964 = vmatprep.subr.mxu0 0.0
      %1965 = vmatpush1.msra.mxu0 0.0
      %1966 = vmatprep.subr.mxu0 0.0
      %1967 = vmatpush1.msra.mxu0 0.0
      %1968 = vmatprep.subr.mxu0 0.0
      %1969 = vmatpush1.msra.mxu0 0.0
      %1970 = vmatprep.subr.mxu0 0.0
      %1971 = vmatpush1.msra.mxu0 0.0
      %1972 = vmatprep.subr.mxu0 0.0
      %1973 = vmatpush1.msra.mxu0 0.0
      %1974 = vmatprep.subr.mxu0 0.0
      %1975 = vmatpush1.msra.mxu0 0.0
      %1976 = vmatprep.subr.mxu0 0.0
      %1977 = vmatpush1.msra.mxu0 0.0
      %1978 = vmatprep.subr.mxu0 0.0
      %1979 = vmatpush1.msra.mxu0 0.0
      %1980 = vmatprep.subr.mxu0 0.0
      %1981 = vmatpush1.msra.mxu0 0.0
      %1982 = vmatprep.subr.mxu0 0.0
      %1983 = vmatpush1.msra.mxu0 0.0
      %1984 = vmatprep.subr.mxu0 0.0
      %1985 = vmatpush1.msra.mxu0 0.0
      %1986 = vmatprep.subr.mxu0 0.0
      %1987 = vmatpush1.msra.mxu0 0.0
      %1988 = vmatprep.subr.mxu0 0.0
      %1989 = vmatpush1.msra.mxu0 0.0
      %1990 = vmatprep.subr.mxu0 0.0
      %1991 = vmatpush1.msra.mxu0 0.0
      %1992 = vmatprep.subr.mxu0 0.0
      %1993 = vmatpush1.msra.mxu0 0.0
      %1994 = vmatprep.subr.mxu0 0.0
      %1995 = vmatpush1.msra.mxu0 0.0
      %1996 = vmatprep.subr.mxu0 0.0
      %1997 = vmatpush1.msra.mxu0 0.0
      %1998 = vmatprep.subr.mxu0 0.0
      %1999 = vmatpush1.msra.mxu0 0.0
      %2000 = vmatprep.subr.mxu0 0.0
      %2001 = vmatpush1.msra.mxu0 0.0
      %2002 = vmatprep.subr.mxu0 0.0
      %2003 = vmatpush1.msra.mxu0 0.0
      %2004 = vmatprep.subr.mxu0 0.0
      %2005 = vmatpush1.msra.mxu0 0.0
      %2006 = vmatprep.subr.mxu0 0.0
      %2007 = vmatpush1.msra.mxu0 0.0
      %2008 = vmatprep.subr.mxu0 0.0
      %2009 = vmatpush1.msra.mxu0 0.0
      %2010 = vmatprep.subr.mxu0 0.0
      %2011 = vmatpush1.msra.mxu0 0.0
      %2012 = vmatprep.subr.mxu0 0.0
      %2013 = vmatpush1.msra.mxu0 0.0
      %2014 = vmatprep.subr.mxu0 0.0
      %2015 = vmatpush1.msra.mxu0 0.0
      %2016 = vmatprep.subr.mxu0 0.0
      %2017 = vmatpush1.msra.mxu0 0.0
      %2018 = vmatprep.mubr.f32.mxu0 0.0
      %2019 = vmatmul.mubr.f32.gmra.mrb[0].mxu0 %v1949
      %v2020 = vpop.f32.mrb[0].mxu0
      %v2021 = vadd.f32 0.0, %v2020
      %v2022 = vpop.f32.mrb[0].mxu0
      %2023 = vdwg.mxu0
      %v2024 = vmax.f32 %v2021, 0.0
      %v2025 = vld [vmem:[%s4] sm:$0xff]
      %v2026 = vld [vmem:[%s4 + $0x8] sm:$0xf]
      %vm2027 = vcmask 31744
      %v2029 = vsel %vm2027, %v2025, 0
      %v2032 = vsel %vm2027, %v2026, 0
      %v2035 = vsel %vm340, %v2024, 0
      %2037 = vmatprep.subr.mxu0 0.0
      %2038 = vmatpush1.msra.mxu0 %v2035
      %2039 = vmatprep.subr.mxu0 0.0
      %2040 = vmatpush1.msra.mxu0 0.0
      %2041 = vmatprep.subr.mxu0 0.0
      %2042 = vmatpush1.msra.mxu0 0.0
      %2043 = vmatprep.subr.mxu0 0.0
      %2044 = vmatpush1.msra.mxu0 0.0
      %2045 = vmatprep.subr.mxu0 0.0
      %2046 = vmatpush1.msra.mxu0 0.0
      %2047 = vmatprep.subr.mxu0 0.0
      %2048 = vmatpush1.msra.mxu0 0.0
      %2049 = vmatprep.subr.mxu0 0.0
      %2050 = vmatpush1.msra.mxu0 0.0
      %2051 = vmatprep.subr.mxu0 0.0
      %2052 = vmatpush1.msra.mxu0 0.0
      %2053 = vmatprep.subr.mxu0 0.0
      %2054 = vmatpush1.msra.mxu0 0.0
      %2055 = vmatprep.subr.mxu0 0.0
      %2056 = vmatpush1.msra.mxu0 0.0
      %2057 = vmatprep.subr.mxu0 0.0
      %2058 = vmatpush1.msra.mxu0 0.0
      %2059 = vmatprep.subr.mxu0 0.0
      %2060 = vmatpush1.msra.mxu0 0.0
      %2061 = vmatprep.subr.mxu0 0.0
      %2062 = vmatpush1.msra.mxu0 0.0
      %2063 = vmatprep.subr.mxu0 0.0
      %2064 = vmatpush1.msra.mxu0 0.0
      %2065 = vmatprep.subr.mxu0 0.0
      %2066 = vmatpush1.msra.mxu0 0.0
      %2067 = vmatprep.subr.mxu0 0.0
      %2068 = vmatpush1.msra.mxu0 0.0
      %2069 = vmatprep.subr.mxu0 0.0
      %2070 = vmatpush1.msra.mxu0 0.0
      %2071 = vmatprep.subr.mxu0 0.0
      %2072 = vmatpush1.msra.mxu0 0.0
      %2073 = vmatprep.subr.mxu0 0.0
      %2074 = vmatpush1.msra.mxu0 0.0
      %2075 = vmatprep.subr.mxu0 0.0
      %2076 = vmatpush1.msra.mxu0 0.0
      %2077 = vmatprep.subr.mxu0 0.0
      %2078 = vmatpush1.msra.mxu0 0.0
      %2079 = vmatprep.subr.mxu0 0.0
      %2080 = vmatpush1.msra.mxu0 0.0
      %2081 = vmatprep.subr.mxu0 0.0
      %2082 = vmatpush1.msra.mxu0 0.0
      %2083 = vmatprep.subr.mxu0 0.0
      %2084 = vmatpush1.msra.mxu0 0.0
      %2085 = vmatprep.subr.mxu0 0.0
      %2086 = vmatpush1.msra.mxu0 0.0
      %2087 = vmatprep.subr.mxu0 0.0
      %2088 = vmatpush1.msra.mxu0 0.0
      %2089 = vmatprep.subr.mxu0 0.0
      %2090 = vmatpush1.msra.mxu0 0.0
      %2091 = vmatprep.subr.mxu0 0.0
      %2092 = vmatpush1.msra.mxu0 0.0
      %2093 = vmatprep.subr.mxu0 0.0
      %2094 = vmatpush1.msra.mxu0 0.0
      %2095 = vmatprep.subr.mxu0 0.0
      %2096 = vmatpush1.msra.mxu0 0.0
      %2097 = vmatprep.subr.mxu0 0.0
      %2098 = vmatpush1.msra.mxu0 0.0
      %2099 = vmatprep.subr.mxu0 0.0
      %2100 = vmatpush1.msra.mxu0 0.0
      %2101 = vmatprep.mubr.f32.mxu0 0.0
      %2102 = vmatmul.mubr.f32.gmra.mrb[0].mxu0 %v2029
      %v2103 = vpop.f32.mrb[0].mxu0
      %v2104 = vadd.f32 0.0, %v2103
      %v2105 = vpop.f32.mrb[0].mxu0
      %2106 = vmatprep.mubr.f32.mxu0 0.0
      %2107 = vmatmul.mubr.f32.gmra.mrb[0].mxu0 %v2032
      %v2108 = vpop.f32.mrb[0].mxu0
      %v2109 = vadd.f32 0.0, %v2108
      %v2110 = vpop.f32.mrb[0].mxu0
      %2111 = vdwg.mxu0
      %v2112 = vxor.u32 %v2104, 2147483648
      %v2113 = vxor.u32 %v2109, 2147483648
      %v2114 = vmul.f32 %v2112, 1.442695
      %v2115 = vpow.pop %v2114
      %v2116 = vmul.f32 %v2113, 1.442695
      %v2117 = vpow.pop %v2116
      %v2118 = vadd.f32 %v2115, 1.0
      %v2119 = vadd.f32 %v2117, 1.0
      %v2120 = vrcp.pop %v2118
      %v2121 = vmul.f32 1.0, %v2120
      %v2122 = vrcp.pop %v2119
      %v2123 = vmul.f32 1.0, %v2122
      %2125 = vset.pattern.permute.xlu0 0
      %2126 = vperm.xlu0 %2125, %v2121
      %v2127 = vpop.permute.xlu0 %2126
      %2130 = vset.pattern.permute.xlu0 0
      %2131 = vperm.xlu0 %2130, %v2123
      %v2132 = vpop.permute.xlu0 %2131
      %v2134 = vmul.f32 %v1636, %v2127
      %v2135 = vmul.f32 %v1638, %v2127
      %v2136 = vmul.f32 %v1642, %v2132
      %v2137 = vmul.f32 %v1644, %v2132
      %v2138 = vmul.f32 %v2134, 0.35
      %v2139 = vmul.f32 %v2135, 0.35
      %v2140 = vmul.f32 %v2136, 0.35
      %v2141 = vmul.f32 %v2137, 0.35
      %v2142 = vadd.f32 %v2138, 0.65
      %v2143 = vadd.f32 %v2139, 0.65
      %v2144 = vadd.f32 %v2140, 0.65
      %v2145 = vadd.f32 %v2141, 0.65
      %v2146 = vmul.f32 %v1636, %v2142
      %v2147 = vmul.f32 %v1638, %v2143
      %v2148 = vmul.f32 %v1642, %v2144
      %v2149 = vmul.f32 %v1644, %v2145
      %2150 = vset.pattern.permute.xlu0 1
      %2151 = vperm.xlu0 %2150, %v2121
      %v2152 = vpop.permute.xlu0 %2151
      %2154 = vset.pattern.permute.xlu0 1
      %2155 = vperm.xlu0 %2154, %v2123
      %v2156 = vpop.permute.xlu0 %2155
      %v2158 = vmul.f32 %v1713, %v2152
      %v2159 = vmul.f32 %v1715, %v2152
      %v2160 = vmul.f32 %v1719, %v2156
      %v2161 = vmul.f32 %v1721, %v2156
      %v2162 = vmul.f32 %v2158, 0.35
      %v2163 = vmul.f32 %v2159, 0.35
      %v2164 = vmul.f32 %v2160, 0.35
      %v2165 = vmul.f32 %v2161, 0.35
      %v2166 = vadd.f32 %v2162, 0.65
      %v2167 = vadd.f32 %v2163, 0.65
      %v2168 = vadd.f32 %v2164, 0.65
      %v2169 = vadd.f32 %v2165, 0.65
      %v2170 = vmul.f32 %v1713, %v2166
      %v2171 = vmul.f32 %v1715, %v2167
      %v2172 = vmul.f32 %v1719, %v2168
      %v2173 = vmul.f32 %v1721, %v2169
      %2174 = vset.pattern.permute.xlu0 2
      %2175 = vperm.xlu0 %2174, %v2121
      %v2176 = vpop.permute.xlu0 %2175
      %2178 = vset.pattern.permute.xlu0 2
      %2179 = vperm.xlu0 %2178, %v2123
      %v2180 = vpop.permute.xlu0 %2179
      %v2182 = vmul.f32 %v1790, %v2176
      %v2183 = vmul.f32 %v1792, %v2176
      %v2184 = vmul.f32 %v1796, %v2180
      %v2185 = vmul.f32 %v1798, %v2180
      %v2186 = vmul.f32 %v2182, 0.35
      %v2187 = vmul.f32 %v2183, 0.35
      %v2188 = vmul.f32 %v2184, 0.35
      %v2189 = vmul.f32 %v2185, 0.35
      %v2190 = vadd.f32 %v2186, 0.65
      %v2191 = vadd.f32 %v2187, 0.65
      %v2192 = vadd.f32 %v2188, 0.65
      %v2193 = vadd.f32 %v2189, 0.65
      %v2194 = vmul.f32 %v1790, %v2190
      %v2195 = vmul.f32 %v1792, %v2191
      %v2196 = vmul.f32 %v1796, %v2192
      %v2197 = vmul.f32 %v1798, %v2193
      %2198 = vset.pattern.permute.xlu0 3
      %2199 = vperm.xlu0 %2198, %v2121
      %v2200 = vpop.permute.xlu0 %2199
      %2202 = vset.pattern.permute.xlu0 3
      %2203 = vperm.xlu0 %2202, %v2123
      %v2204 = vpop.permute.xlu0 %2203
      %v2206 = vmul.f32 %v1867, %v2200
      %v2207 = vmul.f32 %v1869, %v2200
      %v2208 = vmul.f32 %v1873, %v2204
      %v2209 = vmul.f32 %v1875, %v2204
      %v2210 = vmul.f32 %v2206, 0.35
      %v2211 = vmul.f32 %v2207, 0.35
      %v2212 = vmul.f32 %v2208, 0.35
      %v2213 = vmul.f32 %v2209, 0.35
      %v2214 = vadd.f32 %v2210, 0.65
      %v2215 = vadd.f32 %v2211, 0.65
      %v2216 = vadd.f32 %v2212, 0.65
      %v2217 = vadd.f32 %v2213, 0.65
      %v2218 = vmul.f32 %v1867, %v2214
      %v2219 = vmul.f32 %v1869, %v2215
      %v2220 = vmul.f32 %v1873, %v2216
      %v2221 = vmul.f32 %v1875, %v2217
      %v2222 = vld [vmem:[%s5] sm:$0xf]
      %v2223 = vld [vmem:[%s6] sm:$0xf]
      %2225 = vset.pattern.permute.xlu0 0
      %2226 = vperm.xlu0 %2225, %v2223
      %v2227 = vpop.permute.xlu0 %2226
      %v2230 = vsel %vm1947, %v2222, 0
      %v2233 = vsel %vm340, %v2148, 0
      %v2236 = vsel %vm340, %v2149, 0
      %v2239 = vsel %vm340, %v2172, 0
      %v2242 = vsel %vm340, %v2173, 0
      %v2245 = vsel %vm340, %v2196, 0
      %v2248 = vsel %vm340, %v2197, 0
      %v2251 = vsel %vm340, %v2220, 0
      %v2254 = vsel %vm340, %v2221, 0
      %2256 = vmatprep.subr.mxu0 %v2147
      %2257 = vmatpush1.msra.mxu0 %v2146
      %2258 = vmatprep.subr.mxu0 %v2236
      %2259 = vmatpush1.msra.mxu0 %v2233
      %2260 = vmatprep.subr.mxu0 0.0
      %2261 = vmatpush1.msra.mxu0 0.0
      %2262 = vmatprep.subr.mxu0 0.0
      %2263 = vmatpush1.msra.mxu0 0.0
      %2264 = vmatprep.subr.mxu0 0.0
      %2265 = vmatpush1.msra.mxu0 0.0
      %2266 = vmatprep.subr.mxu0 0.0
      %2267 = vmatpush1.msra.mxu0 0.0
      %2268 = vmatprep.subr.mxu0 0.0
      %2269 = vmatpush1.msra.mxu0 0.0
      %2270 = vmatprep.subr.mxu0 0.0
      %2271 = vmatpush1.msra.mxu0 0.0
      %2272 = vmatprep.subr.mxu0 0.0
      %2273 = vmatpush1.msra.mxu0 0.0
      %2274 = vmatprep.subr.mxu0 0.0
      %2275 = vmatpush1.msra.mxu0 0.0
      %2276 = vmatprep.subr.mxu0 0.0
      %2277 = vmatpush1.msra.mxu0 0.0
      %2278 = vmatprep.subr.mxu0 0.0
      %2279 = vmatpush1.msra.mxu0 0.0
      %2280 = vmatprep.subr.mxu0 0.0
      %2281 = vmatpush1.msra.mxu0 0.0
      %2282 = vmatprep.subr.mxu0 0.0
      %2283 = vmatpush1.msra.mxu0 0.0
      %2284 = vmatprep.subr.mxu0 0.0
      %2285 = vmatpush1.msra.mxu0 0.0
      %2286 = vmatprep.subr.mxu0 0.0
      %2287 = vmatpush1.msra.mxu0 0.0
      %2288 = vmatprep.subr.mxu0 0.0
      %2289 = vmatpush1.msra.mxu0 0.0
      %2290 = vmatprep.subr.mxu0 0.0
      %2291 = vmatpush1.msra.mxu0 0.0
      %2292 = vmatprep.subr.mxu0 0.0
      %2293 = vmatpush1.msra.mxu0 0.0
      %2294 = vmatprep.subr.mxu0 0.0
      %2295 = vmatpush1.msra.mxu0 0.0
      %2296 = vmatprep.subr.mxu0 0.0
      %2297 = vmatpush1.msra.mxu0 0.0
      %2298 = vmatprep.subr.mxu0 0.0
      %2299 = vmatpush1.msra.mxu0 0.0
      %2300 = vmatprep.subr.mxu0 0.0
      %2301 = vmatpush1.msra.mxu0 0.0
      %2302 = vmatprep.subr.mxu0 0.0
      %2303 = vmatpush1.msra.mxu0 0.0
      %2304 = vmatprep.subr.mxu0 0.0
      %2305 = vmatpush1.msra.mxu0 0.0
      %2306 = vmatprep.subr.mxu0 0.0
      %2307 = vmatpush1.msra.mxu0 0.0
      %2308 = vmatprep.subr.mxu0 0.0
      %2309 = vmatpush1.msra.mxu0 0.0
      %2310 = vmatprep.subr.mxu0 0.0
      %2311 = vmatpush1.msra.mxu0 0.0
      %2312 = vmatprep.subr.mxu0 0.0
      %2313 = vmatpush1.msra.mxu0 0.0
      %2314 = vmatprep.subr.mxu0 0.0
      %2315 = vmatpush1.msra.mxu0 0.0
      %2316 = vmatprep.subr.mxu0 0.0
      %2317 = vmatpush1.msra.mxu0 0.0
      %2318 = vmatprep.subr.mxu0 0.0
      %2319 = vmatpush1.msra.mxu0 0.0
      %2320 = vmatprep.mubr.f32.mxu0 0.0
      %2321 = vmatmul.mubr.f32.gmra.mrb[0].mxu0 %v2230
      %v2322 = vpop.f32.mrb[0].mxu0
      %v2323 = vadd.f32 %v2227, %v2322
      %v2324 = vpop.f32.mrb[0].mxu0
      %v2325 = vadd.f32 %v2227, %v2324
      %2326 = vdwg.mxu0
      %2327 = vmatprep.subr.mxu0 %v2171
      %2328 = vmatpush1.msra.mxu0 %v2170
      %2329 = vmatprep.subr.mxu0 %v2242
      %2330 = vmatpush1.msra.mxu0 %v2239
      %2331 = vmatprep.subr.mxu0 0.0
      %2332 = vmatpush1.msra.mxu0 0.0
      %2333 = vmatprep.subr.mxu0 0.0
      %2334 = vmatpush1.msra.mxu0 0.0
      %2335 = vmatprep.subr.mxu0 0.0
      %2336 = vmatpush1.msra.mxu0 0.0
      %2337 = vmatprep.subr.mxu0 0.0
      %2338 = vmatpush1.msra.mxu0 0.0
      %2339 = vmatprep.subr.mxu0 0.0
      %2340 = vmatpush1.msra.mxu0 0.0
      %2341 = vmatprep.subr.mxu0 0.0
      %2342 = vmatpush1.msra.mxu0 0.0
      %2343 = vmatprep.subr.mxu0 0.0
      %2344 = vmatpush1.msra.mxu0 0.0
      %2345 = vmatprep.subr.mxu0 0.0
      %2346 = vmatpush1.msra.mxu0 0.0
      %2347 = vmatprep.subr.mxu0 0.0
      %2348 = vmatpush1.msra.mxu0 0.0
      %2349 = vmatprep.subr.mxu0 0.0
      %2350 = vmatpush1.msra.mxu0 0.0
      %2351 = vmatprep.subr.mxu0 0.0
      %2352 = vmatpush1.msra.mxu0 0.0
      %2353 = vmatprep.subr.mxu0 0.0
      %2354 = vmatpush1.msra.mxu0 0.0
      %2355 = vmatprep.subr.mxu0 0.0
      %2356 = vmatpush1.msra.mxu0 0.0
      %2357 = vmatprep.subr.mxu0 0.0
      %2358 = vmatpush1.msra.mxu0 0.0
      %2359 = vmatprep.subr.mxu0 0.0
      %2360 = vmatpush1.msra.mxu0 0.0
      %2361 = vmatprep.subr.mxu0 0.0
      %2362 = vmatpush1.msra.mxu0 0.0
      %2363 = vmatprep.subr.mxu0 0.0
      %2364 = vmatpush1.msra.mxu0 0.0
      %2365 = vmatprep.subr.mxu0 0.0
      %2366 = vmatpush1.msra.mxu0 0.0
      %2367 = vmatprep.subr.mxu0 0.0
      %2368 = vmatpush1.msra.mxu0 0.0
      %2369 = vmatprep.subr.mxu0 0.0
      %2370 = vmatpush1.msra.mxu0 0.0
      %2371 = vmatprep.subr.mxu0 0.0
      %2372 = vmatpush1.msra.mxu0 0.0
      %2373 = vmatprep.subr.mxu0 0.0
      %2374 = vmatpush1.msra.mxu0 0.0
      %2375 = vmatprep.subr.mxu0 0.0
      %2376 = vmatpush1.msra.mxu0 0.0
      %2377 = vmatprep.subr.mxu0 0.0
      %2378 = vmatpush1.msra.mxu0 0.0
      %2379 = vmatprep.subr.mxu0 0.0
      %2380 = vmatpush1.msra.mxu0 0.0
      %2381 = vmatprep.subr.mxu0 0.0
      %2382 = vmatpush1.msra.mxu0 0.0
      %2383 = vmatprep.subr.mxu0 0.0
      %2384 = vmatpush1.msra.mxu0 0.0
      %2385 = vmatprep.subr.mxu0 0.0
      %2386 = vmatpush1.msra.mxu0 0.0
      %2387 = vmatprep.subr.mxu0 0.0
      %2388 = vmatpush1.msra.mxu0 0.0
      %2389 = vmatprep.subr.mxu0 0.0
      %2390 = vmatpush1.msra.mxu0 0.0
      %2391 = vmatprep.mubr.f32.mxu0 0.0
      %2392 = vmatmul.mubr.f32.gmra.mrb[0].mxu0 %v2230
      %v2393 = vpop.f32.mrb[0].mxu0
      %v2394 = vadd.f32 %v2227, %v2393
      %v2395 = vpop.f32.mrb[0].mxu0
      %v2396 = vadd.f32 %v2227, %v2395
      %2397 = vdwg.mxu0
      %2398 = vmatprep.subr.mxu0 %v2195
      %2399 = vmatpush1.msra.mxu0 %v2194
      %2400 = vmatprep.subr.mxu0 %v2248
      %2401 = vmatpush1.msra.mxu0 %v2245
      %2402 = vmatprep.subr.mxu0 0.0
      %2403 = vmatpush1.msra.mxu0 0.0
      %2404 = vmatprep.subr.mxu0 0.0
      %2405 = vmatpush1.msra.mxu0 0.0
      %2406 = vmatprep.subr.mxu0 0.0
      %2407 = vmatpush1.msra.mxu0 0.0
      %2408 = vmatprep.subr.mxu0 0.0
      %2409 = vmatpush1.msra.mxu0 0.0
      %2410 = vmatprep.subr.mxu0 0.0
      %2411 = vmatpush1.msra.mxu0 0.0
      %2412 = vmatprep.subr.mxu0 0.0
      %2413 = vmatpush1.msra.mxu0 0.0
      %2414 = vmatprep.subr.mxu0 0.0
      %2415 = vmatpush1.msra.mxu0 0.0
      %2416 = vmatprep.subr.mxu0 0.0
      %2417 = vmatpush1.msra.mxu0 0.0
      %2418 = vmatprep.subr.mxu0 0.0
      %2419 = vmatpush1.msra.mxu0 0.0
      %2420 = vmatprep.subr.mxu0 0.0
      %2421 = vmatpush1.msra.mxu0 0.0
      %2422 = vmatprep.subr.mxu0 0.0
      %2423 = vmatpush1.msra.mxu0 0.0
      %2424 = vmatprep.subr.mxu0 0.0
      %2425 = vmatpush1.msra.mxu0 0.0
      %2426 = vmatprep.subr.mxu0 0.0
      %2427 = vmatpush1.msra.mxu0 0.0
      %2428 = vmatprep.subr.mxu0 0.0
      %2429 = vmatpush1.msra.mxu0 0.0
      %2430 = vmatprep.subr.mxu0 0.0
      %2431 = vmatpush1.msra.mxu0 0.0
      %2432 = vmatprep.subr.mxu0 0.0
      %2433 = vmatpush1.msra.mxu0 0.0
      %2434 = vmatprep.subr.mxu0 0.0
      %2435 = vmatpush1.msra.mxu0 0.0
      %2436 = vmatprep.subr.mxu0 0.0
      %2437 = vmatpush1.msra.mxu0 0.0
      %2438 = vmatprep.subr.mxu0 0.0
      %2439 = vmatpush1.msra.mxu0 0.0
      %2440 = vmatprep.subr.mxu0 0.0
      %2441 = vmatpush1.msra.mxu0 0.0
      %2442 = vmatprep.subr.mxu0 0.0
      %2443 = vmatpush1.msra.mxu0 0.0
      %2444 = vmatprep.subr.mxu0 0.0
      %2445 = vmatpush1.msra.mxu0 0.0
      %2446 = vmatprep.subr.mxu0 0.0
      %2447 = vmatpush1.msra.mxu0 0.0
      %2448 = vmatprep.subr.mxu0 0.0
      %2449 = vmatpush1.msra.mxu0 0.0
      %2450 = vmatprep.subr.mxu0 0.0
      %2451 = vmatpush1.msra.mxu0 0.0
      %2452 = vmatprep.subr.mxu0 0.0
      %2453 = vmatpush1.msra.mxu0 0.0
      %2454 = vmatprep.subr.mxu0 0.0
      %2455 = vmatpush1.msra.mxu0 0.0
      %2456 = vmatprep.subr.mxu0 0.0
      %2457 = vmatpush1.msra.mxu0 0.0
      %2458 = vmatprep.subr.mxu0 0.0
      %2459 = vmatpush1.msra.mxu0 0.0
      %2460 = vmatprep.subr.mxu0 0.0
      %2461 = vmatpush1.msra.mxu0 0.0
      %2462 = vmatprep.mubr.f32.mxu0 0.0
      %2463 = vmatmul.mubr.f32.gmra.mrb[0].mxu0 %v2230
      %v2464 = vpop.f32.mrb[0].mxu0
      %v2465 = vadd.f32 %v2227, %v2464
      %v2466 = vpop.f32.mrb[0].mxu0
      %v2467 = vadd.f32 %v2227, %v2466
      %2468 = vdwg.mxu0
      %2469 = vmatprep.subr.mxu0 %v2219
      %2470 = vmatpush1.msra.mxu0 %v2218
      %2471 = vmatprep.subr.mxu0 %v2254
      %2472 = vmatpush1.msra.mxu0 %v2251
      %2473 = vmatprep.subr.mxu0 0.0
      %2474 = vmatpush1.msra.mxu0 0.0
      %2475 = vmatprep.subr.mxu0 0.0
      %2476 = vmatpush1.msra.mxu0 0.0
      %2477 = vmatprep.subr.mxu0 0.0
      %2478 = vmatpush1.msra.mxu0 0.0
      %2479 = vmatprep.subr.mxu0 0.0
      %2480 = vmatpush1.msra.mxu0 0.0
      %2481 = vmatprep.subr.mxu0 0.0
      %2482 = vmatpush1.msra.mxu0 0.0
      %2483 = vmatprep.subr.mxu0 0.0
      %2484 = vmatpush1.msra.mxu0 0.0
      %2485 = vmatprep.subr.mxu0 0.0
      %2486 = vmatpush1.msra.mxu0 0.0
      %2487 = vmatprep.subr.mxu0 0.0
      %2488 = vmatpush1.msra.mxu0 0.0
      %2489 = vmatprep.subr.mxu0 0.0
      %2490 = vmatpush1.msra.mxu0 0.0
      %2491 = vmatprep.subr.mxu0 0.0
      %2492 = vmatpush1.msra.mxu0 0.0
      %2493 = vmatprep.subr.mxu0 0.0
      %2494 = vmatpush1.msra.mxu0 0.0
      %2495 = vmatprep.subr.mxu0 0.0
      %2496 = vmatpush1.msra.mxu0 0.0
      %2497 = vmatprep.subr.mxu0 0.0
      %2498 = vmatpush1.msra.mxu0 0.0
      %2499 = vmatprep.subr.mxu0 0.0
      %2500 = vmatpush1.msra.mxu0 0.0
      %2501 = vmatprep.subr.mxu0 0.0
      %2502 = vmatpush1.msra.mxu0 0.0
      %2503 = vmatprep.subr.mxu0 0.0
      %2504 = vmatpush1.msra.mxu0 0.0
      %2505 = vmatprep.subr.mxu0 0.0
      %2506 = vmatpush1.msra.mxu0 0.0
      %2507 = vmatprep.subr.mxu0 0.0
      %2508 = vmatpush1.msra.mxu0 0.0
      %2509 = vmatprep.subr.mxu0 0.0
      %2510 = vmatpush1.msra.mxu0 0.0
      %2511 = vmatprep.subr.mxu0 0.0
      %2512 = vmatpush1.msra.mxu0 0.0
      %2513 = vmatprep.subr.mxu0 0.0
      %2514 = vmatpush1.msra.mxu0 0.0
      %2515 = vmatprep.subr.mxu0 0.0
      %2516 = vmatpush1.msra.mxu0 0.0
      %2517 = vmatprep.subr.mxu0 0.0
      %2518 = vmatpush1.msra.mxu0 0.0
      %2519 = vmatprep.subr.mxu0 0.0
      %2520 = vmatpush1.msra.mxu0 0.0
      %2521 = vmatprep.subr.mxu0 0.0
      %2522 = vmatpush1.msra.mxu0 0.0
      %2523 = vmatprep.subr.mxu0 0.0
      %2524 = vmatpush1.msra.mxu0 0.0
      %2525 = vmatprep.subr.mxu0 0.0
      %2526 = vmatpush1.msra.mxu0 0.0
      %2527 = vmatprep.subr.mxu0 0.0
      %2528 = vmatpush1.msra.mxu0 0.0
      %2529 = vmatprep.subr.mxu0 0.0
      %2530 = vmatpush1.msra.mxu0 0.0
      %2531 = vmatprep.subr.mxu0 0.0
      %2532 = vmatpush1.msra.mxu0 0.0
      %2533 = vmatprep.mubr.f32.mxu0 0.0
      %2534 = vmatmul.mubr.f32.gmra.mrb[0].mxu0 %v2230
      %v2535 = vpop.f32.mrb[0].mxu0
      %v2536 = vadd.f32 %v2227, %v2535
      %v2537 = vpop.f32.mrb[0].mxu0
      %v2538 = vadd.f32 %v2227, %v2537
      %2539 = vdwg.mxu0
      %v2548 = vcombine.low %v2323, %v2325
      %v2549 = vcombine.low %v2394, %v2396
      %v2550 = vcombine.low %v2465, %v2467
      %v2551 = vcombine.low %v2536, %v2538
      %2556 = vst [vmem:[%s283] sm:$0xff] %v2548
      %2557 = vst [vmem:[%s283 + $0x8] sm:$0xff] %v2549
      %2558 = vst [vmem:[%s283 + $0x10] sm:$0xff] %v2550
      %2559 = vst [vmem:[%s283 + $0x18] sm:$0xff] %v2551
      %s2560 = smul.u32 8, %s18
      %p2561 = scmp.lt.s32.totalorder %s2560, 15
      %s2562 = scalar_select %p2561, %s2560, 15
      %s2563 = smul.addr %s2562, 4
      %s2564 = scalar_lea.vmem %s7, %s2563
      // Predicated region
      $region49: #{adaptive_feature_selection.1} parent=47 // pred_check
        %p2565 = pneg %p188
      $region50: #{adaptive_feature_selection.1} parent=47 // pred_check_branch
        %2567 = sbr.rel (%p2565) target = $region52
      $region51: #{adaptive_feature_selection.1} parent=47 // pred_region
        %s2568 = smul.u32 8, %s18
      $region52: #{adaptive_feature_selection.1} parent=47 // pred_fallthru
        _
    $region48: #{adaptive_feature_selection.1} parent=5 // pred_fallthru
      _
    %p2569 = scmp.le.s32.totalorder 2, %s13
    // Predicated region
    $region53: #{adaptive_feature_selection.1} parent=5 // pred_check
      %p2570 = pneg %p2569
    $region54: #{adaptive_feature_selection.1} parent=5 // pred_check_branch
      %2572 = sbr.rel (%p2570) target = $region56
    $region55: #{adaptive_feature_selection.1} parent=5 // pred_region
      %s2573 = ssub.s32 %s13, 2
      // Predicated region
      $region57: #{adaptive_feature_selection.1} parent=55 // pred_check
        %p2574 = pneg %p194
      $region58: #{adaptive_feature_selection.1} parent=55 // pred_check_branch
        %2576 = sbr.rel (%p2574) target = $region60
      $region59: #{adaptive_feature_selection.1} parent=55 // pred_region
        %s2577 = smul.u32 8, %s19
        %p2578 = scmp.lt.s32.totalorder %s2577, 15
        %s2579 = scalar_select %p2578, %s2577, 15
        %s2580 = smul.addr %s2579, 4
        %s2581 = scalar_lea.vmem %s7, %s2580
      $region60: #{adaptive_feature_selection.1} parent=55 // pred_fallthru
        _
    $region56: #{adaptive_feature_selection.1} parent=5 // pred_fallthru
      _
  $region6: #{adaptive_feature_selection.1} parent=0 // loop_footer
    %s17 = sadd.s32 1, %s13
  $region7: #{adaptive_feature_selection.1} parent=0 // loop_footer_branch
    %12 = sbr.rel target = $region3
  $region8: #{adaptive_feature_selection.1} parent=0 // loop_exit
    _

</llo_original>
